<compile_context>
chip_gen: v7x
topology: tpu7x:2x2x1
jax: 0.10.0
libtpu: 0.0.40
codegen_flags: <defaults>
</compile_context>

<pallas_src>
import functools
import math

import jax
import jax.numpy as jnp
from jax.experimental import pallas as pl
from jax.experimental.pallas import tpu as pltpu


def _mha_residual_kernel(x_ref, wqkv_ref, bqkv_ref, wo_ref, bo_ref,
                         wl_ref, bl_ref, out_ref, attn_ref, *, num_heads):
    # x block: (Nb, L, E)
    nb, seq_len, embed_dim = x_ref.shape
    head_dim = embed_dim // num_heads
    m = nb * seq_len              # rows of the flattened slab, ordered (batch, seq)
    cdt = wqkv_ref.dtype          # MXU input dtype (bf16 or f32)

    x = x_ref[...].astype(jnp.float32)          # (Nb, L, E)
    xf = x.reshape(m, embed_dim)                # (M, E)

    # Fused QKV projection: one (M,E) @ (E,3E) matmul, f32 accumulation.
    # The softmax scale is already folded into the Q columns / bias.
    qkv = jnp.dot(xf.astype(cdt), wqkv_ref[...],
                  preferred_element_type=jnp.float32) + bqkv_ref[...]   # (M, 3E)

    def gather_heads(col0):
        # Regroup head columns into a leading (head, batch) axis: (G, L, D),
        # G = H*Nb ordered (head, batch).  Leading-axis concat is cheap.
        parts = [
            qkv[:, col0 + h * head_dim: col0 + (h + 1) * head_dim]
            .reshape(nb, seq_len, head_dim)
            for h in range(num_heads)
        ]
        return jnp.concatenate(parts, axis=0)

    qg = gather_heads(0).astype(cdt)                    # (G, L, D)
    kg = gather_heads(embed_dim).astype(cdt)
    vg = gather_heads(2 * embed_dim).astype(cdt)

    # All heads & batch entries in one batched QK^T / softmax / PV stream.
    s = jnp.einsum('gqd,gkd->gqk', qg, kg,
                   preferred_element_type=jnp.float32)  # (G, L, L)
    s = s - jnp.max(s, axis=-1, keepdims=True)
    p = jnp.exp(s)
    denom = jnp.sum(p, axis=-1, keepdims=True)
    r = pl.reciprocal(denom, approx=True)               # EUP vrcp (free slot)
    r = r * (2.0 - denom * r)                           # one Newton step -> ~f32 exact
    p = p * r                                           # softmax, (G, L, L)

    # Head-averaged attention weights (PyTorch average_attn_weights=True).
    attn_avg = jnp.sum(p.reshape(num_heads, nb, seq_len, seq_len),
                       axis=0) * (1.0 / num_heads)      # (Nb, L, L)

    ctx = jnp.einsum('gqk,gkd->gqd', p.astype(cdt), vg,
                     preferred_element_type=jnp.float32)   # (G, L, D)
    ctx = ctx.reshape(num_heads, m, head_dim)              # (H, M, D)

    # Output projection folded per head (no lane-axis concat of contexts):
    #   attn_o = bo + sum_h ctx_h @ Wo^T[h*D:(h+1)*D, :]
    wo = wo_ref[...]                                        # (E, E), (in, out) layout
    attn_o = jnp.broadcast_to(bo_ref[...], (m, embed_dim)).astype(jnp.float32)
    for h in range(num_heads):
        attn_o = attn_o + jnp.dot(
            ctx[h].astype(cdt),
            wo[h * head_dim:(h + 1) * head_dim, :],
            preferred_element_type=jnp.float32)

    # Extra Linear layer, residual with pre-attention x, ReLU.
    lin = jnp.dot(attn_o.astype(cdt), wl_ref[...],
                  preferred_element_type=jnp.float32) + bl_ref[...]
    y = jnp.maximum(lin + xf, 0.0)

    out_ref[...] = y.reshape(nb, seq_len, embed_dim).astype(out_ref.dtype)
    attn_ref[...] = attn_avg.astype(attn_ref.dtype)


def _block_vmem_estimate(nb, seq_len, embed_dim, num_heads, w_bytes):
    """Rough VMEM footprint (bytes) of one grid step with batch block `nb`."""
    f32 = 4
    m = nb * seq_len
    g = nb * num_heads
    d = embed_dim // num_heads
    est = 0
    # Double-buffered activation blocks managed by the pipeline.
    est += 2 * nb * seq_len * embed_dim * f32      # x input block
    est += 2 * nb * seq_len * embed_dim * f32      # values output block
    est += 2 * nb * seq_len * seq_len * f32        # attention output block
    # In-kernel live intermediates.
    est += 4 * m * embed_dim * f32                 # qkv slab (+ bias-add copy)
    est += 3 * g * seq_len * d * f32               # stacked q / k / v
    est += 3 * g * seq_len * seq_len * f32         # s, p, exp intermediates
    est += nb * seq_len * seq_len * f32            # head-averaged attention
    est += g * seq_len * d * f32                   # ctx
    est += 2 * m * embed_dim * f32                 # attn_o, lin
    # Weights / biases (constant index maps, single-buffered via Buffered(1)).
    est += 5 * embed_dim * embed_dim * w_bytes + 5 * embed_dim * f32
    return est


def _choose_block_batch(n_batch, seq_len, embed_dim, num_heads, w_bytes, budget_bytes):
    """Largest divisor of N whose estimated VMEM footprint fits the budget."""
    best = 1
    for nb in range(1, n_batch + 1):
        if n_batch % nb:
            continue
        if _block_vmem_estimate(nb, seq_len, embed_dim, num_heads, w_bytes) <= budget_bytes:
            best = nb
    return best


def _pick_vmem_limit_bytes():
    try:
        cap = int(pltpu.get_tpu_info().vmem_capacity_bytes)
    except Exception:
        cap = 64 << 20   # conservative fallback (v7x per-TC physical VMEM)
    # Leave headroom for compiler-internal scratch; cap at 100 MiB (v5e/v6e: 128 MiB).
    return int(min(max(cap - (16 << 20), 32 << 20), 100 << 20))


def mha_with_residual_forward(x, params, num_heads, *,
                              block_batch=None, use_bf16_matmul=True):
    """x: (L, N, E) float32 (PyTorch batch_first=False layout).

    Returns (values (L, N, E), attn_weights (N, L, L)) matching
    nn.MultiheadAttention(average_attn_weights=True) + Linear + residual + ReLU.
    """
    seq_len, n_batch, embed_dim = x.shape
    assert embed_dim % num_heads == 0
    head_dim = embed_dim // num_heads

    xb = jnp.transpose(x, (1, 0, 2))     # (N, L, E) batch-major for the kernel

    w_dtype = jnp.bfloat16 if use_bf16_matmul else jnp.float32
    w_bytes = 2 if use_bf16_matmul else 4
    scale = 1.0 / math.sqrt(head_dim)

    # Pre-transpose to (in, out) layout, fuse QKV, and fold the softmax scale
    # into the Q projection (done once in XLA, outside the kernel).
    w_qkv = jnp.concatenate(
        [(params["wq"] * scale).T, params["wk"].T, params["wv"].T],
        axis=1).astype(w_dtype)                                           # (E, 3E)
    b_qkv = jnp.concatenate(
        [params["bq"] * scale, params["bk"], params["bv"]]
    ).reshape(1, 3 * embed_dim).astype(jnp.float32)
    wo_t = params["wo"].T.astype(w_dtype)                                 # (E, E)
    bo = params["bo"].reshape(1, embed_dim).astype(jnp.float32)
    wl_t = params["wl"].T.astype(w_dtype)                                 # (E, E)
    bl = params["bl"].reshape(1, embed_dim).astype(jnp.float32)

    vmem_limit = _pick_vmem_limit_bytes()
    if block_batch is None:
        block_batch = _choose_block_batch(
            n_batch, seq_len, embed_dim, num_heads, w_bytes,
            budget_bytes=int(0.75 * vmem_limit))
    assert n_batch % block_batch == 0
    grid_n = n_batch // block_batch

    kernel = functools.partial(_mha_residual_kernel, num_heads=num_heads)

    def run(single_buffer_weights):
        # Constant index maps -> weights are DMA'd only once; Buffered(1) drops
        # the second (useless) pipeline buffer to halve weight VMEM.
        wkw = ({"pipeline_mode": pl.Buffered(1)} if single_buffer_weights else {})
        wqkv_spec = pl.BlockSpec((embed_dim, 3 * embed_dim), lambda n: (0, 0), **wkw)
        bqkv_spec = pl.BlockSpec((1, 3 * embed_dim), lambda n: (0, 0), **wkw)
        mat_spec = pl.BlockSpec((embed_dim, embed_dim), lambda n: (0, 0), **wkw)
        vec_spec = pl.BlockSpec((1, embed_dim), lambda n: (0, 0), **wkw)

        return pl.pallas_call(
            kernel,
            out_shape=(
                jax.ShapeDtypeStruct((n_batch, seq_len, embed_dim), x.dtype),
                jax.ShapeDtypeStruct((n_batch, seq_len, seq_len), jnp.float32),
            ),
            grid_spec=pltpu.PrefetchScalarGridSpec(
                num_scalar_prefetch=0,
                grid=(grid_n,),
                in_specs=[
                    pl.BlockSpec((block_batch, seq_len, embed_dim),
                                 lambda n: (n, 0, 0)),                  # x
                    wqkv_spec, bqkv_spec,                               # fused QKV
                    mat_spec, vec_spec,                                 # Wo^T, bo
                    mat_spec, vec_spec,                                 # Wl^T, bl
                ],
                out_specs=[
                    pl.BlockSpec((block_batch, seq_len, embed_dim),
                                 lambda n: (n, 0, 0)),                  # values
                    pl.BlockSpec((block_batch, seq_len, seq_len),
                                 lambda n: (n, 0, 0)),                  # attn weights
                ],
            ),
            compiler_params=pltpu.CompilerParams(
                dimension_semantics=("parallel",),
                vmem_limit_bytes=vmem_limit,
            ),
        )(xb, w_qkv, b_qkv, wo_t, bo, wl_t, bl)

    try:
        out, attn = run(single_buffer_weights=True)
    except Exception:
        # Fallback if this jax build rejects Buffered(1) pipeline_mode.
        out, attn = run(single_buffer_weights=False)

    values = jnp.transpose(out, (1, 0, 2))       # back to (L, N, E)
    return values, attn


def init_params(key, embed_dim):
    """Deterministic synthetic parameters matching nn.MultiheadAttention + nn.Linear shapes."""
    E = embed_dim
    keys = jax.random.split(key, 10)
    s = 0.05
    return {
        "wq": s * jax.random.normal(keys[0], (E, E), jnp.float32),
        "wk": s * jax.random.normal(keys[1], (E, E), jnp.float32),
        "wv": s * jax.random.normal(keys[2], (E, E), jnp.float32),
        "bq": s * jax.random.normal(keys[3], (E,), jnp.float32),
        "bk": s * jax.random.normal(keys[4], (E,), jnp.float32),
        "bv": s * jax.random.normal(keys[5], (E,), jnp.float32),
        "wo": s * jax.random.normal(keys[6], (E, E), jnp.float32),
        "bo": s * jax.random.normal(keys[7], (E,), jnp.float32),
        "wl": s * jax.random.normal(keys[8], (E, E), jnp.float32),
        "bl": s * jax.random.normal(keys[9], (E,), jnp.float32),
    }


if __name__ == "__main__":
    # Small shapes: seq L=8, batch N=4, embed E=32, heads H=4 (mha_output_dim == E
    # is required by the residual add in the reference module).
    L, N, E, H = 8, 4, 32, 4

    key = jax.random.PRNGKey(0)
    k_x, k_p = jax.random.split(key)
    x = jax.random.normal(k_x, (L, N, E), jnp.float32)
    params = init_params(k_p, E)

    values, attn_w = mha_with_residual_forward(x, params, num_heads=H)
    values = jax.block_until_ready(values)
    attn_w = jax.block_until_ready(attn_w)

    assert values.shape == (L, N, E)
    assert attn_w.shape == (N, L, L)
    # Softmax rows of the head-averaged attention weights must sum to ~1.
    row_sums = jnp.sum(attn_w, axis=-1)
    assert jnp.allclose(row_sums, jnp.ones_like(row_sums), atol=1e-3)
    print("KERNEL_OK")
</pallas_src>

<mosaic_0001>
module attributes {stable_mosaic.version = 11 : i64} {
  func.func @_mha_residual_kernel(%arg0: i32, %arg1: memref<4x8x32xf32, #tpu.memory_space<vmem>>, %arg2: memref<32x96xbf16, #tpu.memory_space<vmem>>, %arg3: memref<1x96xf32, #tpu.memory_space<vmem>>, %arg4: memref<32x32xbf16, #tpu.memory_space<vmem>>, %arg5: memref<1x32xf32, #tpu.memory_space<vmem>>, %arg6: memref<32x32xbf16, #tpu.memory_space<vmem>>, %arg7: memref<1x32xf32, #tpu.memory_space<vmem>>, %arg8: memref<4x8x32xf32, #tpu.memory_space<vmem>>, %arg9: memref<4x8x8xf32, #tpu.memory_space<vmem>>) attributes {dimension_semantics = [#tpu.dimension_semantics<parallel>], iteration_bounds = array<i64: 1>, scalar_prefetch = 0 : i64, scratch_operands = 0 : i64, tpu.core_type = #tpu.core_type<tc>, window_params = [{transform_indices = @transform_0, window_bounds = array<i64: 4, 8, 32>}, {pipeline_mode = #tpu.pipeline_mode<synchronous>, transform_indices = @transform_1, window_bounds = array<i64: 32, 96>}, {pipeline_mode = #tpu.pipeline_mode<synchronous>, transform_indices = @transform_2, window_bounds = array<i64: 1, 96>}, {pipeline_mode = #tpu.pipeline_mode<synchronous>, transform_indices = @transform_3, window_bounds = array<i64: 32, 32>}, {pipeline_mode = #tpu.pipeline_mode<synchronous>, transform_indices = @transform_4, window_bounds = array<i64: 1, 32>}, {pipeline_mode = #tpu.pipeline_mode<synchronous>, transform_indices = @transform_5, window_bounds = array<i64: 32, 32>}, {pipeline_mode = #tpu.pipeline_mode<synchronous>, transform_indices = @transform_6, window_bounds = array<i64: 1, 32>}, {transform_indices = @transform_7, window_bounds = array<i64: 4, 8, 32>}, {transform_indices = @transform_8, window_bounds = array<i64: 4, 8, 8>}]} {
    %c0 = arith.constant 0 : index
    %c0_0 = arith.constant 0 : index
    %c0_1 = arith.constant 0 : index
    %0 = vector.load %arg1[%c0, %c0_0, %c0_1] : memref<4x8x32xf32, #tpu.memory_space<vmem>>, vector<4x8x32xf32>
    %1 = vector.shape_cast %0 : vector<4x8x32xf32> to vector<32x32xf32>
    %2 = arith.truncf %1 : vector<32x32xf32> to vector<32x32xbf16>
    %c0_2 = arith.constant 0 : index
    %c0_3 = arith.constant 0 : index
    %3 = vector.load %arg2[%c0_2, %c0_3] : memref<32x96xbf16, #tpu.memory_space<vmem>>, vector<32x96xbf16>
    %cst = arith.constant dense<0.000000e+00> : vector<32x96xf32>
    %4 = tpu.matmul %2, %3, %cst {dimension_numbers = #tpu.dot_dimension_numbers<[1], [0], [0], [1], [0, 0, 1, 1], [], []>} : vector<32x32xbf16>, vector<32x96xbf16>, vector<32x96xf32> -> vector<32x96xf32>
    %c0_4 = arith.constant 0 : index
    %c0_5 = arith.constant 0 : index
    %5 = vector.load %arg3[%c0_4, %c0_5] : memref<1x96xf32, #tpu.memory_space<vmem>>, vector<1x96xf32>
    %6 = vector.broadcast %5 : vector<1x96xf32> to vector<32x96xf32>
    %7 = arith.addf %4, %6 : vector<32x96xf32>
    %8 = vector.extract_strided_slice %7 {offsets = [0, 0], sizes = [32, 8], strides = [1, 1]} : vector<32x96xf32> to vector<32x8xf32>
    %9 = vector.shape_cast %8 : vector<32x8xf32> to vector<4x8x8xf32>
    %10 = vector.extract_strided_slice %7 {offsets = [0, 8], sizes = [32, 8], strides = [1, 1]} : vector<32x96xf32> to vector<32x8xf32>
    %11 = vector.shape_cast %10 : vector<32x8xf32> to vector<4x8x8xf32>
    %12 = vector.extract_strided_slice %7 {offsets = [0, 16], sizes = [32, 8], strides = [1, 1]} : vector<32x96xf32> to vector<32x8xf32>
    %13 = vector.shape_cast %12 : vector<32x8xf32> to vector<4x8x8xf32>
    %14 = vector.extract_strided_slice %7 {offsets = [0, 24], sizes = [32, 8], strides = [1, 1]} : vector<32x96xf32> to vector<32x8xf32>
    %15 = vector.shape_cast %14 : vector<32x8xf32> to vector<4x8x8xf32>
    %16 = tpu.concatenate %9, %11, %13, %15 in 0 : vector<4x8x8xf32>, vector<4x8x8xf32>, vector<4x8x8xf32>, vector<4x8x8xf32> -> vector<16x8x8xf32>
    %17 = arith.truncf %16 : vector<16x8x8xf32> to vector<16x8x8xbf16>
    %18 = vector.extract_strided_slice %7 {offsets = [0, 32], sizes = [32, 8], strides = [1, 1]} : vector<32x96xf32> to vector<32x8xf32>
    %19 = vector.shape_cast %18 : vector<32x8xf32> to vector<4x8x8xf32>
    %20 = vector.extract_strided_slice %7 {offsets = [0, 40], sizes = [32, 8], strides = [1, 1]} : vector<32x96xf32> to vector<32x8xf32>
    %21 = vector.shape_cast %20 : vector<32x8xf32> to vector<4x8x8xf32>
    %22 = vector.extract_strided_slice %7 {offsets = [0, 48], sizes = [32, 8], strides = [1, 1]} : vector<32x96xf32> to vector<32x8xf32>
    %23 = vector.shape_cast %22 : vector<32x8xf32> to vector<4x8x8xf32>
    %24 = vector.extract_strided_slice %7 {offsets = [0, 56], sizes = [32, 8], strides = [1, 1]} : vector<32x96xf32> to vector<32x8xf32>
    %25 = vector.shape_cast %24 : vector<32x8xf32> to vector<4x8x8xf32>
    %26 = tpu.concatenate %19, %21, %23, %25 in 0 : vector<4x8x8xf32>, vector<4x8x8xf32>, vector<4x8x8xf32>, vector<4x8x8xf32> -> vector<16x8x8xf32>
    %27 = arith.truncf %26 : vector<16x8x8xf32> to vector<16x8x8xbf16>
    %28 = vector.extract_strided_slice %7 {offsets = [0, 64], sizes = [32, 8], strides = [1, 1]} : vector<32x96xf32> to vector<32x8xf32>
    %29 = vector.shape_cast %28 : vector<32x8xf32> to vector<4x8x8xf32>
    %30 = vector.extract_strided_slice %7 {offsets = [0, 72], sizes = [32, 8], strides = [1, 1]} : vector<32x96xf32> to vector<32x8xf32>
    %31 = vector.shape_cast %30 : vector<32x8xf32> to vector<4x8x8xf32>
    %32 = vector.extract_strided_slice %7 {offsets = [0, 80], sizes = [32, 8], strides = [1, 1]} : vector<32x96xf32> to vector<32x8xf32>
    %33 = vector.shape_cast %32 : vector<32x8xf32> to vector<4x8x8xf32>
    %34 = vector.extract_strided_slice %7 {offsets = [0, 88], sizes = [32, 8], strides = [1, 1]} : vector<32x96xf32> to vector<32x8xf32>
    %35 = vector.shape_cast %34 : vector<32x8xf32> to vector<4x8x8xf32>
    %36 = tpu.concatenate %29, %31, %33, %35 in 0 : vector<4x8x8xf32>, vector<4x8x8xf32>, vector<4x8x8xf32>, vector<4x8x8xf32> -> vector<16x8x8xf32>
    %37 = arith.truncf %36 : vector<16x8x8xf32> to vector<16x8x8xbf16>
    "tpu.trace_start"() <{level = 10 : i32, message = "gqd,gkd->gqk"}> : () -> ()
    %cst_6 = arith.constant dense<0.000000e+00> : vector<16x8x8xf32>
    %38 = tpu.matmul %17, %27, %cst_6 {dimension_numbers = #tpu.dot_dimension_numbers<[2], [2], [1], [1], [0, 0, 0, 1, 1, 1], [0], [0]>} : vector<16x8x8xbf16>, vector<16x8x8xbf16>, vector<16x8x8xf32> -> vector<16x8x8xf32>
    "tpu.trace_stop"() : () -> ()
    %cst_7 = arith.constant dense<0xFF800000> : vector<16x8xf32>
    %39 = vector.multi_reduction <maximumf>, %38, %cst_7 [2] : vector<16x8x8xf32> to vector<16x8xf32>
    %40 = vector.shape_cast %39 : vector<16x8xf32> to vector<16x8x1xf32>
    %41 = vector.broadcast %40 : vector<16x8x1xf32> to vector<16x8x8xf32>
    %42 = arith.subf %38, %41 : vector<16x8x8xf32>
    %43 = math.exp %42 : vector<16x8x8xf32>
    %cst_8 = arith.constant dense<0.000000e+00> : vector<16x8xf32>
    %44 = vector.multi_reduction <add>, %43, %cst_8 [2] : vector<16x8x8xf32> to vector<16x8xf32>
    %45 = vector.shape_cast %44 : vector<16x8xf32> to vector<16x8x1xf32>
    %46 = tpu.reciprocal %45 {approx = true} : vector<16x8x1xf32> -> vector<16x8x1xf32>
    %47 = arith.mulf %45, %46 : vector<16x8x1xf32>
    %cst_9 = arith.constant 2.000000e+00 : f32
    %48 = vector.broadcast %cst_9 : f32 to vector<16x8x1xf32>
    %49 = arith.subf %48, %47 : vector<16x8x1xf32>
    %50 = arith.mulf %46, %49 : vector<16x8x1xf32>
    %51 = vector.broadcast %50 : vector<16x8x1xf32> to vector<16x8x8xf32>
    %52 = arith.mulf %43, %51 : vector<16x8x8xf32>
    %53 = vector.shape_cast %52 : vector<16x8x8xf32> to vector<4x4x8x8xf32>
    %cst_10 = arith.constant dense<0.000000e+00> : vector<4x8x8xf32>
    %54 = vector.multi_reduction <add>, %53, %cst_10 [0] : vector<4x4x8x8xf32> to vector<4x8x8xf32>
    %cst_11 = arith.constant 2.500000e-01 : f32
    %55 = vector.broadcast %cst_11 : f32 to vector<4x8x8xf32>
    %56 = arith.mulf %54, %55 : vector<4x8x8xf32>
    %57 = arith.truncf %52 : vector<16x8x8xf32> to vector<16x8x8xbf16>
    "tpu.trace_start"() <{level = 10 : i32, message = "gqk,gkd->gqd"}> : () -> ()
    %cst_12 = arith.constant dense<0.000000e+00> : vector<16x8x8xf32>
    %58 = tpu.matmul %57, %37, %cst_12 {dimension_numbers = #tpu.dot_dimension_numbers<[2], [1], [1], [2], [0, 0, 0, 1, 1, 2], [0], [0]>} : vector<16x8x8xbf16>, vector<16x8x8xbf16>, vector<16x8x8xf32> -> vector<16x8x8xf32>
    "tpu.trace_stop"() : () -> ()
    %59 = vector.shape_cast %58 : vector<16x8x8xf32> to vector<4x32x8xf32>
    %c0_13 = arith.constant 0 : index
    %c0_14 = arith.constant 0 : index
    %60 = vector.load %arg4[%c0_13, %c0_14] : memref<32x32xbf16, #tpu.memory_space<vmem>>, vector<32x32xbf16>
    %c0_15 = arith.constant 0 : index
    %c0_16 = arith.constant 0 : index
    %61 = vector.load %arg5[%c0_15, %c0_16] : memref<1x32xf32, #tpu.memory_space<vmem>>, vector<1x32xf32>
    %62 = vector.shape_cast %61 : vector<1x32xf32> to vector<1x32xf32>
    %63 = vector.broadcast %62 : vector<1x32xf32> to vector<32x32xf32>
    %64 = vector.extract_strided_slice %59 {offsets = [0, 0, 0], sizes = [1, 32, 8], strides = [1, 1, 1]} : vector<4x32x8xf32> to vector<1x32x8xf32>
    %65 = vector.shape_cast %64 : vector<1x32x8xf32> to vector<32x8xf32>
    %66 = arith.truncf %65 : vector<32x8xf32> to vector<32x8xbf16>
    %67 = vector.extract_strided_slice %60 {offsets = [0, 0], sizes = [8, 32], strides = [1, 1]} : vector<32x32xbf16> to vector<8x32xbf16>
    %cst_17 = arith.constant dense<0.000000e+00> : vector<32x32xf32>
    %68 = tpu.matmul %66, %67, %cst_17 {dimension_numbers = #tpu.dot_dimension_numbers<[1], [0], [0], [1], [0, 0, 1, 1], [], []>} : vector<32x8xbf16>, vector<8x32xbf16>, vector<32x32xf32> -> vector<32x32xf32>
    %69 = arith.addf %63, %68 : vector<32x32xf32>
    %70 = vector.extract_strided_slice %59 {offsets = [1, 0, 0], sizes = [1, 32, 8], strides = [1, 1, 1]} : vector<4x32x8xf32> to vector<1x32x8xf32>
    %71 = vector.shape_cast %70 : vector<1x32x8xf32> to vector<32x8xf32>
    %72 = arith.truncf %71 : vector<32x8xf32> to vector<32x8xbf16>
    %73 = vector.extract_strided_slice %60 {offsets = [8, 0], sizes = [8, 32], strides = [1, 1]} : vector<32x32xbf16> to vector<8x32xbf16>
    %cst_18 = arith.constant dense<0.000000e+00> : vector<32x32xf32>
    %74 = tpu.matmul %72, %73, %cst_18 {dimension_numbers = #tpu.dot_dimension_numbers<[1], [0], [0], [1], [0, 0, 1, 1], [], []>} : vector<32x8xbf16>, vector<8x32xbf16>, vector<32x32xf32> -> vector<32x32xf32>
    %75 = arith.addf %69, %74 : vector<32x32xf32>
    %76 = vector.extract_strided_slice %59 {offsets = [2, 0, 0], sizes = [1, 32, 8], strides = [1, 1, 1]} : vector<4x32x8xf32> to vector<1x32x8xf32>
    %77 = vector.shape_cast %76 : vector<1x32x8xf32> to vector<32x8xf32>
    %78 = arith.truncf %77 : vector<32x8xf32> to vector<32x8xbf16>
    %79 = vector.extract_strided_slice %60 {offsets = [16, 0], sizes = [8, 32], strides = [1, 1]} : vector<32x32xbf16> to vector<8x32xbf16>
    %cst_19 = arith.constant dense<0.000000e+00> : vector<32x32xf32>
    %80 = tpu.matmul %78, %79, %cst_19 {dimension_numbers = #tpu.dot_dimension_numbers<[1], [0], [0], [1], [0, 0, 1, 1], [], []>} : vector<32x8xbf16>, vector<8x32xbf16>, vector<32x32xf32> -> vector<32x32xf32>
    %81 = arith.addf %75, %80 : vector<32x32xf32>
    %82 = vector.extract_strided_slice %59 {offsets = [3, 0, 0], sizes = [1, 32, 8], strides = [1, 1, 1]} : vector<4x32x8xf32> to vector<1x32x8xf32>
    %83 = vector.shape_cast %82 : vector<1x32x8xf32> to vector<32x8xf32>
    %84 = arith.truncf %83 : vector<32x8xf32> to vector<32x8xbf16>
    %85 = vector.extract_strided_slice %60 {offsets = [24, 0], sizes = [8, 32], strides = [1, 1]} : vector<32x32xbf16> to vector<8x32xbf16>
    %cst_20 = arith.constant dense<0.000000e+00> : vector<32x32xf32>
    %86 = tpu.matmul %84, %85, %cst_20 {dimension_numbers = #tpu.dot_dimension_numbers<[1], [0], [0], [1], [0, 0, 1, 1], [], []>} : vector<32x8xbf16>, vector<8x32xbf16>, vector<32x32xf32> -> vector<32x32xf32>
    %87 = arith.addf %81, %86 : vector<32x32xf32>
    %88 = arith.truncf %87 : vector<32x32xf32> to vector<32x32xbf16>
    %c0_21 = arith.constant 0 : index
    %c0_22 = arith.constant 0 : index
    %89 = vector.load %arg6[%c0_21, %c0_22] : memref<32x32xbf16, #tpu.memory_space<vmem>>, vector<32x32xbf16>
    %cst_23 = arith.constant dense<0.000000e+00> : vector<32x32xf32>
    %90 = tpu.matmul %88, %89, %cst_23 {dimension_numbers = #tpu.dot_dimension_numbers<[1], [0], [0], [1], [0, 0, 1, 1], [], []>} : vector<32x32xbf16>, vector<32x32xbf16>, vector<32x32xf32> -> vector<32x32xf32>
    %c0_24 = arith.constant 0 : index
    %c0_25 = arith.constant 0 : index
    %91 = vector.load %arg7[%c0_24, %c0_25] : memref<1x32xf32, #tpu.memory_space<vmem>>, vector<1x32xf32>
    %92 = vector.broadcast %91 : vector<1x32xf32> to vector<32x32xf32>
    %93 = arith.addf %90, %92 : vector<32x32xf32>
    %94 = arith.addf %93, %1 : vector<32x32xf32>
    %cst_26 = arith.constant 0.000000e+00 : f32
    %95 = vector.broadcast %cst_26 : f32 to vector<32x32xf32>
    %96 = arith.maximumf %94, %95 : vector<32x32xf32>
    %97 = vector.shape_cast %96 : vector<32x32xf32> to vector<4x8x32xf32>
    %c0_27 = arith.constant 0 : index
    %c0_28 = arith.constant 0 : index
    %c0_29 = arith.constant 0 : index
    %98 = vector.load %arg8[%c0_27, %c0_28, %c0_29] : memref<4x8x32xf32, #tpu.memory_space<vmem>>, vector<4x8x32xf32>
    tpu.vector_store %arg8[%c0_27, %c0_28, %c0_29], %97 {strides = array<i32>} : memref<4x8x32xf32, #tpu.memory_space<vmem>>, vector<4x8x32xf32>,
    %c0_30 = arith.constant 0 : index
    %c0_31 = arith.constant 0 : index
    %c0_32 = arith.constant 0 : index
    %99 = vector.load %arg9[%c0_30, %c0_31, %c0_32] : memref<4x8x8xf32, #tpu.memory_space<vmem>>, vector<4x8x8xf32>
    tpu.vector_store %arg9[%c0_30, %c0_31, %c0_32], %56 {strides = array<i32>} : memref<4x8x8xf32, #tpu.memory_space<vmem>>, vector<4x8x8xf32>,
    return
  }
  func.func @transform_0(%arg0: i32) -> (i32, i32, i32) {
    %c0_i32 = arith.constant 0 : i32
    %c0_i32_0 = arith.constant 0 : i32
    %c0_i32_1 = arith.constant 0 : i32
    return %arg0, %c0_i32, %c0_i32_0 : i32, i32, i32
  }
  func.func @transform_1(%arg0: i32) -> (i32, i32) {
    %c0_i32 = arith.constant 0 : i32
    %c0_i32_0 = arith.constant 0 : i32
    %c0_i32_1 = arith.constant 0 : i32
    return %c0_i32, %c0_i32_0 : i32, i32
  }
  func.func @transform_2(%arg0: i32) -> (i32, i32) {
    %c0_i32 = arith.constant 0 : i32
    %c0_i32_0 = arith.constant 0 : i32
    %c0_i32_1 = arith.constant 0 : i32
    return %c0_i32, %c0_i32_0 : i32, i32
  }
  func.func @transform_3(%arg0: i32) -> (i32, i32) {
    %c0_i32 = arith.constant 0 : i32
    %c0_i32_0 = arith.constant 0 : i32
    %c0_i32_1 = arith.constant 0 : i32
    return %c0_i32, %c0_i32_0 : i32, i32
  }
  func.func @transform_4(%arg0: i32) -> (i32, i32) {
    %c0_i32 = arith.constant 0 : i32
    %c0_i32_0 = arith.constant 0 : i32
    %c0_i32_1 = arith.constant 0 : i32
    return %c0_i32, %c0_i32_0 : i32, i32
  }
  func.func @transform_5(%arg0: i32) -> (i32, i32) {
    %c0_i32 = arith.constant 0 : i32
    %c0_i32_0 = arith.constant 0 : i32
    %c0_i32_1 = arith.constant 0 : i32
    return %c0_i32, %c0_i32_0 : i32, i32
  }
  func.func @transform_6(%arg0: i32) -> (i32, i32) {
    %c0_i32 = arith.constant 0 : i32
    %c0_i32_0 = arith.constant 0 : i32
    %c0_i32_1 = arith.constant 0 : i32
    return %c0_i32, %c0_i32_0 : i32, i32
  }
  func.func @transform_7(%arg0: i32) -> (i32, i32, i32) {
    %c0_i32 = arith.constant 0 : i32
    %c0_i32_0 = arith.constant 0 : i32
    %c0_i32_1 = arith.constant 0 : i32
    return %arg0, %c0_i32, %c0_i32_0 : i32, i32, i32
  }
  func.func @transform_8(%arg0: i32) -> (i32, i32, i32) {
    %c0_i32 = arith.constant 0 : i32
    %c0_i32_0 = arith.constant 0 : i32
    %c0_i32_1 = arith.constant 0 : i32
    return %arg0, %c0_i32, %c0_i32_0 : i32, i32, i32
  }
}

module attributes {stable_mosaic.version = 11 : i64} {
  func.func @_mha_residual_kernel(%arg0: i32, %arg1: memref<4x8x32xf32, #tpu.memory_space<vmem>>, %arg2: memref<32x96xbf16, #tpu.memory_space<vmem>>, %arg3: memref<1x96xf32, #tpu.memory_space<vmem>>, %arg4: memref<32x32xbf16, #tpu.memory_space<vmem>>, %arg5: memref<1x32xf32, #tpu.memory_space<vmem>>, %arg6: memref<32x32xbf16, #tpu.memory_space<vmem>>, %arg7: memref<1x32xf32, #tpu.memory_space<vmem>>, %arg8: memref<4x8x32xf32, #tpu.memory_space<vmem>>, %arg9: memref<4x8x8xf32, #tpu.memory_space<vmem>>) attributes {dimension_semantics = [#tpu.dimension_semantics<parallel>], iteration_bounds = array<i64: 1>, scalar_prefetch = 0 : i64, scratch_operands = 0 : i64, tpu.core_type = #tpu.core_type<tc>, window_params = [{transform_indices = @transform_0, window_bounds = array<i64: 4, 8, 32>}, {pipeline_mode = #tpu.pipeline_mode<synchronous>, transform_indices = @transform_1, window_bounds = array<i64: 32, 96>}, {pipeline_mode = #tpu.pipeline_mode<synchronous>, transform_indices = @transform_2, window_bounds = array<i64: 1, 96>}, {pipeline_mode = #tpu.pipeline_mode<synchronous>, transform_indices = @transform_3, window_bounds = array<i64: 32, 32>}, {pipeline_mode = #tpu.pipeline_mode<synchronous>, transform_indices = @transform_4, window_bounds = array<i64: 1, 32>}, {pipeline_mode = #tpu.pipeline_mode<synchronous>, transform_indices = @transform_5, window_bounds = array<i64: 32, 32>}, {pipeline_mode = #tpu.pipeline_mode<synchronous>, transform_indices = @transform_6, window_bounds = array<i64: 1, 32>}, {transform_indices = @transform_7, window_bounds = array<i64: 4, 8, 32>}, {transform_indices = @transform_8, window_bounds = array<i64: 4, 8, 8>}]} {
    %c0 = arith.constant 0 : index
    %c0_0 = arith.constant 0 : index
    %c0_1 = arith.constant 0 : index
    %0 = vector.load %arg1[%c0, %c0_0, %c0_1] : memref<4x8x32xf32, #tpu.memory_space<vmem>>, vector<4x8x32xf32>
    %1 = vector.shape_cast %0 : vector<4x8x32xf32> to vector<32x32xf32>
    %2 = arith.truncf %1 : vector<32x32xf32> to vector<32x32xbf16>
    %c0_2 = arith.constant 0 : index
    %c0_3 = arith.constant 0 : index
    %3 = vector.load %arg2[%c0_2, %c0_3] : memref<32x96xbf16, #tpu.memory_space<vmem>>, vector<32x96xbf16>
    %cst = arith.constant dense<0.000000e+00> : vector<32x96xf32>
    %4 = tpu.matmul %2, %3, %cst {dimension_numbers = #tpu.dot_dimension_numbers<[1], [0], [0], [1], [0, 0, 1, 1], [], []>} : vector<32x32xbf16>, vector<32x96xbf16>, vector<32x96xf32> -> vector<32x96xf32>
    %c0_4 = arith.constant 0 : index
    %c0_5 = arith.constant 0 : index
    %5 = vector.load %arg3[%c0_4, %c0_5] : memref<1x96xf32, #tpu.memory_space<vmem>>, vector<1x96xf32>
    %6 = vector.broadcast %5 : vector<1x96xf32> to vector<32x96xf32>
    %7 = arith.addf %4, %6 : vector<32x96xf32>
    %8 = vector.extract_strided_slice %7 {offsets = [0, 0], sizes = [32, 8], strides = [1, 1]} : vector<32x96xf32> to vector<32x8xf32>
    %9 = vector.shape_cast %8 : vector<32x8xf32> to vector<4x8x8xf32>
    %10 = vector.extract_strided_slice %7 {offsets = [0, 8], sizes = [32, 8], strides = [1, 1]} : vector<32x96xf32> to vector<32x8xf32>
    %11 = vector.shape_cast %10 : vector<32x8xf32> to vector<4x8x8xf32>
    %12 = vector.extract_strided_slice %7 {offsets = [0, 16], sizes = [32, 8], strides = [1, 1]} : vector<32x96xf32> to vector<32x8xf32>
    %13 = vector.shape_cast %12 : vector<32x8xf32> to vector<4x8x8xf32>
    %14 = vector.extract_strided_slice %7 {offsets = [0, 24], sizes = [32, 8], strides = [1, 1]} : vector<32x96xf32> to vector<32x8xf32>
    %15 = vector.shape_cast %14 : vector<32x8xf32> to vector<4x8x8xf32>
    %16 = tpu.concatenate %9, %11, %13, %15 in 0 : vector<4x8x8xf32>, vector<4x8x8xf32>, vector<4x8x8xf32>, vector<4x8x8xf32> -> vector<16x8x8xf32>
    %17 = arith.truncf %16 : vector<16x8x8xf32> to vector<16x8x8xbf16>
    %18 = vector.extract_strided_slice %7 {offsets = [0, 32], sizes = [32, 8], strides = [1, 1]} : vector<32x96xf32> to vector<32x8xf32>
    %19 = vector.shape_cast %18 : vector<32x8xf32> to vector<4x8x8xf32>
    %20 = vector.extract_strided_slice %7 {offsets = [0, 40], sizes = [32, 8], strides = [1, 1]} : vector<32x96xf32> to vector<32x8xf32>
    %21 = vector.shape_cast %20 : vector<32x8xf32> to vector<4x8x8xf32>
    %22 = vector.extract_strided_slice %7 {offsets = [0, 48], sizes = [32, 8], strides = [1, 1]} : vector<32x96xf32> to vector<32x8xf32>
    %23 = vector.shape_cast %22 : vector<32x8xf32> to vector<4x8x8xf32>
    %24 = vector.extract_strided_slice %7 {offsets = [0, 56], sizes = [32, 8], strides = [1, 1]} : vector<32x96xf32> to vector<32x8xf32>
    %25 = vector.shape_cast %24 : vector<32x8xf32> to vector<4x8x8xf32>
    %26 = tpu.concatenate %19, %21, %23, %25 in 0 : vector<4x8x8xf32>, vector<4x8x8xf32>, vector<4x8x8xf32>, vector<4x8x8xf32> -> vector<16x8x8xf32>
    %27 = arith.truncf %26 : vector<16x8x8xf32> to vector<16x8x8xbf16>
    %28 = vector.extract_strided_slice %7 {offsets = [0, 64], sizes = [32, 8], strides = [1, 1]} : vector<32x96xf32> to vector<32x8xf32>
    %29 = vector.shape_cast %28 : vector<32x8xf32> to vector<4x8x8xf32>
    %30 = vector.extract_strided_slice %7 {offsets = [0, 72], sizes = [32, 8], strides = [1, 1]} : vector<32x96xf32> to vector<32x8xf32>
    %31 = vector.shape_cast %30 : vector<32x8xf32> to vector<4x8x8xf32>
    %32 = vector.extract_strided_slice %7 {offsets = [0, 80], sizes = [32, 8], strides = [1, 1]} : vector<32x96xf32> to vector<32x8xf32>
    %33 = vector.shape_cast %32 : vector<32x8xf32> to vector<4x8x8xf32>
    %34 = vector.extract_strided_slice %7 {offsets = [0, 88], sizes = [32, 8], strides = [1, 1]} : vector<32x96xf32> to vector<32x8xf32>
    %35 = vector.shape_cast %34 : vector<32x8xf32> to vector<4x8x8xf32>
    %36 = tpu.concatenate %29, %31, %33, %35 in 0 : vector<4x8x8xf32>, vector<4x8x8xf32>, vector<4x8x8xf32>, vector<4x8x8xf32> -> vector<16x8x8xf32>
    %37 = arith.truncf %36 : vector<16x8x8xf32> to vector<16x8x8xbf16>
    "tpu.trace_start"() <{level = 10 : i32, message = "gqd,gkd->gqk"}> : () -> ()
    %cst_6 = arith.constant dense<0.000000e+00> : vector<16x8x8xf32>
    %38 = tpu.matmul %17, %27, %cst_6 {dimension_numbers = #tpu.dot_dimension_numbers<[2], [2], [1], [1], [0, 0, 0, 1, 1, 1], [0], [0]>} : vector<16x8x8xbf16>, vector<16x8x8xbf16>, vector<16x8x8xf32> -> vector<16x8x8xf32>
    "tpu.trace_stop"() : () -> ()
    %cst_7 = arith.constant dense<0xFF800000> : vector<16x8xf32>
    %39 = vector.multi_reduction <maximumf>, %38, %cst_7 [2] : vector<16x8x8xf32> to vector<16x8xf32>
    %40 = vector.shape_cast %39 : vector<16x8xf32> to vector<16x8x1xf32>
    %41 = vector.broadcast %40 : vector<16x8x1xf32> to vector<16x8x8xf32>
    %42 = arith.subf %38, %41 : vector<16x8x8xf32>
    %43 = math.exp %42 : vector<16x8x8xf32>
    %cst_8 = arith.constant dense<0.000000e+00> : vector<16x8xf32>
    %44 = vector.multi_reduction <add>, %43, %cst_8 [2] : vector<16x8x8xf32> to vector<16x8xf32>
    %45 = vector.shape_cast %44 : vector<16x8xf32> to vector<16x8x1xf32>
    %46 = tpu.reciprocal %45 {approx = true} : vector<16x8x1xf32> -> vector<16x8x1xf32>
    %47 = arith.mulf %45, %46 : vector<16x8x1xf32>
    %cst_9 = arith.constant 2.000000e+00 : f32
    %48 = vector.broadcast %cst_9 : f32 to vector<16x8x1xf32>
    %49 = arith.subf %48, %47 : vector<16x8x1xf32>
    %50 = arith.mulf %46, %49 : vector<16x8x1xf32>
    %51 = vector.broadcast %50 : vector<16x8x1xf32> to vector<16x8x8xf32>
    %52 = arith.mulf %43, %51 : vector<16x8x8xf32>
    %53 = vector.shape_cast %52 : vector<16x8x8xf32> to vector<4x4x8x8xf32>
    %cst_10 = arith.constant dense<0.000000e+00> : vector<4x8x8xf32>
    %54 = vector.multi_reduction <add>, %53, %cst_10 [0] : vector<4x4x8x8xf32> to vector<4x8x8xf32>
    %cst_11 = arith.constant 2.500000e-01 : f32
    %55 = vector.broadcast %cst_11 : f32 to vector<4x8x8xf32>
    %56 = arith.mulf %54, %55 : vector<4x8x8xf32>
    %57 = arith.truncf %52 : vector<16x8x8xf32> to vector<16x8x8xbf16>
    "tpu.trace_start"() <{level = 10 : i32, message = "gqk,gkd->gqd"}> : () -> ()
    %cst_12 = arith.constant dense<0.000000e+00> : vector<16x8x8xf32>
    %58 = tpu.matmul %57, %37, %cst_12 {dimension_numbers = #tpu.dot_dimension_numbers<[2], [1], [1], [2], [0, 0, 0, 1, 1, 2], [0], [0]>} : vector<16x8x8xbf16>, vector<16x8x8xbf16>, vector<16x8x8xf32> -> vector<16x8x8xf32>
    "tpu.trace_stop"() : () -> ()
    %59 = vector.shape_cast %58 : vector<16x8x8xf32> to vector<4x32x8xf32>
    %c0_13 = arith.constant 0 : index
    %c0_14 = arith.constant 0 : index
    %60 = vector.load %arg4[%c0_13, %c0_14] : memref<32x32xbf16, #tpu.memory_space<vmem>>, vector<32x32xbf16>
    %c0_15 = arith.constant 0 : index
    %c0_16 = arith.constant 0 : index
    %61 = vector.load %arg5[%c0_15, %c0_16] : memref<1x32xf32, #tpu.memory_space<vmem>>, vector<1x32xf32>
    %62 = vector.shape_cast %61 : vector<1x32xf32> to vector<1x32xf32>
    %63 = vector.broadcast %62 : vector<1x32xf32> to vector<32x32xf32>
    %64 = vector.extract_strided_slice %59 {offsets = [0, 0, 0], sizes = [1, 32, 8], strides = [1, 1, 1]} : vector<4x32x8xf32> to vector<1x32x8xf32>
    %65 = vector.shape_cast %64 : vector<1x32x8xf32> to vector<32x8xf32>
    %66 = arith.truncf %65 : vector<32x8xf32> to vector<32x8xbf16>
    %67 = vector.extract_strided_slice %60 {offsets = [0, 0], sizes = [8, 32], strides = [1, 1]} : vector<32x32xbf16> to vector<8x32xbf16>
    %cst_17 = arith.constant dense<0.000000e+00> : vector<32x32xf32>
    %68 = tpu.matmul %66, %67, %cst_17 {dimension_numbers = #tpu.dot_dimension_numbers<[1], [0], [0], [1], [0, 0, 1, 1], [], []>} : vector<32x8xbf16>, vector<8x32xbf16>, vector<32x32xf32> -> vector<32x32xf32>
    %69 = arith.addf %63, %68 : vector<32x32xf32>
    %70 = vector.extract_strided_slice %59 {offsets = [1, 0, 0], sizes = [1, 32, 8], strides = [1, 1, 1]} : vector<4x32x8xf32> to vector<1x32x8xf32>
    %71 = vector.shape_cast %70 : vector<1x32x8xf32> to vector<32x8xf32>
    %72 = arith.truncf %71 : vector<32x8xf32> to vector<32x8xbf16>
    %73 = vector.extract_strided_slice %60 {offsets = [8, 0], sizes = [8, 32], strides = [1, 1]} : vector<32x32xbf16> to vector<8x32xbf16>
    %cst_18 = arith.constant dense<0.000000e+00> : vector<32x32xf32>
    %74 = tpu.matmul %72, %73, %cst_18 {dimension_numbers = #tpu.dot_dimension_numbers<[1], [0], [0], [1], [0, 0, 1, 1], [], []>} : vector<32x8xbf16>, vector<8x32xbf16>, vector<32x32xf32> -> vector<32x32xf32>
    %75 = arith.addf %69, %74 : vector<32x32xf32>
    %76 = vector.extract_strided_slice %59 {offsets = [2, 0, 0], sizes = [1, 32, 8], strides = [1, 1, 1]} : vector<4x32x8xf32> to vector<1x32x8xf32>
    %77 = vector.shape_cast %76 : vector<1x32x8xf32> to vector<32x8xf32>
    %78 = arith.truncf %77 : vector<32x8xf32> to vector<32x8xbf16>
    %79 = vector.extract_strided_slice %60 {offsets = [16, 0], sizes = [8, 32], strides = [1, 1]} : vector<32x32xbf16> to vector<8x32xbf16>
    %cst_19 = arith.constant dense<0.000000e+00> : vector<32x32xf32>
    %80 = tpu.matmul %78, %79, %cst_19 {dimension_numbers = #tpu.dot_dimension_numbers<[1], [0], [0], [1], [0, 0, 1, 1], [], []>} : vector<32x8xbf16>, vector<8x32xbf16>, vector<32x32xf32> -> vector<32x32xf32>
    %81 = arith.addf %75, %80 : vector<32x32xf32>
    %82 = vector.extract_strided_slice %59 {offsets = [3, 0, 0], sizes = [1, 32, 8], strides = [1, 1, 1]} : vector<4x32x8xf32> to vector<1x32x8xf32>
    %83 = vector.shape_cast %82 : vector<1x32x8xf32> to vector<32x8xf32>
    %84 = arith.truncf %83 : vector<32x8xf32> to vector<32x8xbf16>
    %85 = vector.extract_strided_slice %60 {offsets = [24, 0], sizes = [8, 32], strides = [1, 1]} : vector<32x32xbf16> to vector<8x32xbf16>
    %cst_20 = arith.constant dense<0.000000e+00> : vector<32x32xf32>
    %86 = tpu.matmul %84, %85, %cst_20 {dimension_numbers = #tpu.dot_dimension_numbers<[1], [0], [0], [1], [0, 0, 1, 1], [], []>} : vector<32x8xbf16>, vector<8x32xbf16>, vector<32x32xf32> -> vector<32x32xf32>
    %87 = arith.addf %81, %86 : vector<32x32xf32>
    %88 = arith.truncf %87 : vector<32x32xf32> to vector<32x32xbf16>
    %c0_21 = arith.constant 0 : index
    %c0_22 = arith.constant 0 : index
    %89 = vector.load %arg6[%c0_21, %c0_22] : memref<32x32xbf16, #tpu.memory_space<vmem>>, vector<32x32xbf16>
    %cst_23 = arith.constant dense<0.000000e+00> : vector<32x32xf32>
    %90 = tpu.matmul %88, %89, %cst_23 {dimension_numbers = #tpu.dot_dimension_numbers<[1], [0], [0], [1], [0, 0, 1, 1], [], []>} : vector<32x32xbf16>, vector<32x32xbf16>, vector<32x32xf32> -> vector<32x32xf32>
    %c0_24 = arith.constant 0 : index
    %c0_25 = arith.constant 0 : index
    %91 = vector.load %arg7[%c0_24, %c0_25] : memref<1x32xf32, #tpu.memory_space<vmem>>, vector<1x32xf32>
    %92 = vector.broadcast %91 : vector<1x32xf32> to vector<32x32xf32>
    %93 = arith.addf %90, %92 : vector<32x32xf32>
    %94 = arith.addf %93, %1 : vector<32x32xf32>
    %cst_26 = arith.constant 0.000000e+00 : f32
    %95 = vector.broadcast %cst_26 : f32 to vector<32x32xf32>
    %96 = arith.maximumf %94, %95 : vector<32x32xf32>
    %97 = vector.shape_cast %96 : vector<32x32xf32> to vector<4x8x32xf32>
    %c0_27 = arith.constant 0 : index
    %c0_28 = arith.constant 0 : index
    %c0_29 = arith.constant 0 : index
    %98 = vector.load %arg8[%c0_27, %c0_28, %c0_29] : memref<4x8x32xf32, #tpu.memory_space<vmem>>, vector<4x8x32xf32>
    tpu.vector_store %arg8[%c0_27, %c0_28, %c0_29], %97 {strides = array<i32>} : memref<4x8x32xf32, #tpu.memory_space<vmem>>, vector<4x8x32xf32>,
    %c0_30 = arith.constant 0 : index
    %c0_31 = arith.constant 0 : index
    %c0_32 = arith.constant 0 : index
    %99 = vector.load %arg9[%c0_30, %c0_31, %c0_32] : memref<4x8x8xf32, #tpu.memory_space<vmem>>, vector<4x8x8xf32>
    tpu.vector_store %arg9[%c0_30, %c0_31, %c0_32], %56 {strides = array<i32>} : memref<4x8x8xf32, #tpu.memory_space<vmem>>, vector<4x8x8xf32>,
    return
  }
  func.func @transform_0(%arg0: i32) -> (i32, i32, i32) {
    %c0_i32 = arith.constant 0 : i32
    %c0_i32_0 = arith.constant 0 : i32
    %c0_i32_1 = arith.constant 0 : i32
    return %arg0, %c0_i32, %c0_i32_0 : i32, i32, i32
  }
  func.func @transform_1(%arg0: i32) -> (i32, i32) {
    %c0_i32 = arith.constant 0 : i32
    %c0_i32_0 = arith.constant 0 : i32
    %c0_i32_1 = arith.constant 0 : i32
    return %c0_i32, %c0_i32_0 : i32, i32
  }
  func.func @transform_2(%arg0: i32) -> (i32, i32) {
    %c0_i32 = arith.constant 0 : i32
    %c0_i32_0 = arith.constant 0 : i32
    %c0_i32_1 = arith.constant 0 : i32
    return %c0_i32, %c0_i32_0 : i32, i32
  }
  func.func @transform_3(%arg0: i32) -> (i32, i32) {
    %c0_i32 = arith.constant 0 : i32
    %c0_i32_0 = arith.constant 0 : i32
    %c0_i32_1 = arith.constant 0 : i32
    return %c0_i32, %c0_i32_0 : i32, i32
  }
  func.func @transform_4(%arg0: i32) -> (i32, i32) {
    %c0_i32 = arith.constant 0 : i32
    %c0_i32_0 = arith.constant 0 : i32
    %c0_i32_1 = arith.constant 0 : i32
    return %c0_i32, %c0_i32_0 : i32, i32
  }
  func.func @transform_5(%arg0: i32) -> (i32, i32) {
    %c0_i32 = arith.constant 0 : i32
    %c0_i32_0 = arith.constant 0 : i32
    %c0_i32_1 = arith.constant 0 : i32
    return %c0_i32, %c0_i32_0 : i32, i32
  }
  func.func @transform_6(%arg0: i32) -> (i32, i32) {
    %c0_i32 = arith.constant 0 : i32
    %c0_i32_0 = arith.constant 0 : i32
    %c0_i32_1 = arith.constant 0 : i32
    return %c0_i32, %c0_i32_0 : i32, i32
  }
  func.func @transform_7(%arg0: i32) -> (i32, i32, i32) {
    %c0_i32 = arith.constant 0 : i32
    %c0_i32_0 = arith.constant 0 : i32
    %c0_i32_1 = arith.constant 0 : i32
    return %arg0, %c0_i32, %c0_i32_0 : i32, i32, i32
  }
  func.func @transform_8(%arg0: i32) -> (i32, i32, i32) {
    %c0_i32 = arith.constant 0 : i32
    %c0_i32_0 = arith.constant 0 : i32
    %c0_i32_1 = arith.constant 0 : i32
    return %arg0, %c0_i32, %c0_i32_0 : i32, i32, i32
  }
}

</mosaic_0001>

<llo_original>
// kernel: tpu_custom_call.1
$region0: #{tpu_custom_call.1}
  #allocation0 [shape = 'u32[]', space=smem, size = 0x4, offset = 0x4, fixed_abs, tag = 'smem constant byte address 0x4 - core index']
  #allocation1 [shape = 'u32[144,128]{1,0:T(1,128)}', space=vmem, size = 0x12000, scoped, tag = 'internal scratch']
  %s0 = inlined_call_operand.hbm [shape: f32[4,8,32], index: 0, kind: input, shape index: {}]
  %s1 = inlined_call_operand.hbm [shape: bf16[32,96], index: 1, kind: input, shape index: {}]
  %s2 = inlined_call_operand.vmem [shape: f32[1,96], index: 2, kind: input, shape index: {}]
  %s3 = inlined_call_operand.hbm [shape: bf16[32,32], index: 3, kind: input, shape index: {}]
  %s4 = inlined_call_operand.vmem [shape: f32[1,32], index: 4, kind: input, shape index: {}]
  %s5 = inlined_call_operand.vmem [shape: bf16[32,32], index: 5, kind: input, shape index: {}]
  %s6 = inlined_call_operand.vmem [shape: f32[1,32], index: 6, kind: input, shape index: {}]
  %s7 = inlined_call_operand.hbm [shape: f32[4,8,32], index: 7, kind: output, shape index: {0}]
  %s8 = inlined_call_operand.hbm [shape: f32[4,8,8], index: 8, kind: output, shape index: {1}]
  %9 = xla_tuple %s7, %s8
  %s10 = sld [smem:[#allocation0]]
  $region58: #{tpu_custom_call.1} parent=0
    _
  %s12 = ssub.s32 1, %s10
  %s13 = scalar_select 0, %s12, %s10
  $region1: #{tpu_custom_call.1} parent=0
    #allocation2 [shape = 'u8[16384]{0}', space=vmem, size = 0x4000, scoped, tag = 'input window, operand 0, single buffered']
    #allocation3 [shape = 's32[1]{0}', space=sflag, size = 0x4, scoped, tag = 'scoped memory for tpu_custom_call.1']
    #allocation4 [shape = 's32[1]{0}', space=sflag, size = 0x4, scoped, tag = 'scoped memory for tpu_custom_call.1']
    #allocation5 [shape = 'u8[8192]{0}', space=vmem, size = 0x2000, scoped, tag = 'input window, operand 1, single buffered']
    #allocation6 [shape = 's32[1]{0}', space=sflag, size = 0x4, scoped, tag = 'scoped memory for tpu_custom_call.1']
    #allocation7 [shape = 'u8[8192]{0}', space=vmem, size = 0x2000, scoped, tag = 'input window, operand 3, single buffered']
    #allocation8 [shape = 'u8[16384]{0}', space=vmem, size = 0x4000, scoped, tag = 'output window, operand 0, single buffered']
    #allocation9 [shape = 'u8[16384]{0}', space=vmem, size = 0x4000, scoped, tag = 'output window, operand 1, single buffered']
    #allocation10 [shape = 's32[1]{0}', space=sflag, size = 0x4, scoped, tag = 'scoped memory for tpu_custom_call.1']
    %14 = vsyncpa [#allocation3], 0
    %15 = vsyncpa [#allocation6], 0
    %16 = vsyncpa [#allocation4], 0
    %17 = vsyncpa [#allocation10], 0
    // Predicated region
    $region2: #{tpu_custom_call.1} parent=1 // pred_check
      _
    $region3: #{tpu_custom_call.1} parent=1 // pred_check_branch
      %19 = sbr.rel (0) target = $region5
    $region4: #{tpu_custom_call.1} parent=1 // pred_region
      %s21 = ssub.s32 512, 512
      %22 = vsyncadd [#allocation3], %s21
      %s23 = sshll.u32 [#allocation2], 4
      %s24 = int_to_ptr.vmem [resolvable:$true] %s23
      %29 = dma.hbm_to_vmem [thread:$0]  %s0, 512, %s24, [#allocation3], 128, 128, 8
    $region5: #{tpu_custom_call.1} parent=1 // pred_fallthru
      _
    // Predicated region
    $region6: #{tpu_custom_call.1} parent=1 // pred_check
      _
    $region7: #{tpu_custom_call.1} parent=1 // pred_check_branch
      %31 = sbr.rel (0) target = $region9
    $region8: #{tpu_custom_call.1} parent=1 // pred_region
      %s33 = ssub.s32 256, 256
      %34 = vsyncadd [#allocation6], %s33
      %s35 = sshll.u32 [#allocation5], 4
      %s36 = int_to_ptr.vmem [resolvable:$true] %s35
      %41 = dma.hbm_to_vmem [thread:$0]  %s1, 256, %s36, [#allocation6], 64, 64, 4
    $region9: #{tpu_custom_call.1} parent=1 // pred_fallthru
      _
    // Predicated region
    $region10: #{tpu_custom_call.1} parent=1 // pred_check
      _
    $region11: #{tpu_custom_call.1} parent=1 // pred_check_branch
      %43 = sbr.rel (0) target = $region13
    $region12: #{tpu_custom_call.1} parent=1 // pred_region
      _
    $region13: #{tpu_custom_call.1} parent=1 // pred_fallthru
      _
    // Predicated region
    $region14: #{tpu_custom_call.1} parent=1 // pred_check
      _
    $region15: #{tpu_custom_call.1} parent=1 // pred_check_branch
      %45 = sbr.rel (0) target = $region17
    $region16: #{tpu_custom_call.1} parent=1 // pred_region
      %s47 = ssub.s32 256, 256
      %48 = vsyncadd [#allocation6], %s47
      %s49 = sshll.u32 [#allocation7], 4
      %s50 = int_to_ptr.vmem [resolvable:$true] %s49
      %55 = dma.hbm_to_vmem [thread:$0]  %s3, 256, %s50, [#allocation6], 64, 64, 4
    $region17: #{tpu_custom_call.1} parent=1 // pred_fallthru
      _
    // Predicated region
    $region18: #{tpu_custom_call.1} parent=1 // pred_check
      _
    $region19: #{tpu_custom_call.1} parent=1 // pred_check_branch
      %57 = sbr.rel (0) target = $region21
    $region20: #{tpu_custom_call.1} parent=1 // pred_region
      _
    $region21: #{tpu_custom_call.1} parent=1 // pred_fallthru
      _
    // Predicated region
    $region22: #{tpu_custom_call.1} parent=1 // pred_check
      _
    $region23: #{tpu_custom_call.1} parent=1 // pred_check_branch
      %59 = sbr.rel (0) target = $region25
    $region24: #{tpu_custom_call.1} parent=1 // pred_region
      _
    $region25: #{tpu_custom_call.1} parent=1 // pred_fallthru
      _
    // Predicated region
    $region26: #{tpu_custom_call.1} parent=1 // pred_check
      _
    $region27: #{tpu_custom_call.1} parent=1 // pred_check_branch
      %61 = sbr.rel (0) target = $region29
    $region28: #{tpu_custom_call.1} parent=1 // pred_region
      _
    $region29: #{tpu_custom_call.1} parent=1 // pred_fallthru
      _
    // Predicated region
    $region30: #{tpu_custom_call.1} parent=1 // pred_check
      _
    $region31: #{tpu_custom_call.1} parent=1 // pred_check_branch
      %63 = sbr.rel (0) target = $region33
    $region32: #{tpu_custom_call.1} parent=1 // pred_region
      %64 = dma.done [#allocation3], 512
    $region33: #{tpu_custom_call.1} parent=1 // pred_fallthru
      _
    // Predicated region
    $region34: #{tpu_custom_call.1} parent=1 // pred_check
      _
    $region35: #{tpu_custom_call.1} parent=1 // pred_check_branch
      %66 = sbr.rel (0) target = $region37
    $region36: #{tpu_custom_call.1} parent=1 // pred_region
      %67 = dma.done [#allocation6], 256
    $region37: #{tpu_custom_call.1} parent=1 // pred_fallthru
      _
    // Predicated region
    $region38: #{tpu_custom_call.1} parent=1 // pred_check
      _
    $region39: #{tpu_custom_call.1} parent=1 // pred_check_branch
      %69 = sbr.rel (0) target = $region41
    $region40: #{tpu_custom_call.1} parent=1 // pred_region
      %70 = dma.done [#allocation6], 256
    $region41: #{tpu_custom_call.1} parent=1 // pred_fallthru
      _
    %v72 = vld [vmem:[#allocation2] sm:$0xff]
    %v73 = vld [vmem:[#allocation2 + $0x8] sm:$0xff]
    %v74 = vld [vmem:[#allocation2 + $0x10] sm:$0xff]
    %v75 = vld [vmem:[#allocation2 + $0x18] sm:$0xff]
    %v76 = vpack.c.bf16 %v73, %v72
    %v77 = vpack.c.bf16 %v75, %v74
    %v78 = vld [vmem:[#allocation5] sm:$0xf]
    %v79 = vld [vmem:[#allocation5 + $0x4] sm:$0xf]
    %v80 = vld [vmem:[#allocation5 + $0x8] sm:$0xf]
    %v81 = vld [vmem:[#allocation5 + $0xc] sm:$0xf]
    %v82 = vld [vmem:[%s2] sm:$0x1]
    %v84 = vlaneseq
    %v85 = vshrl.u32 %v84, 7
    %v86 = vsub.s32 0, %v85
    %v87 = vrot.slane %v82, %v86
    %v93 = vunpack.c.l.b16 %v78
    %v94 = vunpack.c.l.b16 %v79
    %v95 = vunpack.c.l.b16 %v80
    %v96 = vunpack.c.l.b16 %v81
    %v97 = vpack.c.b16 %v94, %v93
    %v98 = vpack.c.b16 %v96, %v95
    %vm101 = vcmask 261120
    %v103 = vsel %vm101, %v76, 0
    %v106 = vsel %vm101, %v77, 0
    %108 = vmatprep.subr.bf16.mxu0 0
    %109 = vmatpush1.bf16.msra.mxu0 %v97
    %110 = vmatprep.subr.bf16.mxu0 0
    %111 = vmatpush1.bf16.msra.mxu0 %v98
    %112 = vmatprep.subr.bf16.mxu0 0
    %113 = vmatpush1.bf16.msra.mxu0 0
    %114 = vmatprep.subr.bf16.mxu0 0
    %115 = vmatpush1.bf16.msra.mxu0 0
    %116 = vmatprep.subr.bf16.mxu0 0
    %117 = vmatpush1.bf16.msra.mxu0 0
    %118 = vmatprep.subr.bf16.mxu0 0
    %119 = vmatpush1.bf16.msra.mxu0 0
    %120 = vmatprep.subr.bf16.mxu0 0
    %121 = vmatpush1.bf16.msra.mxu0 0
    %122 = vmatprep.subr.bf16.mxu0 0
    %123 = vmatpush1.bf16.msra.mxu0 0
    %124 = vmatprep.subr.bf16.mxu0 0
    %125 = vmatpush1.bf16.msra.mxu0 0
    %126 = vmatprep.subr.bf16.mxu0 0
    %127 = vmatpush1.bf16.msra.mxu0 0
    %128 = vmatprep.subr.bf16.mxu0 0
    %129 = vmatpush1.bf16.msra.mxu0 0
    %130 = vmatprep.subr.bf16.mxu0 0
    %131 = vmatpush1.bf16.msra.mxu0 0
    %132 = vmatprep.subr.bf16.mxu0 0
    %133 = vmatpush1.bf16.msra.mxu0 0
    %134 = vmatprep.subr.bf16.mxu0 0
    %135 = vmatpush1.bf16.msra.mxu0 0
    %136 = vmatprep.subr.bf16.mxu0 0
    %137 = vmatpush1.bf16.msra.mxu0 0
    %138 = vmatprep.subr.bf16.mxu0 0
    %139 = vmatpush1.bf16.msra.mxu0 0
    %140 = vmatprep.mubr.bf16.mxu0 0
    %141 = vmatmul.mubr.bf16.gmra.mrb[0].mxu0 %v103
    %v142 = vpop.f32.mrb[0].mxu0
    %v143 = vadd.f32 %v87, %v142
    %v144 = vpop.f32.mrb[0].mxu0
    %v145 = vpop.f32.mrb[0].mxu0
    %v146 = vadd.f32 %v87, %v145
    %v147 = vpop.f32.mrb[0].mxu0
    %148 = vmatprep.mubr.bf16.mxu0 0
    %149 = vmatmul.mubr.bf16.gmra.mrb[0].mxu0 %v106
    %v150 = vpop.f32.mrb[0].mxu0
    %v151 = vadd.f32 %v87, %v150
    %v152 = vpop.f32.mrb[0].mxu0
    %v153 = vpop.f32.mrb[0].mxu0
    %v154 = vadd.f32 %v87, %v153
    %v155 = vpop.f32.mrb[0].mxu0
    %156 = vdwg.mxu0
    %161 = vrot.lane.b32.xlu0 %v143, 120
    %v162 = vpop.permute.xlu0 %161
    %163 = vrot.lane.b32.xlu0 %v146, 120
    %v164 = vpop.permute.xlu0 %163
    %165 = vrot.lane.b32.xlu0 %v151, 120
    %v166 = vpop.permute.xlu0 %165
    %167 = vrot.lane.b32.xlu0 %v154, 120
    %v168 = vpop.permute.xlu0 %167
    %173 = vrot.lane.b32.xlu0 %v143, 112
    %v174 = vpop.permute.xlu0 %173
    %175 = vrot.lane.b32.xlu0 %v146, 112
    %v176 = vpop.permute.xlu0 %175
    %177 = vrot.lane.b32.xlu0 %v151, 112
    %v178 = vpop.permute.xlu0 %177
    %179 = vrot.lane.b32.xlu0 %v154, 112
    %v180 = vpop.permute.xlu0 %179
    %185 = vrot.lane.b32.xlu0 %v143, 104
    %v186 = vpop.permute.xlu0 %185
    %187 = vrot.lane.b32.xlu0 %v146, 104
    %v188 = vpop.permute.xlu0 %187
    %189 = vrot.lane.b32.xlu0 %v151, 104
    %v190 = vpop.permute.xlu0 %189
    %191 = vrot.lane.b32.xlu0 %v154, 104
    %v192 = vpop.permute.xlu0 %191
    %v197 = vpack.c.bf16 %v143, %v143
    %v198 = vpack.c.bf16 %v146, %v146
    %v199 = vpack.c.bf16 %v151, %v151
    %v200 = vpack.c.bf16 %v154, %v154
    %v201 = vpack.c.bf16 %v162, %v162
    %v202 = vpack.c.bf16 %v164, %v164
    %v203 = vpack.c.bf16 %v166, %v166
    %v204 = vpack.c.bf16 %v168, %v168
    %v205 = vpack.c.bf16 %v174, %v174
    %v206 = vpack.c.bf16 %v176, %v176
    %v207 = vpack.c.bf16 %v178, %v178
    %v208 = vpack.c.bf16 %v180, %v180
    %v209 = vpack.c.bf16 %v186, %v186
    %v210 = vpack.c.bf16 %v188, %v188
    %v211 = vpack.c.bf16 %v190, %v190
    %v212 = vpack.c.bf16 %v192, %v192
    %214 = vrot.lane.b32.xlu0 %v197, 96
    %v215 = vpop.permute.xlu0 %214
    %vm216 = vcmask 64512
    %v218 = vsel %vm216, %v197, 0
    %v221 = vsel %vm216, %v215, 0
    %223 = vmatprep.subr.bf16.mxu0 0
    %224 = vmatpush1.bf16.xpose.msra.mxu0 %v221
    %225 = vmatprep.subr.bf16.mxu0 0
    %226 = vmatpush1.bf16.xpose.msra.mxu0 0
    %227 = vmatprep.subr.bf16.mxu0 0
    %228 = vmatpush1.bf16.xpose.msra.mxu0 0
    %229 = vmatprep.subr.bf16.mxu0 0
    %230 = vmatpush1.bf16.xpose.msra.mxu0 0
    %231 = vmatprep.subr.bf16.mxu0 0
    %232 = vmatpush1.bf16.xpose.msra.mxu0 0
    %233 = vmatprep.subr.bf16.mxu0 0
    %234 = vmatpush1.bf16.xpose.msra.mxu0 0
    %235 = vmatprep.subr.bf16.mxu0 0
    %236 = vmatpush1.bf16.xpose.msra.mxu0 0
    %237 = vmatprep.subr.bf16.mxu0 0
    %238 = vmatpush1.bf16.xpose.msra.mxu0 0
    %239 = vmatprep.subr.bf16.mxu0 0
    %240 = vmatpush1.bf16.xpose.msra.mxu0 0
    %241 = vmatprep.subr.bf16.mxu0 0
    %242 = vmatpush1.bf16.xpose.msra.mxu0 0
    %243 = vmatprep.subr.bf16.mxu0 0
    %244 = vmatpush1.bf16.xpose.msra.mxu0 0
    %245 = vmatprep.subr.bf16.mxu0 0
    %246 = vmatpush1.bf16.xpose.msra.mxu0 0
    %247 = vmatprep.subr.bf16.mxu0 0
    %248 = vmatpush1.bf16.xpose.msra.mxu0 0
    %249 = vmatprep.subr.bf16.mxu0 0
    %250 = vmatpush1.bf16.xpose.msra.mxu0 0
    %251 = vmatprep.subr.bf16.mxu0 0
    %252 = vmatpush1.bf16.xpose.msra.mxu0 0
    %253 = vmatprep.subr.bf16.mxu0 0
    %254 = vmatpush1.bf16.xpose.msra.mxu0 0
    %255 = vmatprep.mubr.bf16.mxu0 0
    %256 = vmatmul.mubr.bf16.gmra.mrb[0].mxu0 %v218
    %v257 = vpop.f32.mrb[0].mxu0
    %v258 = vadd.f32 0.0, %v257
    %v259 = vpop.f32.mrb[0].mxu0
    %v260 = vpop.f32.mrb[0].mxu0
    %v261 = vpop.f32.mrb[0].mxu0
    %262 = vdwg.mxu0
    %264 = vrot.lane.b32.xlu0 %v198, 96
    %v265 = vpop.permute.xlu0 %264
    %v267 = vsel %vm216, %v198, 0
    %v270 = vsel %vm216, %v265, 0
    %272 = vmatprep.subr.bf16.mxu0 0
    %273 = vmatpush1.bf16.xpose.msra.mxu0 %v270
    %274 = vmatprep.subr.bf16.mxu0 0
    %275 = vmatpush1.bf16.xpose.msra.mxu0 0
    %276 = vmatprep.subr.bf16.mxu0 0
    %277 = vmatpush1.bf16.xpose.msra.mxu0 0
    %278 = vmatprep.subr.bf16.mxu0 0
    %279 = vmatpush1.bf16.xpose.msra.mxu0 0
    %280 = vmatprep.subr.bf16.mxu0 0
    %281 = vmatpush1.bf16.xpose.msra.mxu0 0
    %282 = vmatprep.subr.bf16.mxu0 0
    %283 = vmatpush1.bf16.xpose.msra.mxu0 0
    %284 = vmatprep.subr.bf16.mxu0 0
    %285 = vmatpush1.bf16.xpose.msra.mxu0 0
    %286 = vmatprep.subr.bf16.mxu0 0
    %287 = vmatpush1.bf16.xpose.msra.mxu0 0
    %288 = vmatprep.subr.bf16.mxu0 0
    %289 = vmatpush1.bf16.xpose.msra.mxu0 0
    %290 = vmatprep.subr.bf16.mxu0 0
    %291 = vmatpush1.bf16.xpose.msra.mxu0 0
    %292 = vmatprep.subr.bf16.mxu0 0
    %293 = vmatpush1.bf16.xpose.msra.mxu0 0
    %294 = vmatprep.subr.bf16.mxu0 0
    %295 = vmatpush1.bf16.xpose.msra.mxu0 0
    %296 = vmatprep.subr.bf16.mxu0 0
    %297 = vmatpush1.bf16.xpose.msra.mxu0 0
    %298 = vmatprep.subr.bf16.mxu0 0
    %299 = vmatpush1.bf16.xpose.msra.mxu0 0
    %300 = vmatprep.subr.bf16.mxu0 0
    %301 = vmatpush1.bf16.xpose.msra.mxu0 0
    %302 = vmatprep.subr.bf16.mxu0 0
    %303 = vmatpush1.bf16.xpose.msra.mxu0 0
    %304 = vmatprep.mubr.bf16.mxu0 0
    %305 = vmatmul.mubr.bf16.gmra.mrb[0].mxu0 %v267
    %v306 = vpop.f32.mrb[0].mxu0
    %v307 = vadd.f32 0.0, %v306
    %v308 = vpop.f32.mrb[0].mxu0
    %v309 = vpop.f32.mrb[0].mxu0
    %v310 = vpop.f32.mrb[0].mxu0
    %311 = vdwg.mxu0
    %313 = vrot.lane.b32.xlu0 %v199, 96
    %v314 = vpop.permute.xlu0 %313
    %v316 = vsel %vm216, %v199, 0
    %v319 = vsel %vm216, %v314, 0
    %321 = vmatprep.subr.bf16.mxu0 0
    %322 = vmatpush1.bf16.xpose.msra.mxu0 %v319
    %323 = vmatprep.subr.bf16.mxu0 0
    %324 = vmatpush1.bf16.xpose.msra.mxu0 0
    %325 = vmatprep.subr.bf16.mxu0 0
    %326 = vmatpush1.bf16.xpose.msra.mxu0 0
    %327 = vmatprep.subr.bf16.mxu0 0
    %328 = vmatpush1.bf16.xpose.msra.mxu0 0
    %329 = vmatprep.subr.bf16.mxu0 0
    %330 = vmatpush1.bf16.xpose.msra.mxu0 0
    %331 = vmatprep.subr.bf16.mxu0 0
    %332 = vmatpush1.bf16.xpose.msra.mxu0 0
    %333 = vmatprep.subr.bf16.mxu0 0
    %334 = vmatpush1.bf16.xpose.msra.mxu0 0
    %335 = vmatprep.subr.bf16.mxu0 0
    %336 = vmatpush1.bf16.xpose.msra.mxu0 0
    %337 = vmatprep.subr.bf16.mxu0 0
    %338 = vmatpush1.bf16.xpose.msra.mxu0 0
    %339 = vmatprep.subr.bf16.mxu0 0
    %340 = vmatpush1.bf16.xpose.msra.mxu0 0
    %341 = vmatprep.subr.bf16.mxu0 0
    %342 = vmatpush1.bf16.xpose.msra.mxu0 0
    %343 = vmatprep.subr.bf16.mxu0 0
    %344 = vmatpush1.bf16.xpose.msra.mxu0 0
    %345 = vmatprep.subr.bf16.mxu0 0
    %346 = vmatpush1.bf16.xpose.msra.mxu0 0
    %347 = vmatprep.subr.bf16.mxu0 0
    %348 = vmatpush1.bf16.xpose.msra.mxu0 0
    %349 = vmatprep.subr.bf16.mxu0 0
    %350 = vmatpush1.bf16.xpose.msra.mxu0 0
    %351 = vmatprep.subr.bf16.mxu0 0
    %352 = vmatpush1.bf16.xpose.msra.mxu0 0
    %353 = vmatprep.mubr.bf16.mxu0 0
    %354 = vmatmul.mubr.bf16.gmra.mrb[0].mxu0 %v316
    %v355 = vpop.f32.mrb[0].mxu0
    %v356 = vadd.f32 0.0, %v355
    %v357 = vpop.f32.mrb[0].mxu0
    %v358 = vpop.f32.mrb[0].mxu0
    %v359 = vpop.f32.mrb[0].mxu0
    %360 = vdwg.mxu0
    %362 = vrot.lane.b32.xlu0 %v200, 96
    %v363 = vpop.permute.xlu0 %362
    %v365 = vsel %vm216, %v200, 0
    %v368 = vsel %vm216, %v363, 0
    %370 = vmatprep.subr.bf16.mxu0 0
    %371 = vmatpush1.bf16.xpose.msra.mxu0 %v368
    %372 = vmatprep.subr.bf16.mxu0 0
    %373 = vmatpush1.bf16.xpose.msra.mxu0 0
    %374 = vmatprep.subr.bf16.mxu0 0
    %375 = vmatpush1.bf16.xpose.msra.mxu0 0
    %376 = vmatprep.subr.bf16.mxu0 0
    %377 = vmatpush1.bf16.xpose.msra.mxu0 0
    %378 = vmatprep.subr.bf16.mxu0 0
    %379 = vmatpush1.bf16.xpose.msra.mxu0 0
    %380 = vmatprep.subr.bf16.mxu0 0
    %381 = vmatpush1.bf16.xpose.msra.mxu0 0
    %382 = vmatprep.subr.bf16.mxu0 0
    %383 = vmatpush1.bf16.xpose.msra.mxu0 0
    %384 = vmatprep.subr.bf16.mxu0 0
    %385 = vmatpush1.bf16.xpose.msra.mxu0 0
    %386 = vmatprep.subr.bf16.mxu0 0
    %387 = vmatpush1.bf16.xpose.msra.mxu0 0
    %388 = vmatprep.subr.bf16.mxu0 0
    %389 = vmatpush1.bf16.xpose.msra.mxu0 0
    %390 = vmatprep.subr.bf16.mxu0 0
    %391 = vmatpush1.bf16.xpose.msra.mxu0 0
    %392 = vmatprep.subr.bf16.mxu0 0
    %393 = vmatpush1.bf16.xpose.msra.mxu0 0
    %394 = vmatprep.subr.bf16.mxu0 0
    %395 = vmatpush1.bf16.xpose.msra.mxu0 0
    %396 = vmatprep.subr.bf16.mxu0 0
    %397 = vmatpush1.bf16.xpose.msra.mxu0 0
    %398 = vmatprep.subr.bf16.mxu0 0
    %399 = vmatpush1.bf16.xpose.msra.mxu0 0
    %400 = vmatprep.subr.bf16.mxu0 0
    %401 = vmatpush1.bf16.xpose.msra.mxu0 0
    %402 = vmatprep.mubr.bf16.mxu0 0
    %403 = vmatmul.mubr.bf16.gmra.mrb[0].mxu0 %v365
    %v404 = vpop.f32.mrb[0].mxu0
    %v405 = vadd.f32 0.0, %v404
    %v406 = vpop.f32.mrb[0].mxu0
    %v407 = vpop.f32.mrb[0].mxu0
    %v408 = vpop.f32.mrb[0].mxu0
    %409 = vdwg.mxu0
    %411 = vrot.lane.b32.xlu0 %v201, 96
    %v412 = vpop.permute.xlu0 %411
    %v414 = vsel %vm216, %v201, 0
    %v417 = vsel %vm216, %v412, 0
    %419 = vmatprep.subr.bf16.mxu0 0
    %420 = vmatpush1.bf16.xpose.msra.mxu0 %v417
    %421 = vmatprep.subr.bf16.mxu0 0
    %422 = vmatpush1.bf16.xpose.msra.mxu0 0
    %423 = vmatprep.subr.bf16.mxu0 0
    %424 = vmatpush1.bf16.xpose.msra.mxu0 0
    %425 = vmatprep.subr.bf16.mxu0 0
    %426 = vmatpush1.bf16.xpose.msra.mxu0 0
    %427 = vmatprep.subr.bf16.mxu0 0
    %428 = vmatpush1.bf16.xpose.msra.mxu0 0
    %429 = vmatprep.subr.bf16.mxu0 0
    %430 = vmatpush1.bf16.xpose.msra.mxu0 0
    %431 = vmatprep.subr.bf16.mxu0 0
    %432 = vmatpush1.bf16.xpose.msra.mxu0 0
    %433 = vmatprep.subr.bf16.mxu0 0
    %434 = vmatpush1.bf16.xpose.msra.mxu0 0
    %435 = vmatprep.subr.bf16.mxu0 0
    %436 = vmatpush1.bf16.xpose.msra.mxu0 0
    %437 = vmatprep.subr.bf16.mxu0 0
    %438 = vmatpush1.bf16.xpose.msra.mxu0 0
    %439 = vmatprep.subr.bf16.mxu0 0
    %440 = vmatpush1.bf16.xpose.msra.mxu0 0
    %441 = vmatprep.subr.bf16.mxu0 0
    %442 = vmatpush1.bf16.xpose.msra.mxu0 0
    %443 = vmatprep.subr.bf16.mxu0 0
    %444 = vmatpush1.bf16.xpose.msra.mxu0 0
    %445 = vmatprep.subr.bf16.mxu0 0
    %446 = vmatpush1.bf16.xpose.msra.mxu0 0
    %447 = vmatprep.subr.bf16.mxu0 0
    %448 = vmatpush1.bf16.xpose.msra.mxu0 0
    %449 = vmatprep.subr.bf16.mxu0 0
    %450 = vmatpush1.bf16.xpose.msra.mxu0 0
    %451 = vmatprep.mubr.bf16.mxu0 0
    %452 = vmatmul.mubr.bf16.gmra.mrb[0].mxu0 %v414
    %v453 = vpop.f32.mrb[0].mxu0
    %v454 = vadd.f32 0.0, %v453
    %v455 = vpop.f32.mrb[0].mxu0
    %v456 = vpop.f32.mrb[0].mxu0
    %v457 = vpop.f32.mrb[0].mxu0
    %458 = vdwg.mxu0
    %460 = vrot.lane.b32.xlu0 %v202, 96
    %v461 = vpop.permute.xlu0 %460
    %v463 = vsel %vm216, %v202, 0
    %v466 = vsel %vm216, %v461, 0
    %468 = vmatprep.subr.bf16.mxu0 0
    %469 = vmatpush1.bf16.xpose.msra.mxu0 %v466
    %470 = vmatprep.subr.bf16.mxu0 0
    %471 = vmatpush1.bf16.xpose.msra.mxu0 0
    %472 = vmatprep.subr.bf16.mxu0 0
    %473 = vmatpush1.bf16.xpose.msra.mxu0 0
    %474 = vmatprep.subr.bf16.mxu0 0
    %475 = vmatpush1.bf16.xpose.msra.mxu0 0
    %476 = vmatprep.subr.bf16.mxu0 0
    %477 = vmatpush1.bf16.xpose.msra.mxu0 0
    %478 = vmatprep.subr.bf16.mxu0 0
    %479 = vmatpush1.bf16.xpose.msra.mxu0 0
    %480 = vmatprep.subr.bf16.mxu0 0
    %481 = vmatpush1.bf16.xpose.msra.mxu0 0
    %482 = vmatprep.subr.bf16.mxu0 0
    %483 = vmatpush1.bf16.xpose.msra.mxu0 0
    %484 = vmatprep.subr.bf16.mxu0 0
    %485 = vmatpush1.bf16.xpose.msra.mxu0 0
    %486 = vmatprep.subr.bf16.mxu0 0
    %487 = vmatpush1.bf16.xpose.msra.mxu0 0
    %488 = vmatprep.subr.bf16.mxu0 0
    %489 = vmatpush1.bf16.xpose.msra.mxu0 0
    %490 = vmatprep.subr.bf16.mxu0 0
    %491 = vmatpush1.bf16.xpose.msra.mxu0 0
    %492 = vmatprep.subr.bf16.mxu0 0
    %493 = vmatpush1.bf16.xpose.msra.mxu0 0
    %494 = vmatprep.subr.bf16.mxu0 0
    %495 = vmatpush1.bf16.xpose.msra.mxu0 0
    %496 = vmatprep.subr.bf16.mxu0 0
    %497 = vmatpush1.bf16.xpose.msra.mxu0 0
    %498 = vmatprep.subr.bf16.mxu0 0
    %499 = vmatpush1.bf16.xpose.msra.mxu0 0
    %500 = vmatprep.mubr.bf16.mxu0 0
    %501 = vmatmul.mubr.bf16.gmra.mrb[0].mxu0 %v463
    %v502 = vpop.f32.mrb[0].mxu0
    %v503 = vadd.f32 0.0, %v502
    %v504 = vpop.f32.mrb[0].mxu0
    %v505 = vpop.f32.mrb[0].mxu0
    %v506 = vpop.f32.mrb[0].mxu0
    %507 = vdwg.mxu0
    %509 = vrot.lane.b32.xlu0 %v203, 96
    %v510 = vpop.permute.xlu0 %509
    %v512 = vsel %vm216, %v203, 0
    %v515 = vsel %vm216, %v510, 0
    %517 = vmatprep.subr.bf16.mxu0 0
    %518 = vmatpush1.bf16.xpose.msra.mxu0 %v515
    %519 = vmatprep.subr.bf16.mxu0 0
    %520 = vmatpush1.bf16.xpose.msra.mxu0 0
    %521 = vmatprep.subr.bf16.mxu0 0
    %522 = vmatpush1.bf16.xpose.msra.mxu0 0
    %523 = vmatprep.subr.bf16.mxu0 0
    %524 = vmatpush1.bf16.xpose.msra.mxu0 0
    %525 = vmatprep.subr.bf16.mxu0 0
    %526 = vmatpush1.bf16.xpose.msra.mxu0 0
    %527 = vmatprep.subr.bf16.mxu0 0
    %528 = vmatpush1.bf16.xpose.msra.mxu0 0
    %529 = vmatprep.subr.bf16.mxu0 0
    %530 = vmatpush1.bf16.xpose.msra.mxu0 0
    %531 = vmatprep.subr.bf16.mxu0 0
    %532 = vmatpush1.bf16.xpose.msra.mxu0 0
    %533 = vmatprep.subr.bf16.mxu0 0
    %534 = vmatpush1.bf16.xpose.msra.mxu0 0
    %535 = vmatprep.subr.bf16.mxu0 0
    %536 = vmatpush1.bf16.xpose.msra.mxu0 0
    %537 = vmatprep.subr.bf16.mxu0 0
    %538 = vmatpush1.bf16.xpose.msra.mxu0 0
    %539 = vmatprep.subr.bf16.mxu0 0
    %540 = vmatpush1.bf16.xpose.msra.mxu0 0
    %541 = vmatprep.subr.bf16.mxu0 0
    %542 = vmatpush1.bf16.xpose.msra.mxu0 0
    %543 = vmatprep.subr.bf16.mxu0 0
    %544 = vmatpush1.bf16.xpose.msra.mxu0 0
    %545 = vmatprep.subr.bf16.mxu0 0
    %546 = vmatpush1.bf16.xpose.msra.mxu0 0
    %547 = vmatprep.subr.bf16.mxu0 0
    %548 = vmatpush1.bf16.xpose.msra.mxu0 0
    %549 = vmatprep.mubr.bf16.mxu0 0
    %550 = vmatmul.mubr.bf16.gmra.mrb[0].mxu0 %v512
    %v551 = vpop.f32.mrb[0].mxu0
    %v552 = vadd.f32 0.0, %v551
    %v553 = vpop.f32.mrb[0].mxu0
    %v554 = vpop.f32.mrb[0].mxu0
    %v555 = vpop.f32.mrb[0].mxu0
    %556 = vdwg.mxu0
    %558 = vrot.lane.b32.xlu0 %v204, 96
    %v559 = vpop.permute.xlu0 %558
    %v561 = vsel %vm216, %v204, 0
    %v564 = vsel %vm216, %v559, 0
    %566 = vmatprep.subr.bf16.mxu0 0
    %567 = vmatpush1.bf16.xpose.msra.mxu0 %v564
    %568 = vmatprep.subr.bf16.mxu0 0
    %569 = vmatpush1.bf16.xpose.msra.mxu0 0
    %570 = vmatprep.subr.bf16.mxu0 0
    %571 = vmatpush1.bf16.xpose.msra.mxu0 0
    %572 = vmatprep.subr.bf16.mxu0 0
    %573 = vmatpush1.bf16.xpose.msra.mxu0 0
    %574 = vmatprep.subr.bf16.mxu0 0
    %575 = vmatpush1.bf16.xpose.msra.mxu0 0
    %576 = vmatprep.subr.bf16.mxu0 0
    %577 = vmatpush1.bf16.xpose.msra.mxu0 0
    %578 = vmatprep.subr.bf16.mxu0 0
    %579 = vmatpush1.bf16.xpose.msra.mxu0 0
    %580 = vmatprep.subr.bf16.mxu0 0
    %581 = vmatpush1.bf16.xpose.msra.mxu0 0
    %582 = vmatprep.subr.bf16.mxu0 0
    %583 = vmatpush1.bf16.xpose.msra.mxu0 0
    %584 = vmatprep.subr.bf16.mxu0 0
    %585 = vmatpush1.bf16.xpose.msra.mxu0 0
    %586 = vmatprep.subr.bf16.mxu0 0
    %587 = vmatpush1.bf16.xpose.msra.mxu0 0
    %588 = vmatprep.subr.bf16.mxu0 0
    %589 = vmatpush1.bf16.xpose.msra.mxu0 0
    %590 = vmatprep.subr.bf16.mxu0 0
    %591 = vmatpush1.bf16.xpose.msra.mxu0 0
    %592 = vmatprep.subr.bf16.mxu0 0
    %593 = vmatpush1.bf16.xpose.msra.mxu0 0
    %594 = vmatprep.subr.bf16.mxu0 0
    %595 = vmatpush1.bf16.xpose.msra.mxu0 0
    %596 = vmatprep.subr.bf16.mxu0 0
    %597 = vmatpush1.bf16.xpose.msra.mxu0 0
    %598 = vmatprep.mubr.bf16.mxu0 0
    %599 = vmatmul.mubr.bf16.gmra.mrb[0].mxu0 %v561
    %v600 = vpop.f32.mrb[0].mxu0
    %v601 = vadd.f32 0.0, %v600
    %v602 = vpop.f32.mrb[0].mxu0
    %v603 = vpop.f32.mrb[0].mxu0
    %v604 = vpop.f32.mrb[0].mxu0
    %605 = vdwg.mxu0
    %607 = vrot.lane.b32.xlu0 %v205, 96
    %v608 = vpop.permute.xlu0 %607
    %v610 = vsel %vm216, %v205, 0
    %v613 = vsel %vm216, %v608, 0
    %615 = vmatprep.subr.bf16.mxu0 0
    %616 = vmatpush1.bf16.xpose.msra.mxu0 %v613
    %617 = vmatprep.subr.bf16.mxu0 0
    %618 = vmatpush1.bf16.xpose.msra.mxu0 0
    %619 = vmatprep.subr.bf16.mxu0 0
    %620 = vmatpush1.bf16.xpose.msra.mxu0 0
    %621 = vmatprep.subr.bf16.mxu0 0
    %622 = vmatpush1.bf16.xpose.msra.mxu0 0
    %623 = vmatprep.subr.bf16.mxu0 0
    %624 = vmatpush1.bf16.xpose.msra.mxu0 0
    %625 = vmatprep.subr.bf16.mxu0 0
    %626 = vmatpush1.bf16.xpose.msra.mxu0 0
    %627 = vmatprep.subr.bf16.mxu0 0
    %628 = vmatpush1.bf16.xpose.msra.mxu0 0
    %629 = vmatprep.subr.bf16.mxu0 0
    %630 = vmatpush1.bf16.xpose.msra.mxu0 0
    %631 = vmatprep.subr.bf16.mxu0 0
    %632 = vmatpush1.bf16.xpose.msra.mxu0 0
    %633 = vmatprep.subr.bf16.mxu0 0
    %634 = vmatpush1.bf16.xpose.msra.mxu0 0
    %635 = vmatprep.subr.bf16.mxu0 0
    %636 = vmatpush1.bf16.xpose.msra.mxu0 0
    %637 = vmatprep.subr.bf16.mxu0 0
    %638 = vmatpush1.bf16.xpose.msra.mxu0 0
    %639 = vmatprep.subr.bf16.mxu0 0
    %640 = vmatpush1.bf16.xpose.msra.mxu0 0
    %641 = vmatprep.subr.bf16.mxu0 0
    %642 = vmatpush1.bf16.xpose.msra.mxu0 0
    %643 = vmatprep.subr.bf16.mxu0 0
    %644 = vmatpush1.bf16.xpose.msra.mxu0 0
    %645 = vmatprep.subr.bf16.mxu0 0
    %646 = vmatpush1.bf16.xpose.msra.mxu0 0
    %647 = vmatprep.mubr.bf16.mxu0 0
    %648 = vmatmul.mubr.bf16.gmra.mrb[0].mxu0 %v610
    %v649 = vpop.f32.mrb[0].mxu0
    %v650 = vadd.f32 0.0, %v649
    %v651 = vpop.f32.mrb[0].mxu0
    %v652 = vpop.f32.mrb[0].mxu0
    %v653 = vpop.f32.mrb[0].mxu0
    %654 = vdwg.mxu0
    %656 = vrot.lane.b32.xlu0 %v206, 96
    %v657 = vpop.permute.xlu0 %656
    %v659 = vsel %vm216, %v206, 0
    %v662 = vsel %vm216, %v657, 0
    %664 = vmatprep.subr.bf16.mxu0 0
    %665 = vmatpush1.bf16.xpose.msra.mxu0 %v662
    %666 = vmatprep.subr.bf16.mxu0 0
    %667 = vmatpush1.bf16.xpose.msra.mxu0 0
    %668 = vmatprep.subr.bf16.mxu0 0
    %669 = vmatpush1.bf16.xpose.msra.mxu0 0
    %670 = vmatprep.subr.bf16.mxu0 0
    %671 = vmatpush1.bf16.xpose.msra.mxu0 0
    %672 = vmatprep.subr.bf16.mxu0 0
    %673 = vmatpush1.bf16.xpose.msra.mxu0 0
    %674 = vmatprep.subr.bf16.mxu0 0
    %675 = vmatpush1.bf16.xpose.msra.mxu0 0
    %676 = vmatprep.subr.bf16.mxu0 0
    %677 = vmatpush1.bf16.xpose.msra.mxu0 0
    %678 = vmatprep.subr.bf16.mxu0 0
    %679 = vmatpush1.bf16.xpose.msra.mxu0 0
    %680 = vmatprep.subr.bf16.mxu0 0
    %681 = vmatpush1.bf16.xpose.msra.mxu0 0
    %682 = vmatprep.subr.bf16.mxu0 0
    %683 = vmatpush1.bf16.xpose.msra.mxu0 0
    %684 = vmatprep.subr.bf16.mxu0 0
    %685 = vmatpush1.bf16.xpose.msra.mxu0 0
    %686 = vmatprep.subr.bf16.mxu0 0
    %687 = vmatpush1.bf16.xpose.msra.mxu0 0
    %688 = vmatprep.subr.bf16.mxu0 0
    %689 = vmatpush1.bf16.xpose.msra.mxu0 0
    %690 = vmatprep.subr.bf16.mxu0 0
    %691 = vmatpush1.bf16.xpose.msra.mxu0 0
    %692 = vmatprep.subr.bf16.mxu0 0
    %693 = vmatpush1.bf16.xpose.msra.mxu0 0
    %694 = vmatprep.subr.bf16.mxu0 0
    %695 = vmatpush1.bf16.xpose.msra.mxu0 0
    %696 = vmatprep.mubr.bf16.mxu0 0
    %697 = vmatmul.mubr.bf16.gmra.mrb[0].mxu0 %v659
    %v698 = vpop.f32.mrb[0].mxu0
    %v699 = vadd.f32 0.0, %v698
    %v700 = vpop.f32.mrb[0].mxu0
    %v701 = vpop.f32.mrb[0].mxu0
    %v702 = vpop.f32.mrb[0].mxu0
    %703 = vdwg.mxu0
    %705 = vrot.lane.b32.xlu0 %v207, 96
    %v706 = vpop.permute.xlu0 %705
    %v708 = vsel %vm216, %v207, 0
    %v711 = vsel %vm216, %v706, 0
    %713 = vmatprep.subr.bf16.mxu0 0
    %714 = vmatpush1.bf16.xpose.msra.mxu0 %v711
    %715 = vmatprep.subr.bf16.mxu0 0
    %716 = vmatpush1.bf16.xpose.msra.mxu0 0
    %717 = vmatprep.subr.bf16.mxu0 0
    %718 = vmatpush1.bf16.xpose.msra.mxu0 0
    %719 = vmatprep.subr.bf16.mxu0 0
    %720 = vmatpush1.bf16.xpose.msra.mxu0 0
    %721 = vmatprep.subr.bf16.mxu0 0
    %722 = vmatpush1.bf16.xpose.msra.mxu0 0
    %723 = vmatprep.subr.bf16.mxu0 0
    %724 = vmatpush1.bf16.xpose.msra.mxu0 0
    %725 = vmatprep.subr.bf16.mxu0 0
    %726 = vmatpush1.bf16.xpose.msra.mxu0 0
    %727 = vmatprep.subr.bf16.mxu0 0
    %728 = vmatpush1.bf16.xpose.msra.mxu0 0
    %729 = vmatprep.subr.bf16.mxu0 0
    %730 = vmatpush1.bf16.xpose.msra.mxu0 0
    %731 = vmatprep.subr.bf16.mxu0 0
    %732 = vmatpush1.bf16.xpose.msra.mxu0 0
    %733 = vmatprep.subr.bf16.mxu0 0
    %734 = vmatpush1.bf16.xpose.msra.mxu0 0
    %735 = vmatprep.subr.bf16.mxu0 0
    %736 = vmatpush1.bf16.xpose.msra.mxu0 0
    %737 = vmatprep.subr.bf16.mxu0 0
    %738 = vmatpush1.bf16.xpose.msra.mxu0 0
    %739 = vmatprep.subr.bf16.mxu0 0
    %740 = vmatpush1.bf16.xpose.msra.mxu0 0
    %741 = vmatprep.subr.bf16.mxu0 0
    %742 = vmatpush1.bf16.xpose.msra.mxu0 0
    %743 = vmatprep.subr.bf16.mxu0 0
    %744 = vmatpush1.bf16.xpose.msra.mxu0 0
    %745 = vmatprep.mubr.bf16.mxu0 0
    %746 = vmatmul.mubr.bf16.gmra.mrb[0].mxu0 %v708
    %v747 = vpop.f32.mrb[0].mxu0
    %v748 = vadd.f32 0.0, %v747
    %v749 = vpop.f32.mrb[0].mxu0
    %v750 = vpop.f32.mrb[0].mxu0
    %v751 = vpop.f32.mrb[0].mxu0
    %752 = vdwg.mxu0
    %754 = vrot.lane.b32.xlu0 %v208, 96
    %v755 = vpop.permute.xlu0 %754
    %v757 = vsel %vm216, %v208, 0
    %v760 = vsel %vm216, %v755, 0
    %762 = vmatprep.subr.bf16.mxu0 0
    %763 = vmatpush1.bf16.xpose.msra.mxu0 %v760
    %764 = vmatprep.subr.bf16.mxu0 0
    %765 = vmatpush1.bf16.xpose.msra.mxu0 0
    %766 = vmatprep.subr.bf16.mxu0 0
    %767 = vmatpush1.bf16.xpose.msra.mxu0 0
    %768 = vmatprep.subr.bf16.mxu0 0
    %769 = vmatpush1.bf16.xpose.msra.mxu0 0
    %770 = vmatprep.subr.bf16.mxu0 0
    %771 = vmatpush1.bf16.xpose.msra.mxu0 0
    %772 = vmatprep.subr.bf16.mxu0 0
    %773 = vmatpush1.bf16.xpose.msra.mxu0 0
    %774 = vmatprep.subr.bf16.mxu0 0
    %775 = vmatpush1.bf16.xpose.msra.mxu0 0
    %776 = vmatprep.subr.bf16.mxu0 0
    %777 = vmatpush1.bf16.xpose.msra.mxu0 0
    %778 = vmatprep.subr.bf16.mxu0 0
    %779 = vmatpush1.bf16.xpose.msra.mxu0 0
    %780 = vmatprep.subr.bf16.mxu0 0
    %781 = vmatpush1.bf16.xpose.msra.mxu0 0
    %782 = vmatprep.subr.bf16.mxu0 0
    %783 = vmatpush1.bf16.xpose.msra.mxu0 0
    %784 = vmatprep.subr.bf16.mxu0 0
    %785 = vmatpush1.bf16.xpose.msra.mxu0 0
    %786 = vmatprep.subr.bf16.mxu0 0
    %787 = vmatpush1.bf16.xpose.msra.mxu0 0
    %788 = vmatprep.subr.bf16.mxu0 0
    %789 = vmatpush1.bf16.xpose.msra.mxu0 0
    %790 = vmatprep.subr.bf16.mxu0 0
    %791 = vmatpush1.bf16.xpose.msra.mxu0 0
    %792 = vmatprep.subr.bf16.mxu0 0
    %793 = vmatpush1.bf16.xpose.msra.mxu0 0
    %794 = vmatprep.mubr.bf16.mxu0 0
    %795 = vmatmul.mubr.bf16.gmra.mrb[0].mxu0 %v757
    %v796 = vpop.f32.mrb[0].mxu0
    %v797 = vadd.f32 0.0, %v796
    %v798 = vpop.f32.mrb[0].mxu0
    %v799 = vpop.f32.mrb[0].mxu0
    %v800 = vpop.f32.mrb[0].mxu0
    %801 = vdwg.mxu0
    %803 = vrot.lane.b32.xlu0 %v209, 96
    %v804 = vpop.permute.xlu0 %803
    %v806 = vsel %vm216, %v209, 0
    %v809 = vsel %vm216, %v804, 0
    %811 = vmatprep.subr.bf16.mxu0 0
    %812 = vmatpush1.bf16.xpose.msra.mxu0 %v809
    %813 = vmatprep.subr.bf16.mxu0 0
    %814 = vmatpush1.bf16.xpose.msra.mxu0 0
    %815 = vmatprep.subr.bf16.mxu0 0
    %816 = vmatpush1.bf16.xpose.msra.mxu0 0
    %817 = vmatprep.subr.bf16.mxu0 0
    %818 = vmatpush1.bf16.xpose.msra.mxu0 0
    %819 = vmatprep.subr.bf16.mxu0 0
    %820 = vmatpush1.bf16.xpose.msra.mxu0 0
    %821 = vmatprep.subr.bf16.mxu0 0
    %822 = vmatpush1.bf16.xpose.msra.mxu0 0
    %823 = vmatprep.subr.bf16.mxu0 0
    %824 = vmatpush1.bf16.xpose.msra.mxu0 0
    %825 = vmatprep.subr.bf16.mxu0 0
    %826 = vmatpush1.bf16.xpose.msra.mxu0 0
    %827 = vmatprep.subr.bf16.mxu0 0
    %828 = vmatpush1.bf16.xpose.msra.mxu0 0
    %829 = vmatprep.subr.bf16.mxu0 0
    %830 = vmatpush1.bf16.xpose.msra.mxu0 0
    %831 = vmatprep.subr.bf16.mxu0 0
    %832 = vmatpush1.bf16.xpose.msra.mxu0 0
    %833 = vmatprep.subr.bf16.mxu0 0
    %834 = vmatpush1.bf16.xpose.msra.mxu0 0
    %835 = vmatprep.subr.bf16.mxu0 0
    %836 = vmatpush1.bf16.xpose.msra.mxu0 0
    %837 = vmatprep.subr.bf16.mxu0 0
    %838 = vmatpush1.bf16.xpose.msra.mxu0 0
    %839 = vmatprep.subr.bf16.mxu0 0
    %840 = vmatpush1.bf16.xpose.msra.mxu0 0
    %841 = vmatprep.subr.bf16.mxu0 0
    %842 = vmatpush1.bf16.xpose.msra.mxu0 0
    %843 = vmatprep.mubr.bf16.mxu0 0
    %844 = vmatmul.mubr.bf16.gmra.mrb[0].mxu0 %v806
    %v845 = vpop.f32.mrb[0].mxu0
    %v846 = vadd.f32 0.0, %v845
    %v847 = vpop.f32.mrb[0].mxu0
    %v848 = vpop.f32.mrb[0].mxu0
    %v849 = vpop.f32.mrb[0].mxu0
    %850 = vdwg.mxu0
    %852 = vrot.lane.b32.xlu0 %v210, 96
    %v853 = vpop.permute.xlu0 %852
    %v855 = vsel %vm216, %v210, 0
    %v858 = vsel %vm216, %v853, 0
    %860 = vmatprep.subr.bf16.mxu0 0
    %861 = vmatpush1.bf16.xpose.msra.mxu0 %v858
    %862 = vmatprep.subr.bf16.mxu0 0
    %863 = vmatpush1.bf16.xpose.msra.mxu0 0
    %864 = vmatprep.subr.bf16.mxu0 0
    %865 = vmatpush1.bf16.xpose.msra.mxu0 0
    %866 = vmatprep.subr.bf16.mxu0 0
    %867 = vmatpush1.bf16.xpose.msra.mxu0 0
    %868 = vmatprep.subr.bf16.mxu0 0
    %869 = vmatpush1.bf16.xpose.msra.mxu0 0
    %870 = vmatprep.subr.bf16.mxu0 0
    %871 = vmatpush1.bf16.xpose.msra.mxu0 0
    %872 = vmatprep.subr.bf16.mxu0 0
    %873 = vmatpush1.bf16.xpose.msra.mxu0 0
    %874 = vmatprep.subr.bf16.mxu0 0
    %875 = vmatpush1.bf16.xpose.msra.mxu0 0
    %876 = vmatprep.subr.bf16.mxu0 0
    %877 = vmatpush1.bf16.xpose.msra.mxu0 0
    %878 = vmatprep.subr.bf16.mxu0 0
    %879 = vmatpush1.bf16.xpose.msra.mxu0 0
    %880 = vmatprep.subr.bf16.mxu0 0
    %881 = vmatpush1.bf16.xpose.msra.mxu0 0
    %882 = vmatprep.subr.bf16.mxu0 0
    %883 = vmatpush1.bf16.xpose.msra.mxu0 0
    %884 = vmatprep.subr.bf16.mxu0 0
    %885 = vmatpush1.bf16.xpose.msra.mxu0 0
    %886 = vmatprep.subr.bf16.mxu0 0
    %887 = vmatpush1.bf16.xpose.msra.mxu0 0
    %888 = vmatprep.subr.bf16.mxu0 0
    %889 = vmatpush1.bf16.xpose.msra.mxu0 0
    %890 = vmatprep.subr.bf16.mxu0 0
    %891 = vmatpush1.bf16.xpose.msra.mxu0 0
    %892 = vmatprep.mubr.bf16.mxu0 0
    %893 = vmatmul.mubr.bf16.gmra.mrb[0].mxu0 %v855
    %v894 = vpop.f32.mrb[0].mxu0
    %v895 = vadd.f32 0.0, %v894
    %v896 = vpop.f32.mrb[0].mxu0
    %v897 = vpop.f32.mrb[0].mxu0
    %v898 = vpop.f32.mrb[0].mxu0
    %899 = vdwg.mxu0
    %901 = vrot.lane.b32.xlu0 %v211, 96
    %v902 = vpop.permute.xlu0 %901
    %v904 = vsel %vm216, %v211, 0
    %v907 = vsel %vm216, %v902, 0
    %909 = vmatprep.subr.bf16.mxu0 0
    %910 = vmatpush1.bf16.xpose.msra.mxu0 %v907
    %911 = vmatprep.subr.bf16.mxu0 0
    %912 = vmatpush1.bf16.xpose.msra.mxu0 0
    %913 = vmatprep.subr.bf16.mxu0 0
    %914 = vmatpush1.bf16.xpose.msra.mxu0 0
    %915 = vmatprep.subr.bf16.mxu0 0
    %916 = vmatpush1.bf16.xpose.msra.mxu0 0
    %917 = vmatprep.subr.bf16.mxu0 0
    %918 = vmatpush1.bf16.xpose.msra.mxu0 0
    %919 = vmatprep.subr.bf16.mxu0 0
    %920 = vmatpush1.bf16.xpose.msra.mxu0 0
    %921 = vmatprep.subr.bf16.mxu0 0
    %922 = vmatpush1.bf16.xpose.msra.mxu0 0
    %923 = vmatprep.subr.bf16.mxu0 0
    %924 = vmatpush1.bf16.xpose.msra.mxu0 0
    %925 = vmatprep.subr.bf16.mxu0 0
    %926 = vmatpush1.bf16.xpose.msra.mxu0 0
    %927 = vmatprep.subr.bf16.mxu0 0
    %928 = vmatpush1.bf16.xpose.msra.mxu0 0
    %929 = vmatprep.subr.bf16.mxu0 0
    %930 = vmatpush1.bf16.xpose.msra.mxu0 0
    %931 = vmatprep.subr.bf16.mxu0 0
    %932 = vmatpush1.bf16.xpose.msra.mxu0 0
    %933 = vmatprep.subr.bf16.mxu0 0
    %934 = vmatpush1.bf16.xpose.msra.mxu0 0
    %935 = vmatprep.subr.bf16.mxu0 0
    %936 = vmatpush1.bf16.xpose.msra.mxu0 0
    %937 = vmatprep.subr.bf16.mxu0 0
    %938 = vmatpush1.bf16.xpose.msra.mxu0 0
    %939 = vmatprep.subr.bf16.mxu0 0
    %940 = vmatpush1.bf16.xpose.msra.mxu0 0
    %941 = vmatprep.mubr.bf16.mxu0 0
    %942 = vmatmul.mubr.bf16.gmra.mrb[0].mxu0 %v904
    %v943 = vpop.f32.mrb[0].mxu0
    %v944 = vadd.f32 0.0, %v943
    %v945 = vpop.f32.mrb[0].mxu0
    %v946 = vpop.f32.mrb[0].mxu0
    %v947 = vpop.f32.mrb[0].mxu0
    %948 = vdwg.mxu0
    %950 = vrot.lane.b32.xlu0 %v212, 96
    %v951 = vpop.permute.xlu0 %950
    %v953 = vsel %vm216, %v212, 0
    %v956 = vsel %vm216, %v951, 0
    %958 = vmatprep.subr.bf16.mxu0 0
    %959 = vmatpush1.bf16.xpose.msra.mxu0 %v956
    %960 = vmatprep.subr.bf16.mxu0 0
    %961 = vmatpush1.bf16.xpose.msra.mxu0 0
    %962 = vmatprep.subr.bf16.mxu0 0
    %963 = vmatpush1.bf16.xpose.msra.mxu0 0
    %964 = vmatprep.subr.bf16.mxu0 0
    %965 = vmatpush1.bf16.xpose.msra.mxu0 0
    %966 = vmatprep.subr.bf16.mxu0 0
    %967 = vmatpush1.bf16.xpose.msra.mxu0 0
    %968 = vmatprep.subr.bf16.mxu0 0
    %969 = vmatpush1.bf16.xpose.msra.mxu0 0
    %970 = vmatprep.subr.bf16.mxu0 0
    %971 = vmatpush1.bf16.xpose.msra.mxu0 0
    %972 = vmatprep.subr.bf16.mxu0 0
    %973 = vmatpush1.bf16.xpose.msra.mxu0 0
    %974 = vmatprep.subr.bf16.mxu0 0
    %975 = vmatpush1.bf16.xpose.msra.mxu0 0
    %976 = vmatprep.subr.bf16.mxu0 0
    %977 = vmatpush1.bf16.xpose.msra.mxu0 0
    %978 = vmatprep.subr.bf16.mxu0 0
    %979 = vmatpush1.bf16.xpose.msra.mxu0 0
    %980 = vmatprep.subr.bf16.mxu0 0
    %981 = vmatpush1.bf16.xpose.msra.mxu0 0
    %982 = vmatprep.subr.bf16.mxu0 0
    %983 = vmatpush1.bf16.xpose.msra.mxu0 0
    %984 = vmatprep.subr.bf16.mxu0 0
    %985 = vmatpush1.bf16.xpose.msra.mxu0 0
    %986 = vmatprep.subr.bf16.mxu0 0
    %987 = vmatpush1.bf16.xpose.msra.mxu0 0
    %988 = vmatprep.subr.bf16.mxu0 0
    %989 = vmatpush1.bf16.xpose.msra.mxu0 0
    %990 = vmatprep.mubr.bf16.mxu0 0
    %991 = vmatmul.mubr.bf16.gmra.mrb[0].mxu0 %v953
    %v992 = vpop.f32.mrb[0].mxu0
    %v993 = vadd.f32 0.0, %v992
    %v994 = vpop.f32.mrb[0].mxu0
    %v995 = vpop.f32.mrb[0].mxu0
    %v996 = vpop.f32.mrb[0].mxu0
    %997 = vdwg.mxu0
    %v998 = vsel %vm216, %v258, -inf
    %999 = vmax.xlane.f32.xlu0 %v998
    %v1000 = vpop.xlane.xlu0 %999
    %v1001 = vsel %vm216, %v307, -inf
    %1002 = vmax.xlane.f32.xlu0 %v1001
    %v1003 = vpop.xlane.xlu0 %1002
    %v1004 = vsel %vm216, %v356, -inf
    %1005 = vmax.xlane.f32.xlu0 %v1004
    %v1006 = vpop.xlane.xlu0 %1005
    %v1007 = vsel %vm216, %v405, -inf
    %1008 = vmax.xlane.f32.xlu0 %v1007
    %v1009 = vpop.xlane.xlu0 %1008
    %v1010 = vsel %vm216, %v454, -inf
    %1011 = vmax.xlane.f32.xlu0 %v1010
    %v1012 = vpop.xlane.xlu0 %1011
    %v1013 = vsel %vm216, %v503, -inf
    %1014 = vmax.xlane.f32.xlu0 %v1013
    %v1015 = vpop.xlane.xlu0 %1014
    %v1016 = vsel %vm216, %v552, -inf
    %1017 = vmax.xlane.f32.xlu0 %v1016
    %v1018 = vpop.xlane.xlu0 %1017
    %v1019 = vsel %vm216, %v601, -inf
    %1020 = vmax.xlane.f32.xlu0 %v1019
    %v1021 = vpop.xlane.xlu0 %1020
    %v1022 = vsel %vm216, %v650, -inf
    %1023 = vmax.xlane.f32.xlu0 %v1022
    %v1024 = vpop.xlane.xlu0 %1023
    %v1025 = vsel %vm216, %v699, -inf
    %1026 = vmax.xlane.f32.xlu0 %v1025
    %v1027 = vpop.xlane.xlu0 %1026
    %v1028 = vsel %vm216, %v748, -inf
    %1029 = vmax.xlane.f32.xlu0 %v1028
    %v1030 = vpop.xlane.xlu0 %1029
    %v1031 = vsel %vm216, %v797, -inf
    %1032 = vmax.xlane.f32.xlu0 %v1031
    %v1033 = vpop.xlane.xlu0 %1032
    %v1034 = vsel %vm216, %v846, -inf
    %1035 = vmax.xlane.f32.xlu0 %v1034
    %v1036 = vpop.xlane.xlu0 %1035
    %v1037 = vsel %vm216, %v895, -inf
    %1038 = vmax.xlane.f32.xlu0 %v1037
    %v1039 = vpop.xlane.xlu0 %1038
    %v1040 = vsel %vm216, %v944, -inf
    %1041 = vmax.xlane.f32.xlu0 %v1040
    %v1042 = vpop.xlane.xlu0 %1041
    %v1043 = vsel %vm216, %v993, -inf
    %1044 = vmax.xlane.f32.xlu0 %v1043
    %v1045 = vpop.xlane.xlu0 %1044
    %v1046 = vsub.f32 %v258, %v1000
    %v1047 = vsub.f32 %v307, %v1003
    %v1048 = vsub.f32 %v356, %v1006
    %v1049 = vsub.f32 %v405, %v1009
    %v1050 = vsub.f32 %v454, %v1012
    %v1051 = vsub.f32 %v503, %v1015
    %v1052 = vsub.f32 %v552, %v1018
    %v1053 = vsub.f32 %v601, %v1021
    %v1054 = vsub.f32 %v650, %v1024
    %v1055 = vsub.f32 %v699, %v1027
    %v1056 = vsub.f32 %v748, %v1030
    %v1057 = vsub.f32 %v797, %v1033
    %v1058 = vsub.f32 %v846, %v1036
    %v1059 = vsub.f32 %v895, %v1039
    %v1060 = vsub.f32 %v944, %v1042
    %v1061 = vsub.f32 %v993, %v1045
    %v1062 = vmul.f32 %v1046, 1.442695
    %v1063 = vpow.pop %v1062
    %v1064 = vmul.f32 %v1047, 1.442695
    %v1065 = vpow.pop %v1064
    %v1066 = vmul.f32 %v1048, 1.442695
    %v1067 = vpow.pop %v1066
    %v1068 = vmul.f32 %v1049, 1.442695
    %v1069 = vpow.pop %v1068
    %v1070 = vmul.f32 %v1050, 1.442695
    %v1071 = vpow.pop %v1070
    %v1072 = vmul.f32 %v1051, 1.442695
    %v1073 = vpow.pop %v1072
    %v1074 = vmul.f32 %v1052, 1.442695
    %v1075 = vpow.pop %v1074
    %v1076 = vmul.f32 %v1053, 1.442695
    %v1077 = vpow.pop %v1076
    %v1078 = vmul.f32 %v1054, 1.442695
    %v1079 = vpow.pop %v1078
    %v1080 = vmul.f32 %v1055, 1.442695
    %v1081 = vpow.pop %v1080
    %v1082 = vmul.f32 %v1056, 1.442695
    %v1083 = vpow.pop %v1082
    %v1084 = vmul.f32 %v1057, 1.442695
    %v1085 = vpow.pop %v1084
    %v1086 = vmul.f32 %v1058, 1.442695
    %v1087 = vpow.pop %v1086
    %v1088 = vmul.f32 %v1059, 1.442695
    %v1089 = vpow.pop %v1088
    %v1090 = vmul.f32 %v1060, 1.442695
    %v1091 = vpow.pop %v1090
    %v1092 = vmul.f32 %v1061, 1.442695
    %v1093 = vpow.pop %v1092
    %v1094 = vsel %vm216, %v1063, 0.0
    %1095 = vadd.xlane.f32.xlu0 %v1094
    %v1096 = vpop.xlane.xlu0 %1095
    %v1097 = vsel %vm216, %v1065, 0.0
    %1098 = vadd.xlane.f32.xlu0 %v1097
    %v1099 = vpop.xlane.xlu0 %1098
    %v1100 = vsel %vm216, %v1067, 0.0
    %1101 = vadd.xlane.f32.xlu0 %v1100
    %v1102 = vpop.xlane.xlu0 %1101
    %v1103 = vsel %vm216, %v1069, 0.0
    %1104 = vadd.xlane.f32.xlu0 %v1103
    %v1105 = vpop.xlane.xlu0 %1104
    %v1106 = vsel %vm216, %v1071, 0.0
    %1107 = vadd.xlane.f32.xlu0 %v1106
    %v1108 = vpop.xlane.xlu0 %1107
    %v1109 = vsel %vm216, %v1073, 0.0
    %1110 = vadd.xlane.f32.xlu0 %v1109
    %v1111 = vpop.xlane.xlu0 %1110
    %v1112 = vsel %vm216, %v1075, 0.0
    %1113 = vadd.xlane.f32.xlu0 %v1112
    %v1114 = vpop.xlane.xlu0 %1113
    %v1115 = vsel %vm216, %v1077, 0.0
    %1116 = vadd.xlane.f32.xlu0 %v1115
    %v1117 = vpop.xlane.xlu0 %1116
    %v1118 = vsel %vm216, %v1079, 0.0
    %1119 = vadd.xlane.f32.xlu0 %v1118
    %v1120 = vpop.xlane.xlu0 %1119
    %v1121 = vsel %vm216, %v1081, 0.0
    %1122 = vadd.xlane.f32.xlu0 %v1121
    %v1123 = vpop.xlane.xlu0 %1122
    %v1124 = vsel %vm216, %v1083, 0.0
    %1125 = vadd.xlane.f32.xlu0 %v1124
    %v1126 = vpop.xlane.xlu0 %1125
    %v1127 = vsel %vm216, %v1085, 0.0
    %1128 = vadd.xlane.f32.xlu0 %v1127
    %v1129 = vpop.xlane.xlu0 %1128
    %v1130 = vsel %vm216, %v1087, 0.0
    %1131 = vadd.xlane.f32.xlu0 %v1130
    %v1132 = vpop.xlane.xlu0 %1131
    %v1133 = vsel %vm216, %v1089, 0.0
    %1134 = vadd.xlane.f32.xlu0 %v1133
    %v1135 = vpop.xlane.xlu0 %1134
    %v1136 = vsel %vm216, %v1091, 0.0
    %1137 = vadd.xlane.f32.xlu0 %v1136
    %v1138 = vpop.xlane.xlu0 %1137
    %v1139 = vsel %vm216, %v1093, 0.0
    %1140 = vadd.xlane.f32.xlu0 %v1139
    %v1141 = vpop.xlane.xlu0 %1140
    %v1142 = vrcp.pop %v1096
    %v1143 = vrcp.pop %v1099
    %v1144 = vrcp.pop %v1102
    %v1145 = vrcp.pop %v1105
    %v1146 = vrcp.pop %v1108
    %v1147 = vrcp.pop %v1111
    %v1148 = vrcp.pop %v1114
    %v1149 = vrcp.pop %v1117
    %v1150 = vrcp.pop %v1120
    %v1151 = vrcp.pop %v1123
    %v1152 = vrcp.pop %v1126
    %v1153 = vrcp.pop %v1129
    %v1154 = vrcp.pop %v1132
    %v1155 = vrcp.pop %v1135
    %v1156 = vrcp.pop %v1138
    %v1157 = vrcp.pop %v1141
    %v1158 = vmul.f32 %v1096, %v1142
    %v1159 = vmul.f32 %v1099, %v1143
    %v1160 = vmul.f32 %v1102, %v1144
    %v1161 = vmul.f32 %v1105, %v1145
    %v1162 = vmul.f32 %v1108, %v1146
    %v1163 = vmul.f32 %v1111, %v1147
    %v1164 = vmul.f32 %v1114, %v1148
    %v1165 = vmul.f32 %v1117, %v1149
    %v1166 = vmul.f32 %v1120, %v1150
    %v1167 = vmul.f32 %v1123, %v1151
    %v1168 = vmul.f32 %v1126, %v1152
    %v1169 = vmul.f32 %v1129, %v1153
    %v1170 = vmul.f32 %v1132, %v1154
    %v1171 = vmul.f32 %v1135, %v1155
    %v1172 = vmul.f32 %v1138, %v1156
    %v1173 = vmul.f32 %v1141, %v1157
    %v1174 = vsub.f32 2.0, %v1158
    %v1175 = vsub.f32 2.0, %v1159
    %v1176 = vsub.f32 2.0, %v1160
    %v1177 = vsub.f32 2.0, %v1161
    %v1178 = vsub.f32 2.0, %v1162
    %v1179 = vsub.f32 2.0, %v1163
    %v1180 = vsub.f32 2.0, %v1164
    %v1181 = vsub.f32 2.0, %v1165
    %v1182 = vsub.f32 2.0, %v1166
    %v1183 = vsub.f32 2.0, %v1167
    %v1184 = vsub.f32 2.0, %v1168
    %v1185 = vsub.f32 2.0, %v1169
    %v1186 = vsub.f32 2.0, %v1170
    %v1187 = vsub.f32 2.0, %v1171
    %v1188 = vsub.f32 2.0, %v1172
    %v1189 = vsub.f32 2.0, %v1173
    %v1190 = vmul.f32 %v1142, %v1174
    %v1191 = vmul.f32 %v1143, %v1175
    %v1192 = vmul.f32 %v1144, %v1176
    %v1193 = vmul.f32 %v1145, %v1177
    %v1194 = vmul.f32 %v1146, %v1178
    %v1195 = vmul.f32 %v1147, %v1179
    %v1196 = vmul.f32 %v1148, %v1180
    %v1197 = vmul.f32 %v1149, %v1181
    %v1198 = vmul.f32 %v1150, %v1182
    %v1199 = vmul.f32 %v1151, %v1183
    %v1200 = vmul.f32 %v1152, %v1184
    %v1201 = vmul.f32 %v1153, %v1185
    %v1202 = vmul.f32 %v1154, %v1186
    %v1203 = vmul.f32 %v1155, %v1187
    %v1204 = vmul.f32 %v1156, %v1188
    %v1205 = vmul.f32 %v1157, %v1189
    %v1206 = vmul.f32 %v1063, %v1190
    %v1207 = vmul.f32 %v1065, %v1191
    %v1208 = vmul.f32 %v1067, %v1192
    %v1209 = vmul.f32 %v1069, %v1193
    %v1210 = vmul.f32 %v1071, %v1194
    %v1211 = vmul.f32 %v1073, %v1195
    %v1212 = vmul.f32 %v1075, %v1196
    %v1213 = vmul.f32 %v1077, %v1197
    %v1214 = vmul.f32 %v1079, %v1198
    %v1215 = vmul.f32 %v1081, %v1199
    %v1216 = vmul.f32 %v1083, %v1200
    %v1217 = vmul.f32 %v1085, %v1201
    %v1218 = vmul.f32 %v1087, %v1202
    %v1219 = vmul.f32 %v1089, %v1203
    %v1220 = vmul.f32 %v1091, %v1204
    %v1221 = vmul.f32 %v1093, %v1205
    %v1222 = vsel %vm216, %v1206, 0.0
    %v1223 = vsel %vm216, %v1210, 0.0
    %v1224 = vadd.f32 %v1222, %v1223
    %v1225 = vsel %vm216, %v1214, 0.0
    %v1226 = vadd.f32 %v1224, %v1225
    %v1227 = vsel %vm216, %v1218, 0.0
    %v1228 = vadd.f32 %v1226, %v1227
    %v1229 = vsel %vm216, %v1207, 0.0
    %v1230 = vsel %vm216, %v1211, 0.0
    %v1231 = vadd.f32 %v1229, %v1230
    %v1232 = vsel %vm216, %v1215, 0.0
    %v1233 = vadd.f32 %v1231, %v1232
    %v1234 = vsel %vm216, %v1219, 0.0
    %v1235 = vadd.f32 %v1233, %v1234
    %v1236 = vsel %vm216, %v1208, 0.0
    %v1237 = vsel %vm216, %v1212, 0.0
    %v1238 = vadd.f32 %v1236, %v1237
    %v1239 = vsel %vm216, %v1216, 0.0
    %v1240 = vadd.f32 %v1238, %v1239
    %v1241 = vsel %vm216, %v1220, 0.0
    %v1242 = vadd.f32 %v1240, %v1241
    %v1243 = vsel %vm216, %v1209, 0.0
    %v1244 = vsel %vm216, %v1213, 0.0
    %v1245 = vadd.f32 %v1243, %v1244
    %v1246 = vsel %vm216, %v1217, 0.0
    %v1247 = vadd.f32 %v1245, %v1246
    %v1248 = vsel %vm216, %v1221, 0.0
    %v1249 = vadd.f32 %v1247, %v1248
    %v1250 = vmul.f32 %v1228, 0.25
    %v1251 = vmul.f32 %v1235, 0.25
    %v1252 = vmul.f32 %v1242, 0.25
    %v1253 = vmul.f32 %v1249, 0.25
    %v1254 = vpack.c.bf16 %v1206, %v1206
    %v1255 = vpack.c.bf16 %v1207, %v1207
    %v1256 = vpack.c.bf16 %v1208, %v1208
    %v1257 = vpack.c.bf16 %v1209, %v1209
    %v1258 = vpack.c.bf16 %v1210, %v1210
    %v1259 = vpack.c.bf16 %v1211, %v1211
    %v1260 = vpack.c.bf16 %v1212, %v1212
    %v1261 = vpack.c.bf16 %v1213, %v1213
    %v1262 = vpack.c.bf16 %v1214, %v1214
    %v1263 = vpack.c.bf16 %v1215, %v1215
    %v1264 = vpack.c.bf16 %v1216, %v1216
    %v1265 = vpack.c.bf16 %v1217, %v1217
    %v1266 = vpack.c.bf16 %v1218, %v1218
    %v1267 = vpack.c.bf16 %v1219, %v1219
    %v1268 = vpack.c.bf16 %v1220, %v1220
    %v1269 = vpack.c.bf16 %v1221, %v1221
    %1270 = vrot.lane.b32.xlu0 %v197, 64
    %v1271 = vpop.permute.xlu0 %1270
    %v1273 = vsel %vm216, %v1254, 0
    %vm1275 = vcmask 1043456
    %v1277 = vsel %vm1275, %v1271, 0
    %1279 = vmatprep.subr.bf16.mxu0 0
    %1280 = vmatpush1.bf16.msra.mxu0 %v1277
    %1281 = vmatprep.subr.bf16.mxu0 0
    %1282 = vmatpush1.bf16.msra.mxu0 0
    %1283 = vmatprep.subr.bf16.mxu0 0
    %1284 = vmatpush1.bf16.msra.mxu0 0
    %1285 = vmatprep.subr.bf16.mxu0 0
    %1286 = vmatpush1.bf16.msra.mxu0 0
    %1287 = vmatprep.subr.bf16.mxu0 0
    %1288 = vmatpush1.bf16.msra.mxu0 0
    %1289 = vmatprep.subr.bf16.mxu0 0
    %1290 = vmatpush1.bf16.msra.mxu0 0
    %1291 = vmatprep.subr.bf16.mxu0 0
    %1292 = vmatpush1.bf16.msra.mxu0 0
    %1293 = vmatprep.subr.bf16.mxu0 0
    %1294 = vmatpush1.bf16.msra.mxu0 0
    %1295 = vmatprep.subr.bf16.mxu0 0
    %1296 = vmatpush1.bf16.msra.mxu0 0
    %1297 = vmatprep.subr.bf16.mxu0 0
    %1298 = vmatpush1.bf16.msra.mxu0 0
    %1299 = vmatprep.subr.bf16.mxu0 0
    %1300 = vmatpush1.bf16.msra.mxu0 0
    %1301 = vmatprep.subr.bf16.mxu0 0
    %1302 = vmatpush1.bf16.msra.mxu0 0
    %1303 = vmatprep.subr.bf16.mxu0 0
    %1304 = vmatpush1.bf16.msra.mxu0 0
    %1305 = vmatprep.subr.bf16.mxu0 0
    %1306 = vmatpush1.bf16.msra.mxu0 0
    %1307 = vmatprep.subr.bf16.mxu0 0
    %1308 = vmatpush1.bf16.msra.mxu0 0
    %1309 = vmatprep.subr.bf16.mxu0 0
    %1310 = vmatpush1.bf16.msra.mxu0 0
    %1311 = vmatprep.mubr.bf16.mxu0 0
    %1312 = vmatmul.mubr.bf16.gmra.mrb[0].mxu0 %v1273
    %v1313 = vpop.f32.mrb[0].mxu0
    %v1314 = vadd.f32 0.0, %v1313
    %v1315 = vpop.f32.mrb[0].mxu0
    %v1316 = vpop.f32.mrb[0].mxu0
    %v1317 = vpop.f32.mrb[0].mxu0
    %1318 = vdwg.mxu0
    %1319 = vrot.lane.b32.xlu0 %v198, 64
    %v1320 = vpop.permute.xlu0 %1319
    %v1322 = vsel %vm216, %v1255, 0
    %v1325 = vsel %vm1275, %v1320, 0
    %1327 = vmatprep.subr.bf16.mxu0 0
    %1328 = vmatpush1.bf16.msra.mxu0 %v1325
    %1329 = vmatprep.subr.bf16.mxu0 0
    %1330 = vmatpush1.bf16.msra.mxu0 0
    %1331 = vmatprep.subr.bf16.mxu0 0
    %1332 = vmatpush1.bf16.msra.mxu0 0
    %1333 = vmatprep.subr.bf16.mxu0 0
    %1334 = vmatpush1.bf16.msra.mxu0 0
    %1335 = vmatprep.subr.bf16.mxu0 0
    %1336 = vmatpush1.bf16.msra.mxu0 0
    %1337 = vmatprep.subr.bf16.mxu0 0
    %1338 = vmatpush1.bf16.msra.mxu0 0
    %1339 = vmatprep.subr.bf16.mxu0 0
    %1340 = vmatpush1.bf16.msra.mxu0 0
    %1341 = vmatprep.subr.bf16.mxu0 0
    %1342 = vmatpush1.bf16.msra.mxu0 0
    %1343 = vmatprep.subr.bf16.mxu0 0
    %1344 = vmatpush1.bf16.msra.mxu0 0
    %1345 = vmatprep.subr.bf16.mxu0 0
    %1346 = vmatpush1.bf16.msra.mxu0 0
    %1347 = vmatprep.subr.bf16.mxu0 0
    %1348 = vmatpush1.bf16.msra.mxu0 0
    %1349 = vmatprep.subr.bf16.mxu0 0
    %1350 = vmatpush1.bf16.msra.mxu0 0
    %1351 = vmatprep.subr.bf16.mxu0 0
    %1352 = vmatpush1.bf16.msra.mxu0 0
    %1353 = vmatprep.subr.bf16.mxu0 0
    %1354 = vmatpush1.bf16.msra.mxu0 0
    %1355 = vmatprep.subr.bf16.mxu0 0
    %1356 = vmatpush1.bf16.msra.mxu0 0
    %1357 = vmatprep.subr.bf16.mxu0 0
    %1358 = vmatpush1.bf16.msra.mxu0 0
    %1359 = vmatprep.mubr.bf16.mxu0 0
    %1360 = vmatmul.mubr.bf16.gmra.mrb[0].mxu0 %v1322
    %v1361 = vpop.f32.mrb[0].mxu0
    %v1362 = vadd.f32 0.0, %v1361
    %v1363 = vpop.f32.mrb[0].mxu0
    %v1364 = vpop.f32.mrb[0].mxu0
    %v1365 = vpop.f32.mrb[0].mxu0
    %1366 = vdwg.mxu0
    %1367 = vrot.lane.b32.xlu0 %v199, 64
    %v1368 = vpop.permute.xlu0 %1367
    %v1370 = vsel %vm216, %v1256, 0
    %v1373 = vsel %vm1275, %v1368, 0
    %1375 = vmatprep.subr.bf16.mxu0 0
    %1376 = vmatpush1.bf16.msra.mxu0 %v1373
    %1377 = vmatprep.subr.bf16.mxu0 0
    %1378 = vmatpush1.bf16.msra.mxu0 0
    %1379 = vmatprep.subr.bf16.mxu0 0
    %1380 = vmatpush1.bf16.msra.mxu0 0
    %1381 = vmatprep.subr.bf16.mxu0 0
    %1382 = vmatpush1.bf16.msra.mxu0 0
    %1383 = vmatprep.subr.bf16.mxu0 0
    %1384 = vmatpush1.bf16.msra.mxu0 0
    %1385 = vmatprep.subr.bf16.mxu0 0
    %1386 = vmatpush1.bf16.msra.mxu0 0
    %1387 = vmatprep.subr.bf16.mxu0 0
    %1388 = vmatpush1.bf16.msra.mxu0 0
    %1389 = vmatprep.subr.bf16.mxu0 0
    %1390 = vmatpush1.bf16.msra.mxu0 0
    %1391 = vmatprep.subr.bf16.mxu0 0
    %1392 = vmatpush1.bf16.msra.mxu0 0
    %1393 = vmatprep.subr.bf16.mxu0 0
    %1394 = vmatpush1.bf16.msra.mxu0 0
    %1395 = vmatprep.subr.bf16.mxu0 0
    %1396 = vmatpush1.bf16.msra.mxu0 0
    %1397 = vmatprep.subr.bf16.mxu0 0
    %1398 = vmatpush1.bf16.msra.mxu0 0
    %1399 = vmatprep.subr.bf16.mxu0 0
    %1400 = vmatpush1.bf16.msra.mxu0 0
    %1401 = vmatprep.subr.bf16.mxu0 0
    %1402 = vmatpush1.bf16.msra.mxu0 0
    %1403 = vmatprep.subr.bf16.mxu0 0
    %1404 = vmatpush1.bf16.msra.mxu0 0
    %1405 = vmatprep.subr.bf16.mxu0 0
    %1406 = vmatpush1.bf16.msra.mxu0 0
    %1407 = vmatprep.mubr.bf16.mxu0 0
    %1408 = vmatmul.mubr.bf16.gmra.mrb[0].mxu0 %v1370
    %v1409 = vpop.f32.mrb[0].mxu0
    %v1410 = vadd.f32 0.0, %v1409
    %v1411 = vpop.f32.mrb[0].mxu0
    %v1412 = vpop.f32.mrb[0].mxu0
    %v1413 = vpop.f32.mrb[0].mxu0
    %1414 = vdwg.mxu0
    %1415 = vrot.lane.b32.xlu0 %v200, 64
    %v1416 = vpop.permute.xlu0 %1415
    %v1418 = vsel %vm216, %v1257, 0
    %v1421 = vsel %vm1275, %v1416, 0
    %1423 = vmatprep.subr.bf16.mxu0 0
    %1424 = vmatpush1.bf16.msra.mxu0 %v1421
    %1425 = vmatprep.subr.bf16.mxu0 0
    %1426 = vmatpush1.bf16.msra.mxu0 0
    %1427 = vmatprep.subr.bf16.mxu0 0
    %1428 = vmatpush1.bf16.msra.mxu0 0
    %1429 = vmatprep.subr.bf16.mxu0 0
    %1430 = vmatpush1.bf16.msra.mxu0 0
    %1431 = vmatprep.subr.bf16.mxu0 0
    %1432 = vmatpush1.bf16.msra.mxu0 0
    %1433 = vmatprep.subr.bf16.mxu0 0
    %1434 = vmatpush1.bf16.msra.mxu0 0
    %1435 = vmatprep.subr.bf16.mxu0 0
    %1436 = vmatpush1.bf16.msra.mxu0 0
    %1437 = vmatprep.subr.bf16.mxu0 0
    %1438 = vmatpush1.bf16.msra.mxu0 0
    %1439 = vmatprep.subr.bf16.mxu0 0
    %1440 = vmatpush1.bf16.msra.mxu0 0
    %1441 = vmatprep.subr.bf16.mxu0 0
    %1442 = vmatpush1.bf16.msra.mxu0 0
    %1443 = vmatprep.subr.bf16.mxu0 0
    %1444 = vmatpush1.bf16.msra.mxu0 0
    %1445 = vmatprep.subr.bf16.mxu0 0
    %1446 = vmatpush1.bf16.msra.mxu0 0
    %1447 = vmatprep.subr.bf16.mxu0 0
    %1448 = vmatpush1.bf16.msra.mxu0 0
    %1449 = vmatprep.subr.bf16.mxu0 0
    %1450 = vmatpush1.bf16.msra.mxu0 0
    %1451 = vmatprep.subr.bf16.mxu0 0
    %1452 = vmatpush1.bf16.msra.mxu0 0
    %1453 = vmatprep.subr.bf16.mxu0 0
    %1454 = vmatpush1.bf16.msra.mxu0 0
    %1455 = vmatprep.mubr.bf16.mxu0 0
    %1456 = vmatmul.mubr.bf16.gmra.mrb[0].mxu0 %v1418
    %v1457 = vpop.f32.mrb[0].mxu0
    %v1458 = vadd.f32 0.0, %v1457
    %v1459 = vpop.f32.mrb[0].mxu0
    %v1460 = vpop.f32.mrb[0].mxu0
    %v1461 = vpop.f32.mrb[0].mxu0
    %1462 = vdwg.mxu0
    %1463 = vrot.lane.b32.xlu0 %v201, 64
    %v1464 = vpop.permute.xlu0 %1463
    %v1466 = vsel %vm216, %v1258, 0
    %v1469 = vsel %vm1275, %v1464, 0
    %1471 = vmatprep.subr.bf16.mxu0 0
    %1472 = vmatpush1.bf16.msra.mxu0 %v1469
    %1473 = vmatprep.subr.bf16.mxu0 0
    %1474 = vmatpush1.bf16.msra.mxu0 0
    %1475 = vmatprep.subr.bf16.mxu0 0
    %1476 = vmatpush1.bf16.msra.mxu0 0
    %1477 = vmatprep.subr.bf16.mxu0 0
    %1478 = vmatpush1.bf16.msra.mxu0 0
    %1479 = vmatprep.subr.bf16.mxu0 0
    %1480 = vmatpush1.bf16.msra.mxu0 0
    %1481 = vmatprep.subr.bf16.mxu0 0
    %1482 = vmatpush1.bf16.msra.mxu0 0
    %1483 = vmatprep.subr.bf16.mxu0 0
    %1484 = vmatpush1.bf16.msra.mxu0 0
    %1485 = vmatprep.subr.bf16.mxu0 0
    %1486 = vmatpush1.bf16.msra.mxu0 0
    %1487 = vmatprep.subr.bf16.mxu0 0
    %1488 = vmatpush1.bf16.msra.mxu0 0
    %1489 = vmatprep.subr.bf16.mxu0 0
    %1490 = vmatpush1.bf16.msra.mxu0 0
    %1491 = vmatprep.subr.bf16.mxu0 0
    %1492 = vmatpush1.bf16.msra.mxu0 0
    %1493 = vmatprep.subr.bf16.mxu0 0
    %1494 = vmatpush1.bf16.msra.mxu0 0
    %1495 = vmatprep.subr.bf16.mxu0 0
    %1496 = vmatpush1.bf16.msra.mxu0 0
    %1497 = vmatprep.subr.bf16.mxu0 0
    %1498 = vmatpush1.bf16.msra.mxu0 0
    %1499 = vmatprep.subr.bf16.mxu0 0
    %1500 = vmatpush1.bf16.msra.mxu0 0
    %1501 = vmatprep.subr.bf16.mxu0 0
    %1502 = vmatpush1.bf16.msra.mxu0 0
    %1503 = vmatprep.mubr.bf16.mxu0 0
    %1504 = vmatmul.mubr.bf16.gmra.mrb[0].mxu0 %v1466
    %v1505 = vpop.f32.mrb[0].mxu0
    %v1506 = vadd.f32 0.0, %v1505
    %v1507 = vpop.f32.mrb[0].mxu0
    %v1508 = vpop.f32.mrb[0].mxu0
    %v1509 = vpop.f32.mrb[0].mxu0
    %1510 = vdwg.mxu0
    %1511 = vrot.lane.b32.xlu0 %v202, 64
    %v1512 = vpop.permute.xlu0 %1511
    %v1514 = vsel %vm216, %v1259, 0
    %v1517 = vsel %vm1275, %v1512, 0
    %1519 = vmatprep.subr.bf16.mxu0 0
    %1520 = vmatpush1.bf16.msra.mxu0 %v1517
    %1521 = vmatprep.subr.bf16.mxu0 0
    %1522 = vmatpush1.bf16.msra.mxu0 0
    %1523 = vmatprep.subr.bf16.mxu0 0
    %1524 = vmatpush1.bf16.msra.mxu0 0
    %1525 = vmatprep.subr.bf16.mxu0 0
    %1526 = vmatpush1.bf16.msra.mxu0 0
    %1527 = vmatprep.subr.bf16.mxu0 0
    %1528 = vmatpush1.bf16.msra.mxu0 0
    %1529 = vmatprep.subr.bf16.mxu0 0
    %1530 = vmatpush1.bf16.msra.mxu0 0
    %1531 = vmatprep.subr.bf16.mxu0 0
    %1532 = vmatpush1.bf16.msra.mxu0 0
    %1533 = vmatprep.subr.bf16.mxu0 0
    %1534 = vmatpush1.bf16.msra.mxu0 0
    %1535 = vmatprep.subr.bf16.mxu0 0
    %1536 = vmatpush1.bf16.msra.mxu0 0
    %1537 = vmatprep.subr.bf16.mxu0 0
    %1538 = vmatpush1.bf16.msra.mxu0 0
    %1539 = vmatprep.subr.bf16.mxu0 0
    %1540 = vmatpush1.bf16.msra.mxu0 0
    %1541 = vmatprep.subr.bf16.mxu0 0
    %1542 = vmatpush1.bf16.msra.mxu0 0
    %1543 = vmatprep.subr.bf16.mxu0 0
    %1544 = vmatpush1.bf16.msra.mxu0 0
    %1545 = vmatprep.subr.bf16.mxu0 0
    %1546 = vmatpush1.bf16.msra.mxu0 0
    %1547 = vmatprep.subr.bf16.mxu0 0
    %1548 = vmatpush1.bf16.msra.mxu0 0
    %1549 = vmatprep.subr.bf16.mxu0 0
    %1550 = vmatpush1.bf16.msra.mxu0 0
    %1551 = vmatprep.mubr.bf16.mxu0 0
    %1552 = vmatmul.mubr.bf16.gmra.mrb[0].mxu0 %v1514
    %v1553 = vpop.f32.mrb[0].mxu0
    %v1554 = vadd.f32 0.0, %v1553
    %v1555 = vpop.f32.mrb[0].mxu0
    %v1556 = vpop.f32.mrb[0].mxu0
    %v1557 = vpop.f32.mrb[0].mxu0
    %1558 = vdwg.mxu0
    %1559 = vrot.lane.b32.xlu0 %v203, 64
    %v1560 = vpop.permute.xlu0 %1559
    %v1562 = vsel %vm216, %v1260, 0
    %v1565 = vsel %vm1275, %v1560, 0
    %1567 = vmatprep.subr.bf16.mxu0 0
    %1568 = vmatpush1.bf16.msra.mxu0 %v1565
    %1569 = vmatprep.subr.bf16.mxu0 0
    %1570 = vmatpush1.bf16.msra.mxu0 0
    %1571 = vmatprep.subr.bf16.mxu0 0
    %1572 = vmatpush1.bf16.msra.mxu0 0
    %1573 = vmatprep.subr.bf16.mxu0 0
    %1574 = vmatpush1.bf16.msra.mxu0 0
    %1575 = vmatprep.subr.bf16.mxu0 0
    %1576 = vmatpush1.bf16.msra.mxu0 0
    %1577 = vmatprep.subr.bf16.mxu0 0
    %1578 = vmatpush1.bf16.msra.mxu0 0
    %1579 = vmatprep.subr.bf16.mxu0 0
    %1580 = vmatpush1.bf16.msra.mxu0 0
    %1581 = vmatprep.subr.bf16.mxu0 0
    %1582 = vmatpush1.bf16.msra.mxu0 0
    %1583 = vmatprep.subr.bf16.mxu0 0
    %1584 = vmatpush1.bf16.msra.mxu0 0
    %1585 = vmatprep.subr.bf16.mxu0 0
    %1586 = vmatpush1.bf16.msra.mxu0 0
    %1587 = vmatprep.subr.bf16.mxu0 0
    %1588 = vmatpush1.bf16.msra.mxu0 0
    %1589 = vmatprep.subr.bf16.mxu0 0
    %1590 = vmatpush1.bf16.msra.mxu0 0
    %1591 = vmatprep.subr.bf16.mxu0 0
    %1592 = vmatpush1.bf16.msra.mxu0 0
    %1593 = vmatprep.subr.bf16.mxu0 0
    %1594 = vmatpush1.bf16.msra.mxu0 0
    %1595 = vmatprep.subr.bf16.mxu0 0
    %1596 = vmatpush1.bf16.msra.mxu0 0
    %1597 = vmatprep.subr.bf16.mxu0 0
    %1598 = vmatpush1.bf16.msra.mxu0 0
    %1599 = vmatprep.mubr.bf16.mxu0 0
    %1600 = vmatmul.mubr.bf16.gmra.mrb[0].mxu0 %v1562
    %v1601 = vpop.f32.mrb[0].mxu0
    %v1602 = vadd.f32 0.0, %v1601
    %v1603 = vpop.f32.mrb[0].mxu0
    %v1604 = vpop.f32.mrb[0].mxu0
    %v1605 = vpop.f32.mrb[0].mxu0
    %1606 = vdwg.mxu0
    %1607 = vrot.lane.b32.xlu0 %v204, 64
    %v1608 = vpop.permute.xlu0 %1607
    %v1610 = vsel %vm216, %v1261, 0
    %v1613 = vsel %vm1275, %v1608, 0
    %1615 = vmatprep.subr.bf16.mxu0 0
    %1616 = vmatpush1.bf16.msra.mxu0 %v1613
    %1617 = vmatprep.subr.bf16.mxu0 0
    %1618 = vmatpush1.bf16.msra.mxu0 0
    %1619 = vmatprep.subr.bf16.mxu0 0
    %1620 = vmatpush1.bf16.msra.mxu0 0
    %1621 = vmatprep.subr.bf16.mxu0 0
    %1622 = vmatpush1.bf16.msra.mxu0 0
    %1623 = vmatprep.subr.bf16.mxu0 0
    %1624 = vmatpush1.bf16.msra.mxu0 0
    %1625 = vmatprep.subr.bf16.mxu0 0
    %1626 = vmatpush1.bf16.msra.mxu0 0
    %1627 = vmatprep.subr.bf16.mxu0 0
    %1628 = vmatpush1.bf16.msra.mxu0 0
    %1629 = vmatprep.subr.bf16.mxu0 0
    %1630 = vmatpush1.bf16.msra.mxu0 0
    %1631 = vmatprep.subr.bf16.mxu0 0
    %1632 = vmatpush1.bf16.msra.mxu0 0
    %1633 = vmatprep.subr.bf16.mxu0 0
    %1634 = vmatpush1.bf16.msra.mxu0 0
    %1635 = vmatprep.subr.bf16.mxu0 0
    %1636 = vmatpush1.bf16.msra.mxu0 0
    %1637 = vmatprep.subr.bf16.mxu0 0
    %1638 = vmatpush1.bf16.msra.mxu0 0
    %1639 = vmatprep.subr.bf16.mxu0 0
    %1640 = vmatpush1.bf16.msra.mxu0 0
    %1641 = vmatprep.subr.bf16.mxu0 0
    %1642 = vmatpush1.bf16.msra.mxu0 0
    %1643 = vmatprep.subr.bf16.mxu0 0
    %1644 = vmatpush1.bf16.msra.mxu0 0
    %1645 = vmatprep.subr.bf16.mxu0 0
    %1646 = vmatpush1.bf16.msra.mxu0 0
    %1647 = vmatprep.mubr.bf16.mxu0 0
    %1648 = vmatmul.mubr.bf16.gmra.mrb[0].mxu0 %v1610
    %v1649 = vpop.f32.mrb[0].mxu0
    %v1650 = vadd.f32 0.0, %v1649
    %v1651 = vpop.f32.mrb[0].mxu0
    %v1652 = vpop.f32.mrb[0].mxu0
    %v1653 = vpop.f32.mrb[0].mxu0
    %1654 = vdwg.mxu0
    %1655 = vrot.lane.b32.xlu0 %v205, 64
    %v1656 = vpop.permute.xlu0 %1655
    %v1658 = vsel %vm216, %v1262, 0
    %v1661 = vsel %vm1275, %v1656, 0
    %1663 = vmatprep.subr.bf16.mxu0 0
    %1664 = vmatpush1.bf16.msra.mxu0 %v1661
    %1665 = vmatprep.subr.bf16.mxu0 0
    %1666 = vmatpush1.bf16.msra.mxu0 0
    %1667 = vmatprep.subr.bf16.mxu0 0
    %1668 = vmatpush1.bf16.msra.mxu0 0
    %1669 = vmatprep.subr.bf16.mxu0 0
    %1670 = vmatpush1.bf16.msra.mxu0 0
    %1671 = vmatprep.subr.bf16.mxu0 0
    %1672 = vmatpush1.bf16.msra.mxu0 0
    %1673 = vmatprep.subr.bf16.mxu0 0
    %1674 = vmatpush1.bf16.msra.mxu0 0
    %1675 = vmatprep.subr.bf16.mxu0 0
    %1676 = vmatpush1.bf16.msra.mxu0 0
    %1677 = vmatprep.subr.bf16.mxu0 0
    %1678 = vmatpush1.bf16.msra.mxu0 0
    %1679 = vmatprep.subr.bf16.mxu0 0
    %1680 = vmatpush1.bf16.msra.mxu0 0
    %1681 = vmatprep.subr.bf16.mxu0 0
    %1682 = vmatpush1.bf16.msra.mxu0 0
    %1683 = vmatprep.subr.bf16.mxu0 0
    %1684 = vmatpush1.bf16.msra.mxu0 0
    %1685 = vmatprep.subr.bf16.mxu0 0
    %1686 = vmatpush1.bf16.msra.mxu0 0
    %1687 = vmatprep.subr.bf16.mxu0 0
    %1688 = vmatpush1.bf16.msra.mxu0 0
    %1689 = vmatprep.subr.bf16.mxu0 0
    %1690 = vmatpush1.bf16.msra.mxu0 0
    %1691 = vmatprep.subr.bf16.mxu0 0
    %1692 = vmatpush1.bf16.msra.mxu0 0
    %1693 = vmatprep.subr.bf16.mxu0 0
    %1694 = vmatpush1.bf16.msra.mxu0 0
    %1695 = vmatprep.mubr.bf16.mxu0 0
    %1696 = vmatmul.mubr.bf16.gmra.mrb[0].mxu0 %v1658
    %v1697 = vpop.f32.mrb[0].mxu0
    %v1698 = vadd.f32 0.0, %v1697
    %v1699 = vpop.f32.mrb[0].mxu0
    %v1700 = vpop.f32.mrb[0].mxu0
    %v1701 = vpop.f32.mrb[0].mxu0
    %1702 = vdwg.mxu0
    %1703 = vrot.lane.b32.xlu0 %v206, 64
    %v1704 = vpop.permute.xlu0 %1703
    %v1706 = vsel %vm216, %v1263, 0
    %v1709 = vsel %vm1275, %v1704, 0
    %1711 = vmatprep.subr.bf16.mxu0 0
    %1712 = vmatpush1.bf16.msra.mxu0 %v1709
    %1713 = vmatprep.subr.bf16.mxu0 0
    %1714 = vmatpush1.bf16.msra.mxu0 0
    %1715 = vmatprep.subr.bf16.mxu0 0
    %1716 = vmatpush1.bf16.msra.mxu0 0
    %1717 = vmatprep.subr.bf16.mxu0 0
    %1718 = vmatpush1.bf16.msra.mxu0 0
    %1719 = vmatprep.subr.bf16.mxu0 0
    %1720 = vmatpush1.bf16.msra.mxu0 0
    %1721 = vmatprep.subr.bf16.mxu0 0
    %1722 = vmatpush1.bf16.msra.mxu0 0
    %1723 = vmatprep.subr.bf16.mxu0 0
    %1724 = vmatpush1.bf16.msra.mxu0 0
    %1725 = vmatprep.subr.bf16.mxu0 0
    %1726 = vmatpush1.bf16.msra.mxu0 0
    %1727 = vmatprep.subr.bf16.mxu0 0
    %1728 = vmatpush1.bf16.msra.mxu0 0
    %1729 = vmatprep.subr.bf16.mxu0 0
    %1730 = vmatpush1.bf16.msra.mxu0 0
    %1731 = vmatprep.subr.bf16.mxu0 0
    %1732 = vmatpush1.bf16.msra.mxu0 0
    %1733 = vmatprep.subr.bf16.mxu0 0
    %1734 = vmatpush1.bf16.msra.mxu0 0
    %1735 = vmatprep.subr.bf16.mxu0 0
    %1736 = vmatpush1.bf16.msra.mxu0 0
    %1737 = vmatprep.subr.bf16.mxu0 0
    %1738 = vmatpush1.bf16.msra.mxu0 0
    %1739 = vmatprep.subr.bf16.mxu0 0
    %1740 = vmatpush1.bf16.msra.mxu0 0
    %1741 = vmatprep.subr.bf16.mxu0 0
    %1742 = vmatpush1.bf16.msra.mxu0 0
    %1743 = vmatprep.mubr.bf16.mxu0 0
    %1744 = vmatmul.mubr.bf16.gmra.mrb[0].mxu0 %v1706
    %v1745 = vpop.f32.mrb[0].mxu0
    %v1746 = vadd.f32 0.0, %v1745
    %v1747 = vpop.f32.mrb[0].mxu0
    %v1748 = vpop.f32.mrb[0].mxu0
    %v1749 = vpop.f32.mrb[0].mxu0
    %1750 = vdwg.mxu0
    %1751 = vrot.lane.b32.xlu0 %v207, 64
    %v1752 = vpop.permute.xlu0 %1751
    %v1754 = vsel %vm216, %v1264, 0
    %v1757 = vsel %vm1275, %v1752, 0
    %1759 = vmatprep.subr.bf16.mxu0 0
    %1760 = vmatpush1.bf16.msra.mxu0 %v1757
    %1761 = vmatprep.subr.bf16.mxu0 0
    %1762 = vmatpush1.bf16.msra.mxu0 0
    %1763 = vmatprep.subr.bf16.mxu0 0
    %1764 = vmatpush1.bf16.msra.mxu0 0
    %1765 = vmatprep.subr.bf16.mxu0 0
    %1766 = vmatpush1.bf16.msra.mxu0 0
    %1767 = vmatprep.subr.bf16.mxu0 0
    %1768 = vmatpush1.bf16.msra.mxu0 0
    %1769 = vmatprep.subr.bf16.mxu0 0
    %1770 = vmatpush1.bf16.msra.mxu0 0
    %1771 = vmatprep.subr.bf16.mxu0 0
    %1772 = vmatpush1.bf16.msra.mxu0 0
    %1773 = vmatprep.subr.bf16.mxu0 0
    %1774 = vmatpush1.bf16.msra.mxu0 0
    %1775 = vmatprep.subr.bf16.mxu0 0
    %1776 = vmatpush1.bf16.msra.mxu0 0
    %1777 = vmatprep.subr.bf16.mxu0 0
    %1778 = vmatpush1.bf16.msra.mxu0 0
    %1779 = vmatprep.subr.bf16.mxu0 0
    %1780 = vmatpush1.bf16.msra.mxu0 0
    %1781 = vmatprep.subr.bf16.mxu0 0
    %1782 = vmatpush1.bf16.msra.mxu0 0
    %1783 = vmatprep.subr.bf16.mxu0 0
    %1784 = vmatpush1.bf16.msra.mxu0 0
    %1785 = vmatprep.subr.bf16.mxu0 0
    %1786 = vmatpush1.bf16.msra.mxu0 0
    %1787 = vmatprep.subr.bf16.mxu0 0
    %1788 = vmatpush1.bf16.msra.mxu0 0
    %1789 = vmatprep.subr.bf16.mxu0 0
    %1790 = vmatpush1.bf16.msra.mxu0 0
    %1791 = vmatprep.mubr.bf16.mxu0 0
    %1792 = vmatmul.mubr.bf16.gmra.mrb[0].mxu0 %v1754
    %v1793 = vpop.f32.mrb[0].mxu0
    %v1794 = vadd.f32 0.0, %v1793
    %v1795 = vpop.f32.mrb[0].mxu0
    %v1796 = vpop.f32.mrb[0].mxu0
    %v1797 = vpop.f32.mrb[0].mxu0
    %1798 = vdwg.mxu0
    %1799 = vrot.lane.b32.xlu0 %v208, 64
    %v1800 = vpop.permute.xlu0 %1799
    %v1802 = vsel %vm216, %v1265, 0
    %v1805 = vsel %vm1275, %v1800, 0
    %1807 = vmatprep.subr.bf16.mxu0 0
    %1808 = vmatpush1.bf16.msra.mxu0 %v1805
    %1809 = vmatprep.subr.bf16.mxu0 0
    %1810 = vmatpush1.bf16.msra.mxu0 0
    %1811 = vmatprep.subr.bf16.mxu0 0
    %1812 = vmatpush1.bf16.msra.mxu0 0
    %1813 = vmatprep.subr.bf16.mxu0 0
    %1814 = vmatpush1.bf16.msra.mxu0 0
    %1815 = vmatprep.subr.bf16.mxu0 0
    %1816 = vmatpush1.bf16.msra.mxu0 0
    %1817 = vmatprep.subr.bf16.mxu0 0
    %1818 = vmatpush1.bf16.msra.mxu0 0
    %1819 = vmatprep.subr.bf16.mxu0 0
    %1820 = vmatpush1.bf16.msra.mxu0 0
    %1821 = vmatprep.subr.bf16.mxu0 0
    %1822 = vmatpush1.bf16.msra.mxu0 0
    %1823 = vmatprep.subr.bf16.mxu0 0
    %1824 = vmatpush1.bf16.msra.mxu0 0
    %1825 = vmatprep.subr.bf16.mxu0 0
    %1826 = vmatpush1.bf16.msra.mxu0 0
    %1827 = vmatprep.subr.bf16.mxu0 0
    %1828 = vmatpush1.bf16.msra.mxu0 0
    %1829 = vmatprep.subr.bf16.mxu0 0
    %1830 = vmatpush1.bf16.msra.mxu0 0
    %1831 = vmatprep.subr.bf16.mxu0 0
    %1832 = vmatpush1.bf16.msra.mxu0 0
    %1833 = vmatprep.subr.bf16.mxu0 0
    %1834 = vmatpush1.bf16.msra.mxu0 0
    %1835 = vmatprep.subr.bf16.mxu0 0
    %1836 = vmatpush1.bf16.msra.mxu0 0
    %1837 = vmatprep.subr.bf16.mxu0 0
    %1838 = vmatpush1.bf16.msra.mxu0 0
    %1839 = vmatprep.mubr.bf16.mxu0 0
    %1840 = vmatmul.mubr.bf16.gmra.mrb[0].mxu0 %v1802
    %v1841 = vpop.f32.mrb[0].mxu0
    %v1842 = vadd.f32 0.0, %v1841
    %v1843 = vpop.f32.mrb[0].mxu0
    %v1844 = vpop.f32.mrb[0].mxu0
    %v1845 = vpop.f32.mrb[0].mxu0
    %1846 = vdwg.mxu0
    %1847 = vrot.lane.b32.xlu0 %v209, 64
    %v1848 = vpop.permute.xlu0 %1847
    %v1850 = vsel %vm216, %v1266, 0
    %v1853 = vsel %vm1275, %v1848, 0
    %1855 = vmatprep.subr.bf16.mxu0 0
    %1856 = vmatpush1.bf16.msra.mxu0 %v1853
    %1857 = vmatprep.subr.bf16.mxu0 0
    %1858 = vmatpush1.bf16.msra.mxu0 0
    %1859 = vmatprep.subr.bf16.mxu0 0
    %1860 = vmatpush1.bf16.msra.mxu0 0
    %1861 = vmatprep.subr.bf16.mxu0 0
    %1862 = vmatpush1.bf16.msra.mxu0 0
    %1863 = vmatprep.subr.bf16.mxu0 0
    %1864 = vmatpush1.bf16.msra.mxu0 0
    %1865 = vmatprep.subr.bf16.mxu0 0
    %1866 = vmatpush1.bf16.msra.mxu0 0
    %1867 = vmatprep.subr.bf16.mxu0 0
    %1868 = vmatpush1.bf16.msra.mxu0 0
    %1869 = vmatprep.subr.bf16.mxu0 0
    %1870 = vmatpush1.bf16.msra.mxu0 0
    %1871 = vmatprep.subr.bf16.mxu0 0
    %1872 = vmatpush1.bf16.msra.mxu0 0
    %1873 = vmatprep.subr.bf16.mxu0 0
    %1874 = vmatpush1.bf16.msra.mxu0 0
    %1875 = vmatprep.subr.bf16.mxu0 0
    %1876 = vmatpush1.bf16.msra.mxu0 0
    %1877 = vmatprep.subr.bf16.mxu0 0
    %1878 = vmatpush1.bf16.msra.mxu0 0
    %1879 = vmatprep.subr.bf16.mxu0 0
    %1880 = vmatpush1.bf16.msra.mxu0 0
    %1881 = vmatprep.subr.bf16.mxu0 0
    %1882 = vmatpush1.bf16.msra.mxu0 0
    %1883 = vmatprep.subr.bf16.mxu0 0
    %1884 = vmatpush1.bf16.msra.mxu0 0
    %1885 = vmatprep.subr.bf16.mxu0 0
    %1886 = vmatpush1.bf16.msra.mxu0 0
    %1887 = vmatprep.mubr.bf16.mxu0 0
    %1888 = vmatmul.mubr.bf16.gmra.mrb[0].mxu0 %v1850
    %v1889 = vpop.f32.mrb[0].mxu0
    %v1890 = vadd.f32 0.0, %v1889
    %v1891 = vpop.f32.mrb[0].mxu0
    %v1892 = vpop.f32.mrb[0].mxu0
    %v1893 = vpop.f32.mrb[0].mxu0
    %1894 = vdwg.mxu0
    %1895 = vrot.lane.b32.xlu0 %v210, 64
    %v1896 = vpop.permute.xlu0 %1895
    %v1898 = vsel %vm216, %v1267, 0
    %v1901 = vsel %vm1275, %v1896, 0
    %1903 = vmatprep.subr.bf16.mxu0 0
    %1904 = vmatpush1.bf16.msra.mxu0 %v1901
    %1905 = vmatprep.subr.bf16.mxu0 0
    %1906 = vmatpush1.bf16.msra.mxu0 0
    %1907 = vmatprep.subr.bf16.mxu0 0
    %1908 = vmatpush1.bf16.msra.mxu0 0
    %1909 = vmatprep.subr.bf16.mxu0 0
    %1910 = vmatpush1.bf16.msra.mxu0 0
    %1911 = vmatprep.subr.bf16.mxu0 0
    %1912 = vmatpush1.bf16.msra.mxu0 0
    %1913 = vmatprep.subr.bf16.mxu0 0
    %1914 = vmatpush1.bf16.msra.mxu0 0
    %1915 = vmatprep.subr.bf16.mxu0 0
    %1916 = vmatpush1.bf16.msra.mxu0 0
    %1917 = vmatprep.subr.bf16.mxu0 0
    %1918 = vmatpush1.bf16.msra.mxu0 0
    %1919 = vmatprep.subr.bf16.mxu0 0
    %1920 = vmatpush1.bf16.msra.mxu0 0
    %1921 = vmatprep.subr.bf16.mxu0 0
    %1922 = vmatpush1.bf16.msra.mxu0 0
    %1923 = vmatprep.subr.bf16.mxu0 0
    %1924 = vmatpush1.bf16.msra.mxu0 0
    %1925 = vmatprep.subr.bf16.mxu0 0
    %1926 = vmatpush1.bf16.msra.mxu0 0
    %1927 = vmatprep.subr.bf16.mxu0 0
    %1928 = vmatpush1.bf16.msra.mxu0 0
    %1929 = vmatprep.subr.bf16.mxu0 0
    %1930 = vmatpush1.bf16.msra.mxu0 0
    %1931 = vmatprep.subr.bf16.mxu0 0
    %1932 = vmatpush1.bf16.msra.mxu0 0
    %1933 = vmatprep.subr.bf16.mxu0 0
    %1934 = vmatpush1.bf16.msra.mxu0 0
    %1935 = vmatprep.mubr.bf16.mxu0 0
    %1936 = vmatmul.mubr.bf16.gmra.mrb[0].mxu0 %v1898
    %v1937 = vpop.f32.mrb[0].mxu0
    %v1938 = vadd.f32 0.0, %v1937
    %v1939 = vpop.f32.mrb[0].mxu0
    %v1940 = vpop.f32.mrb[0].mxu0
    %v1941 = vpop.f32.mrb[0].mxu0
    %1942 = vdwg.mxu0
    %1943 = vrot.lane.b32.xlu0 %v211, 64
    %v1944 = vpop.permute.xlu0 %1943
    %v1946 = vsel %vm216, %v1268, 0
    %v1949 = vsel %vm1275, %v1944, 0
    %1951 = vmatprep.subr.bf16.mxu0 0
    %1952 = vmatpush1.bf16.msra.mxu0 %v1949
    %1953 = vmatprep.subr.bf16.mxu0 0
    %1954 = vmatpush1.bf16.msra.mxu0 0
    %1955 = vmatprep.subr.bf16.mxu0 0
    %1956 = vmatpush1.bf16.msra.mxu0 0
    %1957 = vmatprep.subr.bf16.mxu0 0
    %1958 = vmatpush1.bf16.msra.mxu0 0
    %1959 = vmatprep.subr.bf16.mxu0 0
    %1960 = vmatpush1.bf16.msra.mxu0 0
    %1961 = vmatprep.subr.bf16.mxu0 0
    %1962 = vmatpush1.bf16.msra.mxu0 0
    %1963 = vmatprep.subr.bf16.mxu0 0
    %1964 = vmatpush1.bf16.msra.mxu0 0
    %1965 = vmatprep.subr.bf16.mxu0 0
    %1966 = vmatpush1.bf16.msra.mxu0 0
    %1967 = vmatprep.subr.bf16.mxu0 0
    %1968 = vmatpush1.bf16.msra.mxu0 0
    %1969 = vmatprep.subr.bf16.mxu0 0
    %1970 = vmatpush1.bf16.msra.mxu0 0
    %1971 = vmatprep.subr.bf16.mxu0 0
    %1972 = vmatpush1.bf16.msra.mxu0 0
    %1973 = vmatprep.subr.bf16.mxu0 0
    %1974 = vmatpush1.bf16.msra.mxu0 0
    %1975 = vmatprep.subr.bf16.mxu0 0
    %1976 = vmatpush1.bf16.msra.mxu0 0
    %1977 = vmatprep.subr.bf16.mxu0 0
    %1978 = vmatpush1.bf16.msra.mxu0 0
    %1979 = vmatprep.subr.bf16.mxu0 0
    %1980 = vmatpush1.bf16.msra.mxu0 0
    %1981 = vmatprep.subr.bf16.mxu0 0
    %1982 = vmatpush1.bf16.msra.mxu0 0
    %1983 = vmatprep.mubr.bf16.mxu0 0
    %1984 = vmatmul.mubr.bf16.gmra.mrb[0].mxu0 %v1946
    %v1985 = vpop.f32.mrb[0].mxu0
    %v1986 = vadd.f32 0.0, %v1985
    %v1987 = vpop.f32.mrb[0].mxu0
    %v1988 = vpop.f32.mrb[0].mxu0
    %v1989 = vpop.f32.mrb[0].mxu0
    %1990 = vdwg.mxu0
    %1991 = vrot.lane.b32.xlu0 %v212, 64
    %v1992 = vpop.permute.xlu0 %1991
    %v1994 = vsel %vm216, %v1269, 0
    %v1997 = vsel %vm1275, %v1992, 0
    %1999 = vmatprep.subr.bf16.mxu0 0
    %2000 = vmatpush1.bf16.msra.mxu0 %v1997
    %2001 = vmatprep.subr.bf16.mxu0 0
    %2002 = vmatpush1.bf16.msra.mxu0 0
    %2003 = vmatprep.subr.bf16.mxu0 0
    %2004 = vmatpush1.bf16.msra.mxu0 0
    %2005 = vmatprep.subr.bf16.mxu0 0
    %2006 = vmatpush1.bf16.msra.mxu0 0
    %2007 = vmatprep.subr.bf16.mxu0 0
    %2008 = vmatpush1.bf16.msra.mxu0 0
    %2009 = vmatprep.subr.bf16.mxu0 0
    %2010 = vmatpush1.bf16.msra.mxu0 0
    %2011 = vmatprep.subr.bf16.mxu0 0
    %2012 = vmatpush1.bf16.msra.mxu0 0
    %2013 = vmatprep.subr.bf16.mxu0 0
    %2014 = vmatpush1.bf16.msra.mxu0 0
    %2015 = vmatprep.subr.bf16.mxu0 0
    %2016 = vmatpush1.bf16.msra.mxu0 0
    %2017 = vmatprep.subr.bf16.mxu0 0
    %2018 = vmatpush1.bf16.msra.mxu0 0
    %2019 = vmatprep.subr.bf16.mxu0 0
    %2020 = vmatpush1.bf16.msra.mxu0 0
    %2021 = vmatprep.subr.bf16.mxu0 0
    %2022 = vmatpush1.bf16.msra.mxu0 0
    %2023 = vmatprep.subr.bf16.mxu0 0
    %2024 = vmatpush1.bf16.msra.mxu0 0
    %2025 = vmatprep.subr.bf16.mxu0 0
    %2026 = vmatpush1.bf16.msra.mxu0 0
    %2027 = vmatprep.subr.bf16.mxu0 0
    %2028 = vmatpush1.bf16.msra.mxu0 0
    %2029 = vmatprep.subr.bf16.mxu0 0
    %2030 = vmatpush1.bf16.msra.mxu0 0
    %2031 = vmatprep.mubr.bf16.mxu0 0
    %2032 = vmatmul.mubr.bf16.gmra.mrb[0].mxu0 %v1994
    %v2033 = vpop.f32.mrb[0].mxu0
    %v2034 = vadd.f32 0.0, %v2033
    %v2035 = vpop.f32.mrb[0].mxu0
    %v2036 = vpop.f32.mrb[0].mxu0
    %v2037 = vpop.f32.mrb[0].mxu0
    %2038 = vdwg.mxu0
    %v2039 = vld [vmem:[#allocation7] sm:$0xf]
    %v2040 = vld [vmem:[#allocation7 + $0x4] sm:$0xf]
    %v2041 = vld [vmem:[#allocation7 + $0x8] sm:$0xf]
    %v2042 = vld [vmem:[#allocation7 + $0xc] sm:$0xf]
    %v2043 = vld [vmem:[%s4] sm:$0x1]
    %v2045 = vlaneseq
    %v2046 = vshrl.u32 %v2045, 7
    %v2047 = vsub.s32 0, %v2046
    %v2048 = vrot.slane %v2043, %v2047
    %v2050 = vpack.c.bf16 %v1362, %v1314
    %v2051 = vpack.c.bf16 %v1458, %v1410
    %v2053 = vsel %vm216, %v2050, 0
    %v2056 = vsel %vm216, %v2051, 0
    %v2059 = vsel %vm1275, %v2039, 0
    %2061 = vmatprep.subr.bf16.mxu0 0
    %2062 = vmatpush1.bf16.msra.mxu0 %v2059
    %2063 = vmatprep.subr.bf16.mxu0 0
    %2064 = vmatpush1.bf16.msra.mxu0 0
    %2065 = vmatprep.subr.bf16.mxu0 0
    %2066 = vmatpush1.bf16.msra.mxu0 0
    %2067 = vmatprep.subr.bf16.mxu0 0
    %2068 = vmatpush1.bf16.msra.mxu0 0
    %2069 = vmatprep.subr.bf16.mxu0 0
    %2070 = vmatpush1.bf16.msra.mxu0 0
    %2071 = vmatprep.subr.bf16.mxu0 0
    %2072 = vmatpush1.bf16.msra.mxu0 0
    %2073 = vmatprep.subr.bf16.mxu0 0
    %2074 = vmatpush1.bf16.msra.mxu0 0
    %2075 = vmatprep.subr.bf16.mxu0 0
    %2076 = vmatpush1.bf16.msra.mxu0 0
    %2077 = vmatprep.subr.bf16.mxu0 0
    %2078 = vmatpush1.bf16.msra.mxu0 0
    %2079 = vmatprep.subr.bf16.mxu0 0
    %2080 = vmatpush1.bf16.msra.mxu0 0
    %2081 = vmatprep.subr.bf16.mxu0 0
    %2082 = vmatpush1.bf16.msra.mxu0 0
    %2083 = vmatprep.subr.bf16.mxu0 0
    %2084 = vmatpush1.bf16.msra.mxu0 0
    %2085 = vmatprep.subr.bf16.mxu0 0
    %2086 = vmatpush1.bf16.msra.mxu0 0
    %2087 = vmatprep.subr.bf16.mxu0 0
    %2088 = vmatpush1.bf16.msra.mxu0 0
    %2089 = vmatprep.subr.bf16.mxu0 0
    %2090 = vmatpush1.bf16.msra.mxu0 0
    %2091 = vmatprep.subr.bf16.mxu0 0
    %2092 = vmatpush1.bf16.msra.mxu0 0
    %2093 = vmatprep.mubr.bf16.mxu0 0
    %2094 = vmatmul.mubr.bf16.gmra.mrb[0].mxu0 %v2053
    %v2095 = vpop.f32.mrb[0].mxu0
    %v2096 = vadd.f32 0.0, %v2095
    %v2097 = vpop.f32.mrb[0].mxu0
    %v2098 = vpop.f32.mrb[0].mxu0
    %v2099 = vadd.f32 0.0, %v2098
    %v2100 = vpop.f32.mrb[0].mxu0
    %2101 = vmatprep.mubr.bf16.mxu0 0
    %2102 = vmatmul.mubr.bf16.gmra.mrb[0].mxu0 %v2056
    %v2103 = vpop.f32.mrb[0].mxu0
    %v2104 = vadd.f32 0.0, %v2103
    %v2105 = vpop.f32.mrb[0].mxu0
    %v2106 = vpop.f32.mrb[0].mxu0
    %v2107 = vadd.f32 0.0, %v2106
    %v2108 = vpop.f32.mrb[0].mxu0
    %2109 = vdwg.mxu0
    %v2110 = vadd.f32 %v2048, %v2096
    %v2111 = vadd.f32 %v2048, %v2099
    %v2112 = vadd.f32 %v2048, %v2104
    %v2113 = vadd.f32 %v2048, %v2107
    %v2114 = vpack.c.bf16 %v1554, %v1506
    %v2115 = vpack.c.bf16 %v1650, %v1602
    %v2117 = vsel %vm216, %v2114, 0
    %v2120 = vsel %vm216, %v2115, 0
    %v2123 = vsel %vm1275, %v2040, 0
    %2125 = vmatprep.subr.bf16.mxu0 0
    %2126 = vmatpush1.bf16.msra.mxu0 %v2123
    %2127 = vmatprep.subr.bf16.mxu0 0
    %2128 = vmatpush1.bf16.msra.mxu0 0
    %2129 = vmatprep.subr.bf16.mxu0 0
    %2130 = vmatpush1.bf16.msra.mxu0 0
    %2131 = vmatprep.subr.bf16.mxu0 0
    %2132 = vmatpush1.bf16.msra.mxu0 0
    %2133 = vmatprep.subr.bf16.mxu0 0
    %2134 = vmatpush1.bf16.msra.mxu0 0
    %2135 = vmatprep.subr.bf16.mxu0 0
    %2136 = vmatpush1.bf16.msra.mxu0 0
    %2137 = vmatprep.subr.bf16.mxu0 0
    %2138 = vmatpush1.bf16.msra.mxu0 0
    %2139 = vmatprep.subr.bf16.mxu0 0
    %2140 = vmatpush1.bf16.msra.mxu0 0
    %2141 = vmatprep.subr.bf16.mxu0 0
    %2142 = vmatpush1.bf16.msra.mxu0 0
    %2143 = vmatprep.subr.bf16.mxu0 0
    %2144 = vmatpush1.bf16.msra.mxu0 0
    %2145 = vmatprep.subr.bf16.mxu0 0
    %2146 = vmatpush1.bf16.msra.mxu0 0
    %2147 = vmatprep.subr.bf16.mxu0 0
    %2148 = vmatpush1.bf16.msra.mxu0 0
    %2149 = vmatprep.subr.bf16.mxu0 0
    %2150 = vmatpush1.bf16.msra.mxu0 0
    %2151 = vmatprep.subr.bf16.mxu0 0
    %2152 = vmatpush1.bf16.msra.mxu0 0
    %2153 = vmatprep.subr.bf16.mxu0 0
    %2154 = vmatpush1.bf16.msra.mxu0 0
    %2155 = vmatprep.subr.bf16.mxu0 0
    %2156 = vmatpush1.bf16.msra.mxu0 0
    %2157 = vmatprep.mubr.bf16.mxu0 0
    %2158 = vmatmul.mubr.bf16.gmra.mrb[0].mxu0 %v2117
    %v2159 = vpop.f32.mrb[0].mxu0
    %v2160 = vadd.f32 0.0, %v2159
    %v2161 = vpop.f32.mrb[0].mxu0
    %v2162 = vpop.f32.mrb[0].mxu0
    %v2163 = vadd.f32 0.0, %v2162
    %v2164 = vpop.f32.mrb[0].mxu0
    %2165 = vmatprep.mubr.bf16.mxu0 0
    %2166 = vmatmul.mubr.bf16.gmra.mrb[0].mxu0 %v2120
    %v2167 = vpop.f32.mrb[0].mxu0
    %v2168 = vadd.f32 0.0, %v2167
    %v2169 = vpop.f32.mrb[0].mxu0
    %v2170 = vpop.f32.mrb[0].mxu0
    %v2171 = vadd.f32 0.0, %v2170
    %v2172 = vpop.f32.mrb[0].mxu0
    %2173 = vdwg.mxu0
    %v2174 = vadd.f32 %v2110, %v2160
    %v2175 = vadd.f32 %v2111, %v2163
    %v2176 = vadd.f32 %v2112, %v2168
    %v2177 = vadd.f32 %v2113, %v2171
    %v2178 = vpack.c.bf16 %v1746, %v1698
    %v2179 = vpack.c.bf16 %v1842, %v1794
    %v2181 = vsel %vm216, %v2178, 0
    %v2184 = vsel %vm216, %v2179, 0
    %v2187 = vsel %vm1275, %v2041, 0
    %2189 = vmatprep.subr.bf16.mxu0 0
    %2190 = vmatpush1.bf16.msra.mxu0 %v2187
    %2191 = vmatprep.subr.bf16.mxu0 0
    %2192 = vmatpush1.bf16.msra.mxu0 0
    %2193 = vmatprep.subr.bf16.mxu0 0
    %2194 = vmatpush1.bf16.msra.mxu0 0
    %2195 = vmatprep.subr.bf16.mxu0 0
    %2196 = vmatpush1.bf16.msra.mxu0 0
    %2197 = vmatprep.subr.bf16.mxu0 0
    %2198 = vmatpush1.bf16.msra.mxu0 0
    %2199 = vmatprep.subr.bf16.mxu0 0
    %2200 = vmatpush1.bf16.msra.mxu0 0
    %2201 = vmatprep.subr.bf16.mxu0 0
    %2202 = vmatpush1.bf16.msra.mxu0 0
    %2203 = vmatprep.subr.bf16.mxu0 0
    %2204 = vmatpush1.bf16.msra.mxu0 0
    %2205 = vmatprep.subr.bf16.mxu0 0
    %2206 = vmatpush1.bf16.msra.mxu0 0
    %2207 = vmatprep.subr.bf16.mxu0 0
    %2208 = vmatpush1.bf16.msra.mxu0 0
    %2209 = vmatprep.subr.bf16.mxu0 0
    %2210 = vmatpush1.bf16.msra.mxu0 0
    %2211 = vmatprep.subr.bf16.mxu0 0
    %2212 = vmatpush1.bf16.msra.mxu0 0
    %2213 = vmatprep.subr.bf16.mxu0 0
    %2214 = vmatpush1.bf16.msra.mxu0 0
    %2215 = vmatprep.subr.bf16.mxu0 0
    %2216 = vmatpush1.bf16.msra.mxu0 0
    %2217 = vmatprep.subr.bf16.mxu0 0
    %2218 = vmatpush1.bf16.msra.mxu0 0
    %2219 = vmatprep.subr.bf16.mxu0 0
    %2220 = vmatpush1.bf16.msra.mxu0 0
    %2221 = vmatprep.mubr.bf16.mxu0 0
    %2222 = vmatmul.mubr.bf16.gmra.mrb[0].mxu0 %v2181
    %v2223 = vpop.f32.mrb[0].mxu0
    %v2224 = vadd.f32 0.0, %v2223
    %v2225 = vpop.f32.mrb[0].mxu0
    %v2226 = vpop.f32.mrb[0].mxu0
    %v2227 = vadd.f32 0.0, %v2226
    %v2228 = vpop.f32.mrb[0].mxu0
    %2229 = vmatprep.mubr.bf16.mxu0 0
    %2230 = vmatmul.mubr.bf16.gmra.mrb[0].mxu0 %v2184
    %v2231 = vpop.f32.mrb[0].mxu0
    %v2232 = vadd.f32 0.0, %v2231
    %v2233 = vpop.f32.mrb[0].mxu0
    %v2234 = vpop.f32.mrb[0].mxu0
    %v2235 = vadd.f32 0.0, %v2234
    %v2236 = vpop.f32.mrb[0].mxu0
    %2237 = vdwg.mxu0
    %v2238 = vadd.f32 %v2174, %v2224
    %v2239 = vadd.f32 %v2175, %v2227
    %v2240 = vadd.f32 %v2176, %v2232
    %v2241 = vadd.f32 %v2177, %v2235
    %v2242 = vpack.c.bf16 %v1938, %v1890
    %v2243 = vpack.c.bf16 %v2034, %v1986
    %v2245 = vsel %vm216, %v2242, 0
    %v2248 = vsel %vm216, %v2243, 0
    %v2251 = vsel %vm1275, %v2042, 0
    %2253 = vmatprep.subr.bf16.mxu0 0
    %2254 = vmatpush1.bf16.msra.mxu0 %v2251
    %2255 = vmatprep.subr.bf16.mxu0 0
    %2256 = vmatpush1.bf16.msra.mxu0 0
    %2257 = vmatprep.subr.bf16.mxu0 0
    %2258 = vmatpush1.bf16.msra.mxu0 0
    %2259 = vmatprep.subr.bf16.mxu0 0
    %2260 = vmatpush1.bf16.msra.mxu0 0
    %2261 = vmatprep.subr.bf16.mxu0 0
    %2262 = vmatpush1.bf16.msra.mxu0 0
    %2263 = vmatprep.subr.bf16.mxu0 0
    %2264 = vmatpush1.bf16.msra.mxu0 0
    %2265 = vmatprep.subr.bf16.mxu0 0
    %2266 = vmatpush1.bf16.msra.mxu0 0
    %2267 = vmatprep.subr.bf16.mxu0 0
    %2268 = vmatpush1.bf16.msra.mxu0 0
    %2269 = vmatprep.subr.bf16.mxu0 0
    %2270 = vmatpush1.bf16.msra.mxu0 0
    %2271 = vmatprep.subr.bf16.mxu0 0
    %2272 = vmatpush1.bf16.msra.mxu0 0
    %2273 = vmatprep.subr.bf16.mxu0 0
    %2274 = vmatpush1.bf16.msra.mxu0 0
    %2275 = vmatprep.subr.bf16.mxu0 0
    %2276 = vmatpush1.bf16.msra.mxu0 0
    %2277 = vmatprep.subr.bf16.mxu0 0
    %2278 = vmatpush1.bf16.msra.mxu0 0
    %2279 = vmatprep.subr.bf16.mxu0 0
    %2280 = vmatpush1.bf16.msra.mxu0 0
    %2281 = vmatprep.subr.bf16.mxu0 0
    %2282 = vmatpush1.bf16.msra.mxu0 0
    %2283 = vmatprep.subr.bf16.mxu0 0
    %2284 = vmatpush1.bf16.msra.mxu0 0
    %2285 = vmatprep.mubr.bf16.mxu0 0
    %2286 = vmatmul.mubr.bf16.gmra.mrb[0].mxu0 %v2245
    %v2287 = vpop.f32.mrb[0].mxu0
    %v2288 = vadd.f32 0.0, %v2287
    %v2289 = vpop.f32.mrb[0].mxu0
    %v2290 = vpop.f32.mrb[0].mxu0
    %v2291 = vadd.f32 0.0, %v2290
    %v2292 = vpop.f32.mrb[0].mxu0
    %2293 = vmatprep.mubr.bf16.mxu0 0
    %2294 = vmatmul.mubr.bf16.gmra.mrb[0].mxu0 %v2248
    %v2295 = vpop.f32.mrb[0].mxu0
    %v2296 = vadd.f32 0.0, %v2295
    %v2297 = vpop.f32.mrb[0].mxu0
    %v2298 = vpop.f32.mrb[0].mxu0
    %v2299 = vadd.f32 0.0, %v2298
    %v2300 = vpop.f32.mrb[0].mxu0
    %2301 = vdwg.mxu0
    %v2302 = vadd.f32 %v2238, %v2288
    %v2303 = vadd.f32 %v2239, %v2291
    %v2304 = vadd.f32 %v2240, %v2296
    %v2305 = vadd.f32 %v2241, %v2299
    %v2306 = vpack.c.bf16 %v2303, %v2302
    %v2307 = vpack.c.bf16 %v2305, %v2304
    %v2308 = vld [vmem:[%s5] sm:$0xf]
    %v2309 = vld [vmem:[%s5 + $0x4] sm:$0xf]
    %v2310 = vld [vmem:[%s5 + $0x8] sm:$0xf]
    %v2311 = vld [vmem:[%s5 + $0xc] sm:$0xf]
    %v2312 = vld [vmem:[%s6] sm:$0x1]
    %v2314 = vlaneseq
    %v2315 = vshrl.u32 %v2314, 7
    %v2316 = vsub.s32 0, %v2315
    %v2317 = vrot.slane %v2312, %v2316
    %v2323 = vunpack.c.l.b16 %v2308
    %v2324 = vunpack.c.l.b16 %v2309
    %v2325 = vunpack.c.l.b16 %v2310
    %v2326 = vunpack.c.l.b16 %v2311
    %v2327 = vpack.c.b16 %v2324, %v2323
    %v2328 = vpack.c.b16 %v2326, %v2325
    %v2332 = vsel %vm101, %v2306, 0
    %v2335 = vsel %vm101, %v2307, 0
    %2337 = vmatprep.subr.bf16.mxu0 0
    %2338 = vmatpush1.bf16.msra.mxu0 %v2327
    %2339 = vmatprep.subr.bf16.mxu0 0
    %2340 = vmatpush1.bf16.msra.mxu0 %v2328
    %2341 = vmatprep.subr.bf16.mxu0 0
    %2342 = vmatpush1.bf16.msra.mxu0 0
    %2343 = vmatprep.subr.bf16.mxu0 0
    %2344 = vmatpush1.bf16.msra.mxu0 0
    %2345 = vmatprep.subr.bf16.mxu0 0
    %2346 = vmatpush1.bf16.msra.mxu0 0
    %2347 = vmatprep.subr.bf16.mxu0 0
    %2348 = vmatpush1.bf16.msra.mxu0 0
    %2349 = vmatprep.subr.bf16.mxu0 0
    %2350 = vmatpush1.bf16.msra.mxu0 0
    %2351 = vmatprep.subr.bf16.mxu0 0
    %2352 = vmatpush1.bf16.msra.mxu0 0
    %2353 = vmatprep.subr.bf16.mxu0 0
    %2354 = vmatpush1.bf16.msra.mxu0 0
    %2355 = vmatprep.subr.bf16.mxu0 0
    %2356 = vmatpush1.bf16.msra.mxu0 0
    %2357 = vmatprep.subr.bf16.mxu0 0
    %2358 = vmatpush1.bf16.msra.mxu0 0
    %2359 = vmatprep.subr.bf16.mxu0 0
    %2360 = vmatpush1.bf16.msra.mxu0 0
    %2361 = vmatprep.subr.bf16.mxu0 0
    %2362 = vmatpush1.bf16.msra.mxu0 0
    %2363 = vmatprep.subr.bf16.mxu0 0
    %2364 = vmatpush1.bf16.msra.mxu0 0
    %2365 = vmatprep.subr.bf16.mxu0 0
    %2366 = vmatpush1.bf16.msra.mxu0 0
    %2367 = vmatprep.subr.bf16.mxu0 0
    %2368 = vmatpush1.bf16.msra.mxu0 0
    %2369 = vmatprep.mubr.bf16.mxu0 0
    %2370 = vmatmul.mubr.bf16.gmra.mrb[0].mxu0 %v2332
    %v2371 = vpop.f32.mrb[0].mxu0
    %v2372 = vadd.f32 %v2317, %v2371
    %v2373 = vpop.f32.mrb[0].mxu0
    %v2374 = vpop.f32.mrb[0].mxu0
    %v2375 = vadd.f32 %v2317, %v2374
    %v2376 = vpop.f32.mrb[0].mxu0
    %2377 = vmatprep.mubr.bf16.mxu0 0
    %2378 = vmatmul.mubr.bf16.gmra.mrb[0].mxu0 %v2335
    %v2379 = vpop.f32.mrb[0].mxu0
    %v2380 = vadd.f32 %v2317, %v2379
    %v2381 = vpop.f32.mrb[0].mxu0
    %v2382 = vpop.f32.mrb[0].mxu0
    %v2383 = vadd.f32 %v2317, %v2382
    %v2384 = vpop.f32.mrb[0].mxu0
    %2385 = vdwg.mxu0
    %v2386 = vadd.f32 %v2372, %v72
    %v2387 = vadd.f32 %v2375, %v73
    %v2388 = vadd.f32 %v2380, %v74
    %v2389 = vadd.f32 %v2383, %v75
    %v2390 = vmax.f32 %v2386, 0.0
    %v2391 = vmax.f32 %v2387, 0.0
    %v2392 = vmax.f32 %v2388, 0.0
    %v2393 = vmax.f32 %v2389, 0.0
    %2394 = vst.msk [vmem:[#allocation8] sm:$0xff] %vm101, %v2390
    %2395 = vst.msk [vmem:[#allocation8 + $0x8] sm:$0xff] %vm101, %v2391
    %2396 = vst.msk [vmem:[#allocation8 + $0x10] sm:$0xff] %vm101, %v2392
    %2397 = vst.msk [vmem:[#allocation8 + $0x18] sm:$0xff] %vm101, %v2393
    %2398 = vst.msk [vmem:[#allocation9] sm:$0xff] %vm216, %v1250
    %2399 = vst.msk [vmem:[#allocation9 + $0x8] sm:$0xff] %vm216, %v1251
    %2400 = vst.msk [vmem:[#allocation9 + $0x10] sm:$0xff] %vm216, %v1252
    %2401 = vst.msk [vmem:[#allocation9 + $0x18] sm:$0xff] %vm216, %v1253
    // Predicated region
    $region42: #{tpu_custom_call.1} parent=1 // pred_check
      _
    $region43: #{tpu_custom_call.1} parent=1 // pred_check_branch
      %2403 = sbr.rel (0) target = $region45
    $region44: #{tpu_custom_call.1} parent=1 // pred_region
      %s2405 = ssub.s32 512, 512
      %2406 = vsyncadd [#allocation4], %s2405
      %s2407 = sshll.u32 [#allocation8], 4
      %s2408 = int_to_ptr.vmem [resolvable:$true] %s2407
      %2413 = dma.vmem_to_hbm [thread:$0]  %s2408, 512, %s7, [#allocation4], 128, 128, 8
    $region45: #{tpu_custom_call.1} parent=1 // pred_fallthru
      _
    // Predicated region
    $region46: #{tpu_custom_call.1} parent=1 // pred_check
      _
    $region47: #{tpu_custom_call.1} parent=1 // pred_check_branch
      %2415 = sbr.rel (0) target = $region49
    $region48: #{tpu_custom_call.1} parent=1 // pred_region
      %s2417 = ssub.s32 512, 512
      %2418 = vsyncadd [#allocation10], %s2417
      %s2419 = sshll.u32 [#allocation9], 4
      %s2420 = int_to_ptr.vmem [resolvable:$true] %s2419
      %2425 = dma.vmem_to_hbm [thread:$0]  %s2420, 512, %s8, [#allocation10], 128, 128, 8
    $region49: #{tpu_custom_call.1} parent=1 // pred_fallthru
      _
    // Predicated region
    $region50: #{tpu_custom_call.1} parent=1 // pred_check
      _
    $region51: #{tpu_custom_call.1} parent=1 // pred_check_branch
      %2427 = sbr.rel (0) target = $region53
    $region52: #{tpu_custom_call.1} parent=1 // pred_region
      %2428 = dma.done [#allocation4], 512
    $region53: #{tpu_custom_call.1} parent=1 // pred_fallthru
      _
    // Predicated region
    $region54: #{tpu_custom_call.1} parent=1 // pred_check
      _
    $region55: #{tpu_custom_call.1} parent=1 // pred_check_branch
      %2430 = sbr.rel (0) target = $region57
    $region56: #{tpu_custom_call.1} parent=1 // pred_region
      %2431 = dma.done [#allocation10], 512
    $region57: #{tpu_custom_call.1} parent=1 // pred_fallthru
      _
    %2432 = vsyncpa [#allocation3], 1
    %2433 = vsyncpa [#allocation6], 1
    %2434 = vsyncpa [#allocation4], 1
    %2435 = vsyncpa [#allocation10], 1

// kernel: tpu_custom_call.1
$region0: #{tpu_custom_call.1}
  #allocation0 [shape = 'u32[]', space=smem, size = 0x4, offset = 0x4, fixed_abs, tag = 'smem constant byte address 0x4 - core index']
  #allocation1 [shape = 'u32[144,128]{1,0:T(1,128)}', space=vmem, size = 0x12000, scoped, tag = 'internal scratch']
  %s0 = inlined_call_operand.hbm [shape: f32[4,8,32], index: 0, kind: input, shape index: {}]
  %s1 = inlined_call_operand.hbm [shape: bf16[32,96], index: 1, kind: input, shape index: {}]
  %s2 = inlined_call_operand.vmem [shape: f32[1,96], index: 2, kind: input, shape index: {}]
  %s3 = inlined_call_operand.hbm [shape: bf16[32,32], index: 3, kind: input, shape index: {}]
  %s4 = inlined_call_operand.vmem [shape: f32[1,32], index: 4, kind: input, shape index: {}]
  %s5 = inlined_call_operand.vmem [shape: bf16[32,32], index: 5, kind: input, shape index: {}]
  %s6 = inlined_call_operand.vmem [shape: f32[1,32], index: 6, kind: input, shape index: {}]
  %s7 = inlined_call_operand.hbm [shape: f32[4,8,32], index: 7, kind: output, shape index: {0}]
  %s8 = inlined_call_operand.hbm [shape: f32[4,8,8], index: 8, kind: output, shape index: {1}]
  %9 = xla_tuple %s7, %s8
  %s10 = sld [smem:[#allocation0]]
  $region58: #{tpu_custom_call.1} parent=0
    _
  %s12 = ssub.s32 1, %s10
  %s13 = scalar_select 0, %s12, %s10
  $region1: #{tpu_custom_call.1} parent=0
    #allocation2 [shape = 'u8[16384]{0}', space=vmem, size = 0x4000, scoped, tag = 'input window, operand 0, single buffered']
    #allocation3 [shape = 's32[1]{0}', space=sflag, size = 0x4, scoped, tag = 'scoped memory for tpu_custom_call.1']
    #allocation4 [shape = 's32[1]{0}', space=sflag, size = 0x4, scoped, tag = 'scoped memory for tpu_custom_call.1']
    #allocation5 [shape = 'u8[8192]{0}', space=vmem, size = 0x2000, scoped, tag = 'input window, operand 1, single buffered']
    #allocation6 [shape = 's32[1]{0}', space=sflag, size = 0x4, scoped, tag = 'scoped memory for tpu_custom_call.1']
    #allocation7 [shape = 'u8[8192]{0}', space=vmem, size = 0x2000, scoped, tag = 'input window, operand 3, single buffered']
    #allocation8 [shape = 'u8[16384]{0}', space=vmem, size = 0x4000, scoped, tag = 'output window, operand 0, single buffered']
    #allocation9 [shape = 'u8[16384]{0}', space=vmem, size = 0x4000, scoped, tag = 'output window, operand 1, single buffered']
    #allocation10 [shape = 's32[1]{0}', space=sflag, size = 0x4, scoped, tag = 'scoped memory for tpu_custom_call.1']
    %14 = vsyncpa [#allocation3], 0
    %15 = vsyncpa [#allocation6], 0
    %16 = vsyncpa [#allocation4], 0
    %17 = vsyncpa [#allocation10], 0
    // Predicated region
    $region2: #{tpu_custom_call.1} parent=1 // pred_check
      _
    $region3: #{tpu_custom_call.1} parent=1 // pred_check_branch
      %19 = sbr.rel (0) target = $region5
    $region4: #{tpu_custom_call.1} parent=1 // pred_region
      %s21 = ssub.s32 512, 512
      %22 = vsyncadd [#allocation3], %s21
      %s23 = sshll.u32 [#allocation2], 4
      %s24 = int_to_ptr.vmem [resolvable:$true] %s23
      %29 = dma.hbm_to_vmem [thread:$0]  %s0, 512, %s24, [#allocation3], 128, 128, 8
    $region5: #{tpu_custom_call.1} parent=1 // pred_fallthru
      _
    // Predicated region
    $region6: #{tpu_custom_call.1} parent=1 // pred_check
      _
    $region7: #{tpu_custom_call.1} parent=1 // pred_check_branch
      %31 = sbr.rel (0) target = $region9
    $region8: #{tpu_custom_call.1} parent=1 // pred_region
      %s33 = ssub.s32 256, 256
      %34 = vsyncadd [#allocation6], %s33
      %s35 = sshll.u32 [#allocation5], 4
      %s36 = int_to_ptr.vmem [resolvable:$true] %s35
      %41 = dma.hbm_to_vmem [thread:$0]  %s1, 256, %s36, [#allocation6], 64, 64, 4
    $region9: #{tpu_custom_call.1} parent=1 // pred_fallthru
      _
    // Predicated region
    $region10: #{tpu_custom_call.1} parent=1 // pred_check
      _
    $region11: #{tpu_custom_call.1} parent=1 // pred_check_branch
      %43 = sbr.rel (0) target = $region13
    $region12: #{tpu_custom_call.1} parent=1 // pred_region
      _
    $region13: #{tpu_custom_call.1} parent=1 // pred_fallthru
      _
    // Predicated region
    $region14: #{tpu_custom_call.1} parent=1 // pred_check
      _
    $region15: #{tpu_custom_call.1} parent=1 // pred_check_branch
      %45 = sbr.rel (0) target = $region17
    $region16: #{tpu_custom_call.1} parent=1 // pred_region
      %s47 = ssub.s32 256, 256
      %48 = vsyncadd [#allocation6], %s47
      %s49 = sshll.u32 [#allocation7], 4
      %s50 = int_to_ptr.vmem [resolvable:$true] %s49
      %55 = dma.hbm_to_vmem [thread:$0]  %s3, 256, %s50, [#allocation6], 64, 64, 4
    $region17: #{tpu_custom_call.1} parent=1 // pred_fallthru
      _
    // Predicated region
    $region18: #{tpu_custom_call.1} parent=1 // pred_check
      _
    $region19: #{tpu_custom_call.1} parent=1 // pred_check_branch
      %57 = sbr.rel (0) target = $region21
    $region20: #{tpu_custom_call.1} parent=1 // pred_region
      _
    $region21: #{tpu_custom_call.1} parent=1 // pred_fallthru
      _
    // Predicated region
    $region22: #{tpu_custom_call.1} parent=1 // pred_check
      _
    $region23: #{tpu_custom_call.1} parent=1 // pred_check_branch
      %59 = sbr.rel (0) target = $region25
    $region24: #{tpu_custom_call.1} parent=1 // pred_region
      _
    $region25: #{tpu_custom_call.1} parent=1 // pred_fallthru
      _
    // Predicated region
    $region26: #{tpu_custom_call.1} parent=1 // pred_check
      _
    $region27: #{tpu_custom_call.1} parent=1 // pred_check_branch
      %61 = sbr.rel (0) target = $region29
    $region28: #{tpu_custom_call.1} parent=1 // pred_region
      _
    $region29: #{tpu_custom_call.1} parent=1 // pred_fallthru
      _
    // Predicated region
    $region30: #{tpu_custom_call.1} parent=1 // pred_check
      _
    $region31: #{tpu_custom_call.1} parent=1 // pred_check_branch
      %63 = sbr.rel (0) target = $region33
    $region32: #{tpu_custom_call.1} parent=1 // pred_region
      %64 = dma.done [#allocation3], 512
    $region33: #{tpu_custom_call.1} parent=1 // pred_fallthru
      _
    // Predicated region
    $region34: #{tpu_custom_call.1} parent=1 // pred_check
      _
    $region35: #{tpu_custom_call.1} parent=1 // pred_check_branch
      %66 = sbr.rel (0) target = $region37
    $region36: #{tpu_custom_call.1} parent=1 // pred_region
      %67 = dma.done [#allocation6], 256
    $region37: #{tpu_custom_call.1} parent=1 // pred_fallthru
      _
    // Predicated region
    $region38: #{tpu_custom_call.1} parent=1 // pred_check
      _
    $region39: #{tpu_custom_call.1} parent=1 // pred_check_branch
      %69 = sbr.rel (0) target = $region41
    $region40: #{tpu_custom_call.1} parent=1 // pred_region
      %70 = dma.done [#allocation6], 256
    $region41: #{tpu_custom_call.1} parent=1 // pred_fallthru
      _
    %v72 = vld [vmem:[#allocation2] sm:$0xff]
    %v73 = vld [vmem:[#allocation2 + $0x8] sm:$0xff]
    %v74 = vld [vmem:[#allocation2 + $0x10] sm:$0xff]
    %v75 = vld [vmem:[#allocation2 + $0x18] sm:$0xff]
    %v76 = vpack.c.bf16 %v73, %v72
    %v77 = vpack.c.bf16 %v75, %v74
    %v78 = vld [vmem:[#allocation5] sm:$0xf]
    %v79 = vld [vmem:[#allocation5 + $0x4] sm:$0xf]
    %v80 = vld [vmem:[#allocation5 + $0x8] sm:$0xf]
    %v81 = vld [vmem:[#allocation5 + $0xc] sm:$0xf]
    %v82 = vld [vmem:[%s2] sm:$0x1]
    %v84 = vlaneseq
    %v85 = vshrl.u32 %v84, 7
    %v86 = vsub.s32 0, %v85
    %v87 = vrot.slane %v82, %v86
    %v93 = vunpack.c.l.b16 %v78
    %v94 = vunpack.c.l.b16 %v79
    %v95 = vunpack.c.l.b16 %v80
    %v96 = vunpack.c.l.b16 %v81
    %v97 = vpack.c.b16 %v94, %v93
    %v98 = vpack.c.b16 %v96, %v95
    %vm101 = vcmask 261120
    %v103 = vsel %vm101, %v76, 0
    %v106 = vsel %vm101, %v77, 0
    %108 = vmatprep.subr.bf16.mxu0 0
    %109 = vmatpush1.bf16.msra.mxu0 %v97
    %110 = vmatprep.subr.bf16.mxu0 0
    %111 = vmatpush1.bf16.msra.mxu0 %v98
    %112 = vmatprep.subr.bf16.mxu0 0
    %113 = vmatpush1.bf16.msra.mxu0 0
    %114 = vmatprep.subr.bf16.mxu0 0
    %115 = vmatpush1.bf16.msra.mxu0 0
    %116 = vmatprep.subr.bf16.mxu0 0
    %117 = vmatpush1.bf16.msra.mxu0 0
    %118 = vmatprep.subr.bf16.mxu0 0
    %119 = vmatpush1.bf16.msra.mxu0 0
    %120 = vmatprep.subr.bf16.mxu0 0
    %121 = vmatpush1.bf16.msra.mxu0 0
    %122 = vmatprep.subr.bf16.mxu0 0
    %123 = vmatpush1.bf16.msra.mxu0 0
    %124 = vmatprep.subr.bf16.mxu0 0
    %125 = vmatpush1.bf16.msra.mxu0 0
    %126 = vmatprep.subr.bf16.mxu0 0
    %127 = vmatpush1.bf16.msra.mxu0 0
    %128 = vmatprep.subr.bf16.mxu0 0
    %129 = vmatpush1.bf16.msra.mxu0 0
    %130 = vmatprep.subr.bf16.mxu0 0
    %131 = vmatpush1.bf16.msra.mxu0 0
    %132 = vmatprep.subr.bf16.mxu0 0
    %133 = vmatpush1.bf16.msra.mxu0 0
    %134 = vmatprep.subr.bf16.mxu0 0
    %135 = vmatpush1.bf16.msra.mxu0 0
    %136 = vmatprep.subr.bf16.mxu0 0
    %137 = vmatpush1.bf16.msra.mxu0 0
    %138 = vmatprep.subr.bf16.mxu0 0
    %139 = vmatpush1.bf16.msra.mxu0 0
    %140 = vmatprep.mubr.bf16.mxu0 0
    %141 = vmatmul.mubr.bf16.gmra.mrb[0].mxu0 %v103
    %v142 = vpop.f32.mrb[0].mxu0
    %v143 = vadd.f32 %v87, %v142
    %v144 = vpop.f32.mrb[0].mxu0
    %v145 = vpop.f32.mrb[0].mxu0
    %v146 = vadd.f32 %v87, %v145
    %v147 = vpop.f32.mrb[0].mxu0
    %148 = vmatprep.mubr.bf16.mxu0 0
    %149 = vmatmul.mubr.bf16.gmra.mrb[0].mxu0 %v106
    %v150 = vpop.f32.mrb[0].mxu0
    %v151 = vadd.f32 %v87, %v150
    %v152 = vpop.f32.mrb[0].mxu0
    %v153 = vpop.f32.mrb[0].mxu0
    %v154 = vadd.f32 %v87, %v153
    %v155 = vpop.f32.mrb[0].mxu0
    %156 = vdwg.mxu0
    %161 = vrot.lane.b32.xlu0 %v143, 120
    %v162 = vpop.permute.xlu0 %161
    %163 = vrot.lane.b32.xlu0 %v146, 120
    %v164 = vpop.permute.xlu0 %163
    %165 = vrot.lane.b32.xlu0 %v151, 120
    %v166 = vpop.permute.xlu0 %165
    %167 = vrot.lane.b32.xlu0 %v154, 120
    %v168 = vpop.permute.xlu0 %167
    %173 = vrot.lane.b32.xlu0 %v143, 112
    %v174 = vpop.permute.xlu0 %173
    %175 = vrot.lane.b32.xlu0 %v146, 112
    %v176 = vpop.permute.xlu0 %175
    %177 = vrot.lane.b32.xlu0 %v151, 112
    %v178 = vpop.permute.xlu0 %177
    %179 = vrot.lane.b32.xlu0 %v154, 112
    %v180 = vpop.permute.xlu0 %179
    %185 = vrot.lane.b32.xlu0 %v143, 104
    %v186 = vpop.permute.xlu0 %185
    %187 = vrot.lane.b32.xlu0 %v146, 104
    %v188 = vpop.permute.xlu0 %187
    %189 = vrot.lane.b32.xlu0 %v151, 104
    %v190 = vpop.permute.xlu0 %189
    %191 = vrot.lane.b32.xlu0 %v154, 104
    %v192 = vpop.permute.xlu0 %191
    %v197 = vpack.c.bf16 %v143, %v143
    %v198 = vpack.c.bf16 %v146, %v146
    %v199 = vpack.c.bf16 %v151, %v151
    %v200 = vpack.c.bf16 %v154, %v154
    %v201 = vpack.c.bf16 %v162, %v162
    %v202 = vpack.c.bf16 %v164, %v164
    %v203 = vpack.c.bf16 %v166, %v166
    %v204 = vpack.c.bf16 %v168, %v168
    %v205 = vpack.c.bf16 %v174, %v174
    %v206 = vpack.c.bf16 %v176, %v176
    %v207 = vpack.c.bf16 %v178, %v178
    %v208 = vpack.c.bf16 %v180, %v180
    %v209 = vpack.c.bf16 %v186, %v186
    %v210 = vpack.c.bf16 %v188, %v188
    %v211 = vpack.c.bf16 %v190, %v190
    %v212 = vpack.c.bf16 %v192, %v192
    %214 = vrot.lane.b32.xlu0 %v197, 96
    %v215 = vpop.permute.xlu0 %214
    %vm216 = vcmask 64512
    %v218 = vsel %vm216, %v197, 0
    %v221 = vsel %vm216, %v215, 0
    %223 = vmatprep.subr.bf16.mxu0 0
    %224 = vmatpush1.bf16.xpose.msra.mxu0 %v221
    %225 = vmatprep.subr.bf16.mxu0 0
    %226 = vmatpush1.bf16.xpose.msra.mxu0 0
    %227 = vmatprep.subr.bf16.mxu0 0
    %228 = vmatpush1.bf16.xpose.msra.mxu0 0
    %229 = vmatprep.subr.bf16.mxu0 0
    %230 = vmatpush1.bf16.xpose.msra.mxu0 0
    %231 = vmatprep.subr.bf16.mxu0 0
    %232 = vmatpush1.bf16.xpose.msra.mxu0 0
    %233 = vmatprep.subr.bf16.mxu0 0
    %234 = vmatpush1.bf16.xpose.msra.mxu0 0
    %235 = vmatprep.subr.bf16.mxu0 0
    %236 = vmatpush1.bf16.xpose.msra.mxu0 0
    %237 = vmatprep.subr.bf16.mxu0 0
    %238 = vmatpush1.bf16.xpose.msra.mxu0 0
    %239 = vmatprep.subr.bf16.mxu0 0
    %240 = vmatpush1.bf16.xpose.msra.mxu0 0
    %241 = vmatprep.subr.bf16.mxu0 0
    %242 = vmatpush1.bf16.xpose.msra.mxu0 0
    %243 = vmatprep.subr.bf16.mxu0 0
    %244 = vmatpush1.bf16.xpose.msra.mxu0 0
    %245 = vmatprep.subr.bf16.mxu0 0
    %246 = vmatpush1.bf16.xpose.msra.mxu0 0
    %247 = vmatprep.subr.bf16.mxu0 0
    %248 = vmatpush1.bf16.xpose.msra.mxu0 0
    %249 = vmatprep.subr.bf16.mxu0 0
    %250 = vmatpush1.bf16.xpose.msra.mxu0 0
    %251 = vmatprep.subr.bf16.mxu0 0
    %252 = vmatpush1.bf16.xpose.msra.mxu0 0
    %253 = vmatprep.subr.bf16.mxu0 0
    %254 = vmatpush1.bf16.xpose.msra.mxu0 0
    %255 = vmatprep.mubr.bf16.mxu0 0
    %256 = vmatmul.mubr.bf16.gmra.mrb[0].mxu0 %v218
    %v257 = vpop.f32.mrb[0].mxu0
    %v258 = vadd.f32 0.0, %v257
    %v259 = vpop.f32.mrb[0].mxu0
    %v260 = vpop.f32.mrb[0].mxu0
    %v261 = vpop.f32.mrb[0].mxu0
    %262 = vdwg.mxu0
    %264 = vrot.lane.b32.xlu0 %v198, 96
    %v265 = vpop.permute.xlu0 %264
    %v267 = vsel %vm216, %v198, 0
    %v270 = vsel %vm216, %v265, 0
    %272 = vmatprep.subr.bf16.mxu0 0
    %273 = vmatpush1.bf16.xpose.msra.mxu0 %v270
    %274 = vmatprep.subr.bf16.mxu0 0
    %275 = vmatpush1.bf16.xpose.msra.mxu0 0
    %276 = vmatprep.subr.bf16.mxu0 0
    %277 = vmatpush1.bf16.xpose.msra.mxu0 0
    %278 = vmatprep.subr.bf16.mxu0 0
    %279 = vmatpush1.bf16.xpose.msra.mxu0 0
    %280 = vmatprep.subr.bf16.mxu0 0
    %281 = vmatpush1.bf16.xpose.msra.mxu0 0
    %282 = vmatprep.subr.bf16.mxu0 0
    %283 = vmatpush1.bf16.xpose.msra.mxu0 0
    %284 = vmatprep.subr.bf16.mxu0 0
    %285 = vmatpush1.bf16.xpose.msra.mxu0 0
    %286 = vmatprep.subr.bf16.mxu0 0
    %287 = vmatpush1.bf16.xpose.msra.mxu0 0
    %288 = vmatprep.subr.bf16.mxu0 0
    %289 = vmatpush1.bf16.xpose.msra.mxu0 0
    %290 = vmatprep.subr.bf16.mxu0 0
    %291 = vmatpush1.bf16.xpose.msra.mxu0 0
    %292 = vmatprep.subr.bf16.mxu0 0
    %293 = vmatpush1.bf16.xpose.msra.mxu0 0
    %294 = vmatprep.subr.bf16.mxu0 0
    %295 = vmatpush1.bf16.xpose.msra.mxu0 0
    %296 = vmatprep.subr.bf16.mxu0 0
    %297 = vmatpush1.bf16.xpose.msra.mxu0 0
    %298 = vmatprep.subr.bf16.mxu0 0
    %299 = vmatpush1.bf16.xpose.msra.mxu0 0
    %300 = vmatprep.subr.bf16.mxu0 0
    %301 = vmatpush1.bf16.xpose.msra.mxu0 0
    %302 = vmatprep.subr.bf16.mxu0 0
    %303 = vmatpush1.bf16.xpose.msra.mxu0 0
    %304 = vmatprep.mubr.bf16.mxu0 0
    %305 = vmatmul.mubr.bf16.gmra.mrb[0].mxu0 %v267
    %v306 = vpop.f32.mrb[0].mxu0
    %v307 = vadd.f32 0.0, %v306
    %v308 = vpop.f32.mrb[0].mxu0
    %v309 = vpop.f32.mrb[0].mxu0
    %v310 = vpop.f32.mrb[0].mxu0
    %311 = vdwg.mxu0
    %313 = vrot.lane.b32.xlu0 %v199, 96
    %v314 = vpop.permute.xlu0 %313
    %v316 = vsel %vm216, %v199, 0
    %v319 = vsel %vm216, %v314, 0
    %321 = vmatprep.subr.bf16.mxu0 0
    %322 = vmatpush1.bf16.xpose.msra.mxu0 %v319
    %323 = vmatprep.subr.bf16.mxu0 0
    %324 = vmatpush1.bf16.xpose.msra.mxu0 0
    %325 = vmatprep.subr.bf16.mxu0 0
    %326 = vmatpush1.bf16.xpose.msra.mxu0 0
    %327 = vmatprep.subr.bf16.mxu0 0
    %328 = vmatpush1.bf16.xpose.msra.mxu0 0
    %329 = vmatprep.subr.bf16.mxu0 0
    %330 = vmatpush1.bf16.xpose.msra.mxu0 0
    %331 = vmatprep.subr.bf16.mxu0 0
    %332 = vmatpush1.bf16.xpose.msra.mxu0 0
    %333 = vmatprep.subr.bf16.mxu0 0
    %334 = vmatpush1.bf16.xpose.msra.mxu0 0
    %335 = vmatprep.subr.bf16.mxu0 0
    %336 = vmatpush1.bf16.xpose.msra.mxu0 0
    %337 = vmatprep.subr.bf16.mxu0 0
    %338 = vmatpush1.bf16.xpose.msra.mxu0 0
    %339 = vmatprep.subr.bf16.mxu0 0
    %340 = vmatpush1.bf16.xpose.msra.mxu0 0
    %341 = vmatprep.subr.bf16.mxu0 0
    %342 = vmatpush1.bf16.xpose.msra.mxu0 0
    %343 = vmatprep.subr.bf16.mxu0 0
    %344 = vmatpush1.bf16.xpose.msra.mxu0 0
    %345 = vmatprep.subr.bf16.mxu0 0
    %346 = vmatpush1.bf16.xpose.msra.mxu0 0
    %347 = vmatprep.subr.bf16.mxu0 0
    %348 = vmatpush1.bf16.xpose.msra.mxu0 0
    %349 = vmatprep.subr.bf16.mxu0 0
    %350 = vmatpush1.bf16.xpose.msra.mxu0 0
    %351 = vmatprep.subr.bf16.mxu0 0
    %352 = vmatpush1.bf16.xpose.msra.mxu0 0
    %353 = vmatprep.mubr.bf16.mxu0 0
    %354 = vmatmul.mubr.bf16.gmra.mrb[0].mxu0 %v316
    %v355 = vpop.f32.mrb[0].mxu0
    %v356 = vadd.f32 0.0, %v355
    %v357 = vpop.f32.mrb[0].mxu0
    %v358 = vpop.f32.mrb[0].mxu0
    %v359 = vpop.f32.mrb[0].mxu0
    %360 = vdwg.mxu0
    %362 = vrot.lane.b32.xlu0 %v200, 96
    %v363 = vpop.permute.xlu0 %362
    %v365 = vsel %vm216, %v200, 0
    %v368 = vsel %vm216, %v363, 0
    %370 = vmatprep.subr.bf16.mxu0 0
    %371 = vmatpush1.bf16.xpose.msra.mxu0 %v368
    %372 = vmatprep.subr.bf16.mxu0 0
    %373 = vmatpush1.bf16.xpose.msra.mxu0 0
    %374 = vmatprep.subr.bf16.mxu0 0
    %375 = vmatpush1.bf16.xpose.msra.mxu0 0
    %376 = vmatprep.subr.bf16.mxu0 0
    %377 = vmatpush1.bf16.xpose.msra.mxu0 0
    %378 = vmatprep.subr.bf16.mxu0 0
    %379 = vmatpush1.bf16.xpose.msra.mxu0 0
    %380 = vmatprep.subr.bf16.mxu0 0
    %381 = vmatpush1.bf16.xpose.msra.mxu0 0
    %382 = vmatprep.subr.bf16.mxu0 0
    %383 = vmatpush1.bf16.xpose.msra.mxu0 0
    %384 = vmatprep.subr.bf16.mxu0 0
    %385 = vmatpush1.bf16.xpose.msra.mxu0 0
    %386 = vmatprep.subr.bf16.mxu0 0
    %387 = vmatpush1.bf16.xpose.msra.mxu0 0
    %388 = vmatprep.subr.bf16.mxu0 0
    %389 = vmatpush1.bf16.xpose.msra.mxu0 0
    %390 = vmatprep.subr.bf16.mxu0 0
    %391 = vmatpush1.bf16.xpose.msra.mxu0 0
    %392 = vmatprep.subr.bf16.mxu0 0
    %393 = vmatpush1.bf16.xpose.msra.mxu0 0
    %394 = vmatprep.subr.bf16.mxu0 0
    %395 = vmatpush1.bf16.xpose.msra.mxu0 0
    %396 = vmatprep.subr.bf16.mxu0 0
    %397 = vmatpush1.bf16.xpose.msra.mxu0 0
    %398 = vmatprep.subr.bf16.mxu0 0
    %399 = vmatpush1.bf16.xpose.msra.mxu0 0
    %400 = vmatprep.subr.bf16.mxu0 0
    %401 = vmatpush1.bf16.xpose.msra.mxu0 0
    %402 = vmatprep.mubr.bf16.mxu0 0
    %403 = vmatmul.mubr.bf16.gmra.mrb[0].mxu0 %v365
    %v404 = vpop.f32.mrb[0].mxu0
    %v405 = vadd.f32 0.0, %v404
    %v406 = vpop.f32.mrb[0].mxu0
    %v407 = vpop.f32.mrb[0].mxu0
    %v408 = vpop.f32.mrb[0].mxu0
    %409 = vdwg.mxu0
    %411 = vrot.lane.b32.xlu0 %v201, 96
    %v412 = vpop.permute.xlu0 %411
    %v414 = vsel %vm216, %v201, 0
    %v417 = vsel %vm216, %v412, 0
    %419 = vmatprep.subr.bf16.mxu0 0
    %420 = vmatpush1.bf16.xpose.msra.mxu0 %v417
    %421 = vmatprep.subr.bf16.mxu0 0
    %422 = vmatpush1.bf16.xpose.msra.mxu0 0
    %423 = vmatprep.subr.bf16.mxu0 0
    %424 = vmatpush1.bf16.xpose.msra.mxu0 0
    %425 = vmatprep.subr.bf16.mxu0 0
    %426 = vmatpush1.bf16.xpose.msra.mxu0 0
    %427 = vmatprep.subr.bf16.mxu0 0
    %428 = vmatpush1.bf16.xpose.msra.mxu0 0
    %429 = vmatprep.subr.bf16.mxu0 0
    %430 = vmatpush1.bf16.xpose.msra.mxu0 0
    %431 = vmatprep.subr.bf16.mxu0 0
    %432 = vmatpush1.bf16.xpose.msra.mxu0 0
    %433 = vmatprep.subr.bf16.mxu0 0
    %434 = vmatpush1.bf16.xpose.msra.mxu0 0
    %435 = vmatprep.subr.bf16.mxu0 0
    %436 = vmatpush1.bf16.xpose.msra.mxu0 0
    %437 = vmatprep.subr.bf16.mxu0 0
    %438 = vmatpush1.bf16.xpose.msra.mxu0 0
    %439 = vmatprep.subr.bf16.mxu0 0
    %440 = vmatpush1.bf16.xpose.msra.mxu0 0
    %441 = vmatprep.subr.bf16.mxu0 0
    %442 = vmatpush1.bf16.xpose.msra.mxu0 0
    %443 = vmatprep.subr.bf16.mxu0 0
    %444 = vmatpush1.bf16.xpose.msra.mxu0 0
    %445 = vmatprep.subr.bf16.mxu0 0
    %446 = vmatpush1.bf16.xpose.msra.mxu0 0
    %447 = vmatprep.subr.bf16.mxu0 0
    %448 = vmatpush1.bf16.xpose.msra.mxu0 0
    %449 = vmatprep.subr.bf16.mxu0 0
    %450 = vmatpush1.bf16.xpose.msra.mxu0 0
    %451 = vmatprep.mubr.bf16.mxu0 0
    %452 = vmatmul.mubr.bf16.gmra.mrb[0].mxu0 %v414
    %v453 = vpop.f32.mrb[0].mxu0
    %v454 = vadd.f32 0.0, %v453
    %v455 = vpop.f32.mrb[0].mxu0
    %v456 = vpop.f32.mrb[0].mxu0
    %v457 = vpop.f32.mrb[0].mxu0
    %458 = vdwg.mxu0
    %460 = vrot.lane.b32.xlu0 %v202, 96
    %v461 = vpop.permute.xlu0 %460
    %v463 = vsel %vm216, %v202, 0
    %v466 = vsel %vm216, %v461, 0
    %468 = vmatprep.subr.bf16.mxu0 0
    %469 = vmatpush1.bf16.xpose.msra.mxu0 %v466
    %470 = vmatprep.subr.bf16.mxu0 0
    %471 = vmatpush1.bf16.xpose.msra.mxu0 0
    %472 = vmatprep.subr.bf16.mxu0 0
    %473 = vmatpush1.bf16.xpose.msra.mxu0 0
    %474 = vmatprep.subr.bf16.mxu0 0
    %475 = vmatpush1.bf16.xpose.msra.mxu0 0
    %476 = vmatprep.subr.bf16.mxu0 0
    %477 = vmatpush1.bf16.xpose.msra.mxu0 0
    %478 = vmatprep.subr.bf16.mxu0 0
    %479 = vmatpush1.bf16.xpose.msra.mxu0 0
    %480 = vmatprep.subr.bf16.mxu0 0
    %481 = vmatpush1.bf16.xpose.msra.mxu0 0
    %482 = vmatprep.subr.bf16.mxu0 0
    %483 = vmatpush1.bf16.xpose.msra.mxu0 0
    %484 = vmatprep.subr.bf16.mxu0 0
    %485 = vmatpush1.bf16.xpose.msra.mxu0 0
    %486 = vmatprep.subr.bf16.mxu0 0
    %487 = vmatpush1.bf16.xpose.msra.mxu0 0
    %488 = vmatprep.subr.bf16.mxu0 0
    %489 = vmatpush1.bf16.xpose.msra.mxu0 0
    %490 = vmatprep.subr.bf16.mxu0 0
    %491 = vmatpush1.bf16.xpose.msra.mxu0 0
    %492 = vmatprep.subr.bf16.mxu0 0
    %493 = vmatpush1.bf16.xpose.msra.mxu0 0
    %494 = vmatprep.subr.bf16.mxu0 0
    %495 = vmatpush1.bf16.xpose.msra.mxu0 0
    %496 = vmatprep.subr.bf16.mxu0 0
    %497 = vmatpush1.bf16.xpose.msra.mxu0 0
    %498 = vmatprep.subr.bf16.mxu0 0
    %499 = vmatpush1.bf16.xpose.msra.mxu0 0
    %500 = vmatprep.mubr.bf16.mxu0 0
    %501 = vmatmul.mubr.bf16.gmra.mrb[0].mxu0 %v463
    %v502 = vpop.f32.mrb[0].mxu0
    %v503 = vadd.f32 0.0, %v502
    %v504 = vpop.f32.mrb[0].mxu0
    %v505 = vpop.f32.mrb[0].mxu0
    %v506 = vpop.f32.mrb[0].mxu0
    %507 = vdwg.mxu0
    %509 = vrot.lane.b32.xlu0 %v203, 96
    %v510 = vpop.permute.xlu0 %509
    %v512 = vsel %vm216, %v203, 0
    %v515 = vsel %vm216, %v510, 0
    %517 = vmatprep.subr.bf16.mxu0 0
    %518 = vmatpush1.bf16.xpose.msra.mxu0 %v515
    %519 = vmatprep.subr.bf16.mxu0 0
    %520 = vmatpush1.bf16.xpose.msra.mxu0 0
    %521 = vmatprep.subr.bf16.mxu0 0
    %522 = vmatpush1.bf16.xpose.msra.mxu0 0
    %523 = vmatprep.subr.bf16.mxu0 0
    %524 = vmatpush1.bf16.xpose.msra.mxu0 0
    %525 = vmatprep.subr.bf16.mxu0 0
    %526 = vmatpush1.bf16.xpose.msra.mxu0 0
    %527 = vmatprep.subr.bf16.mxu0 0
    %528 = vmatpush1.bf16.xpose.msra.mxu0 0
    %529 = vmatprep.subr.bf16.mxu0 0
    %530 = vmatpush1.bf16.xpose.msra.mxu0 0
    %531 = vmatprep.subr.bf16.mxu0 0
    %532 = vmatpush1.bf16.xpose.msra.mxu0 0
    %533 = vmatprep.subr.bf16.mxu0 0
    %534 = vmatpush1.bf16.xpose.msra.mxu0 0
    %535 = vmatprep.subr.bf16.mxu0 0
    %536 = vmatpush1.bf16.xpose.msra.mxu0 0
    %537 = vmatprep.subr.bf16.mxu0 0
    %538 = vmatpush1.bf16.xpose.msra.mxu0 0
    %539 = vmatprep.subr.bf16.mxu0 0
    %540 = vmatpush1.bf16.xpose.msra.mxu0 0
    %541 = vmatprep.subr.bf16.mxu0 0
    %542 = vmatpush1.bf16.xpose.msra.mxu0 0
    %543 = vmatprep.subr.bf16.mxu0 0
    %544 = vmatpush1.bf16.xpose.msra.mxu0 0
    %545 = vmatprep.subr.bf16.mxu0 0
    %546 = vmatpush1.bf16.xpose.msra.mxu0 0
    %547 = vmatprep.subr.bf16.mxu0 0
    %548 = vmatpush1.bf16.xpose.msra.mxu0 0
    %549 = vmatprep.mubr.bf16.mxu0 0
    %550 = vmatmul.mubr.bf16.gmra.mrb[0].mxu0 %v512
    %v551 = vpop.f32.mrb[0].mxu0
    %v552 = vadd.f32 0.0, %v551
    %v553 = vpop.f32.mrb[0].mxu0
    %v554 = vpop.f32.mrb[0].mxu0
    %v555 = vpop.f32.mrb[0].mxu0
    %556 = vdwg.mxu0
    %558 = vrot.lane.b32.xlu0 %v204, 96
    %v559 = vpop.permute.xlu0 %558
    %v561 = vsel %vm216, %v204, 0
    %v564 = vsel %vm216, %v559, 0
    %566 = vmatprep.subr.bf16.mxu0 0
    %567 = vmatpush1.bf16.xpose.msra.mxu0 %v564
    %568 = vmatprep.subr.bf16.mxu0 0
    %569 = vmatpush1.bf16.xpose.msra.mxu0 0
    %570 = vmatprep.subr.bf16.mxu0 0
    %571 = vmatpush1.bf16.xpose.msra.mxu0 0
    %572 = vmatprep.subr.bf16.mxu0 0
    %573 = vmatpush1.bf16.xpose.msra.mxu0 0
    %574 = vmatprep.subr.bf16.mxu0 0
    %575 = vmatpush1.bf16.xpose.msra.mxu0 0
    %576 = vmatprep.subr.bf16.mxu0 0
    %577 = vmatpush1.bf16.xpose.msra.mxu0 0
    %578 = vmatprep.subr.bf16.mxu0 0
    %579 = vmatpush1.bf16.xpose.msra.mxu0 0
    %580 = vmatprep.subr.bf16.mxu0 0
    %581 = vmatpush1.bf16.xpose.msra.mxu0 0
    %582 = vmatprep.subr.bf16.mxu0 0
    %583 = vmatpush1.bf16.xpose.msra.mxu0 0
    %584 = vmatprep.subr.bf16.mxu0 0
    %585 = vmatpush1.bf16.xpose.msra.mxu0 0
    %586 = vmatprep.subr.bf16.mxu0 0
    %587 = vmatpush1.bf16.xpose.msra.mxu0 0
    %588 = vmatprep.subr.bf16.mxu0 0
    %589 = vmatpush1.bf16.xpose.msra.mxu0 0
    %590 = vmatprep.subr.bf16.mxu0 0
    %591 = vmatpush1.bf16.xpose.msra.mxu0 0
    %592 = vmatprep.subr.bf16.mxu0 0
    %593 = vmatpush1.bf16.xpose.msra.mxu0 0
    %594 = vmatprep.subr.bf16.mxu0 0
    %595 = vmatpush1.bf16.xpose.msra.mxu0 0
    %596 = vmatprep.subr.bf16.mxu0 0
    %597 = vmatpush1.bf16.xpose.msra.mxu0 0
    %598 = vmatprep.mubr.bf16.mxu0 0
    %599 = vmatmul.mubr.bf16.gmra.mrb[0].mxu0 %v561
    %v600 = vpop.f32.mrb[0].mxu0
    %v601 = vadd.f32 0.0, %v600
    %v602 = vpop.f32.mrb[0].mxu0
    %v603 = vpop.f32.mrb[0].mxu0
    %v604 = vpop.f32.mrb[0].mxu0
    %605 = vdwg.mxu0
    %607 = vrot.lane.b32.xlu0 %v205, 96
    %v608 = vpop.permute.xlu0 %607
    %v610 = vsel %vm216, %v205, 0
    %v613 = vsel %vm216, %v608, 0
    %615 = vmatprep.subr.bf16.mxu0 0
    %616 = vmatpush1.bf16.xpose.msra.mxu0 %v613
    %617 = vmatprep.subr.bf16.mxu0 0
    %618 = vmatpush1.bf16.xpose.msra.mxu0 0
    %619 = vmatprep.subr.bf16.mxu0 0
    %620 = vmatpush1.bf16.xpose.msra.mxu0 0
    %621 = vmatprep.subr.bf16.mxu0 0
    %622 = vmatpush1.bf16.xpose.msra.mxu0 0
    %623 = vmatprep.subr.bf16.mxu0 0
    %624 = vmatpush1.bf16.xpose.msra.mxu0 0
    %625 = vmatprep.subr.bf16.mxu0 0
    %626 = vmatpush1.bf16.xpose.msra.mxu0 0
    %627 = vmatprep.subr.bf16.mxu0 0
    %628 = vmatpush1.bf16.xpose.msra.mxu0 0
    %629 = vmatprep.subr.bf16.mxu0 0
    %630 = vmatpush1.bf16.xpose.msra.mxu0 0
    %631 = vmatprep.subr.bf16.mxu0 0
    %632 = vmatpush1.bf16.xpose.msra.mxu0 0
    %633 = vmatprep.subr.bf16.mxu0 0
    %634 = vmatpush1.bf16.xpose.msra.mxu0 0
    %635 = vmatprep.subr.bf16.mxu0 0
    %636 = vmatpush1.bf16.xpose.msra.mxu0 0
    %637 = vmatprep.subr.bf16.mxu0 0
    %638 = vmatpush1.bf16.xpose.msra.mxu0 0
    %639 = vmatprep.subr.bf16.mxu0 0
    %640 = vmatpush1.bf16.xpose.msra.mxu0 0
    %641 = vmatprep.subr.bf16.mxu0 0
    %642 = vmatpush1.bf16.xpose.msra.mxu0 0
    %643 = vmatprep.subr.bf16.mxu0 0
    %644 = vmatpush1.bf16.xpose.msra.mxu0 0
    %645 = vmatprep.subr.bf16.mxu0 0
    %646 = vmatpush1.bf16.xpose.msra.mxu0 0
    %647 = vmatprep.mubr.bf16.mxu0 0
    %648 = vmatmul.mubr.bf16.gmra.mrb[0].mxu0 %v610
    %v649 = vpop.f32.mrb[0].mxu0
    %v650 = vadd.f32 0.0, %v649
    %v651 = vpop.f32.mrb[0].mxu0
    %v652 = vpop.f32.mrb[0].mxu0
    %v653 = vpop.f32.mrb[0].mxu0
    %654 = vdwg.mxu0
    %656 = vrot.lane.b32.xlu0 %v206, 96
    %v657 = vpop.permute.xlu0 %656
    %v659 = vsel %vm216, %v206, 0
    %v662 = vsel %vm216, %v657, 0
    %664 = vmatprep.subr.bf16.mxu0 0
    %665 = vmatpush1.bf16.xpose.msra.mxu0 %v662
    %666 = vmatprep.subr.bf16.mxu0 0
    %667 = vmatpush1.bf16.xpose.msra.mxu0 0
    %668 = vmatprep.subr.bf16.mxu0 0
    %669 = vmatpush1.bf16.xpose.msra.mxu0 0
    %670 = vmatprep.subr.bf16.mxu0 0
    %671 = vmatpush1.bf16.xpose.msra.mxu0 0
    %672 = vmatprep.subr.bf16.mxu0 0
    %673 = vmatpush1.bf16.xpose.msra.mxu0 0
    %674 = vmatprep.subr.bf16.mxu0 0
    %675 = vmatpush1.bf16.xpose.msra.mxu0 0
    %676 = vmatprep.subr.bf16.mxu0 0
    %677 = vmatpush1.bf16.xpose.msra.mxu0 0
    %678 = vmatprep.subr.bf16.mxu0 0
    %679 = vmatpush1.bf16.xpose.msra.mxu0 0
    %680 = vmatprep.subr.bf16.mxu0 0
    %681 = vmatpush1.bf16.xpose.msra.mxu0 0
    %682 = vmatprep.subr.bf16.mxu0 0
    %683 = vmatpush1.bf16.xpose.msra.mxu0 0
    %684 = vmatprep.subr.bf16.mxu0 0
    %685 = vmatpush1.bf16.xpose.msra.mxu0 0
    %686 = vmatprep.subr.bf16.mxu0 0
    %687 = vmatpush1.bf16.xpose.msra.mxu0 0
    %688 = vmatprep.subr.bf16.mxu0 0
    %689 = vmatpush1.bf16.xpose.msra.mxu0 0
    %690 = vmatprep.subr.bf16.mxu0 0
    %691 = vmatpush1.bf16.xpose.msra.mxu0 0
    %692 = vmatprep.subr.bf16.mxu0 0
    %693 = vmatpush1.bf16.xpose.msra.mxu0 0
    %694 = vmatprep.subr.bf16.mxu0 0
    %695 = vmatpush1.bf16.xpose.msra.mxu0 0
    %696 = vmatprep.mubr.bf16.mxu0 0
    %697 = vmatmul.mubr.bf16.gmra.mrb[0].mxu0 %v659
    %v698 = vpop.f32.mrb[0].mxu0
    %v699 = vadd.f32 0.0, %v698
    %v700 = vpop.f32.mrb[0].mxu0
    %v701 = vpop.f32.mrb[0].mxu0
    %v702 = vpop.f32.mrb[0].mxu0
    %703 = vdwg.mxu0
    %705 = vrot.lane.b32.xlu0 %v207, 96
    %v706 = vpop.permute.xlu0 %705
    %v708 = vsel %vm216, %v207, 0
    %v711 = vsel %vm216, %v706, 0
    %713 = vmatprep.subr.bf16.mxu0 0
    %714 = vmatpush1.bf16.xpose.msra.mxu0 %v711
    %715 = vmatprep.subr.bf16.mxu0 0
    %716 = vmatpush1.bf16.xpose.msra.mxu0 0
    %717 = vmatprep.subr.bf16.mxu0 0
    %718 = vmatpush1.bf16.xpose.msra.mxu0 0
    %719 = vmatprep.subr.bf16.mxu0 0
    %720 = vmatpush1.bf16.xpose.msra.mxu0 0
    %721 = vmatprep.subr.bf16.mxu0 0
    %722 = vmatpush1.bf16.xpose.msra.mxu0 0
    %723 = vmatprep.subr.bf16.mxu0 0
    %724 = vmatpush1.bf16.xpose.msra.mxu0 0
    %725 = vmatprep.subr.bf16.mxu0 0
    %726 = vmatpush1.bf16.xpose.msra.mxu0 0
    %727 = vmatprep.subr.bf16.mxu0 0
    %728 = vmatpush1.bf16.xpose.msra.mxu0 0
    %729 = vmatprep.subr.bf16.mxu0 0
    %730 = vmatpush1.bf16.xpose.msra.mxu0 0
    %731 = vmatprep.subr.bf16.mxu0 0
    %732 = vmatpush1.bf16.xpose.msra.mxu0 0
    %733 = vmatprep.subr.bf16.mxu0 0
    %734 = vmatpush1.bf16.xpose.msra.mxu0 0
    %735 = vmatprep.subr.bf16.mxu0 0
    %736 = vmatpush1.bf16.xpose.msra.mxu0 0
    %737 = vmatprep.subr.bf16.mxu0 0
    %738 = vmatpush1.bf16.xpose.msra.mxu0 0
    %739 = vmatprep.subr.bf16.mxu0 0
    %740 = vmatpush1.bf16.xpose.msra.mxu0 0
    %741 = vmatprep.subr.bf16.mxu0 0
    %742 = vmatpush1.bf16.xpose.msra.mxu0 0
    %743 = vmatprep.subr.bf16.mxu0 0
    %744 = vmatpush1.bf16.xpose.msra.mxu0 0
    %745 = vmatprep.mubr.bf16.mxu0 0
    %746 = vmatmul.mubr.bf16.gmra.mrb[0].mxu0 %v708
    %v747 = vpop.f32.mrb[0].mxu0
    %v748 = vadd.f32 0.0, %v747
    %v749 = vpop.f32.mrb[0].mxu0
    %v750 = vpop.f32.mrb[0].mxu0
    %v751 = vpop.f32.mrb[0].mxu0
    %752 = vdwg.mxu0
    %754 = vrot.lane.b32.xlu0 %v208, 96
    %v755 = vpop.permute.xlu0 %754
    %v757 = vsel %vm216, %v208, 0
    %v760 = vsel %vm216, %v755, 0
    %762 = vmatprep.subr.bf16.mxu0 0
    %763 = vmatpush1.bf16.xpose.msra.mxu0 %v760
    %764 = vmatprep.subr.bf16.mxu0 0
    %765 = vmatpush1.bf16.xpose.msra.mxu0 0
    %766 = vmatprep.subr.bf16.mxu0 0
    %767 = vmatpush1.bf16.xpose.msra.mxu0 0
    %768 = vmatprep.subr.bf16.mxu0 0
    %769 = vmatpush1.bf16.xpose.msra.mxu0 0
    %770 = vmatprep.subr.bf16.mxu0 0
    %771 = vmatpush1.bf16.xpose.msra.mxu0 0
    %772 = vmatprep.subr.bf16.mxu0 0
    %773 = vmatpush1.bf16.xpose.msra.mxu0 0
    %774 = vmatprep.subr.bf16.mxu0 0
    %775 = vmatpush1.bf16.xpose.msra.mxu0 0
    %776 = vmatprep.subr.bf16.mxu0 0
    %777 = vmatpush1.bf16.xpose.msra.mxu0 0
    %778 = vmatprep.subr.bf16.mxu0 0
    %779 = vmatpush1.bf16.xpose.msra.mxu0 0
    %780 = vmatprep.subr.bf16.mxu0 0
    %781 = vmatpush1.bf16.xpose.msra.mxu0 0
    %782 = vmatprep.subr.bf16.mxu0 0
    %783 = vmatpush1.bf16.xpose.msra.mxu0 0
    %784 = vmatprep.subr.bf16.mxu0 0
    %785 = vmatpush1.bf16.xpose.msra.mxu0 0
    %786 = vmatprep.subr.bf16.mxu0 0
    %787 = vmatpush1.bf16.xpose.msra.mxu0 0
    %788 = vmatprep.subr.bf16.mxu0 0
    %789 = vmatpush1.bf16.xpose.msra.mxu0 0
    %790 = vmatprep.subr.bf16.mxu0 0
    %791 = vmatpush1.bf16.xpose.msra.mxu0 0
    %792 = vmatprep.subr.bf16.mxu0 0
    %793 = vmatpush1.bf16.xpose.msra.mxu0 0
    %794 = vmatprep.mubr.bf16.mxu0 0
    %795 = vmatmul.mubr.bf16.gmra.mrb[0].mxu0 %v757
    %v796 = vpop.f32.mrb[0].mxu0
    %v797 = vadd.f32 0.0, %v796
    %v798 = vpop.f32.mrb[0].mxu0
    %v799 = vpop.f32.mrb[0].mxu0
    %v800 = vpop.f32.mrb[0].mxu0
    %801 = vdwg.mxu0
    %803 = vrot.lane.b32.xlu0 %v209, 96
    %v804 = vpop.permute.xlu0 %803
    %v806 = vsel %vm216, %v209, 0
    %v809 = vsel %vm216, %v804, 0
    %811 = vmatprep.subr.bf16.mxu0 0
    %812 = vmatpush1.bf16.xpose.msra.mxu0 %v809
    %813 = vmatprep.subr.bf16.mxu0 0
    %814 = vmatpush1.bf16.xpose.msra.mxu0 0
    %815 = vmatprep.subr.bf16.mxu0 0
    %816 = vmatpush1.bf16.xpose.msra.mxu0 0
    %817 = vmatprep.subr.bf16.mxu0 0
    %818 = vmatpush1.bf16.xpose.msra.mxu0 0
    %819 = vmatprep.subr.bf16.mxu0 0
    %820 = vmatpush1.bf16.xpose.msra.mxu0 0
    %821 = vmatprep.subr.bf16.mxu0 0
    %822 = vmatpush1.bf16.xpose.msra.mxu0 0
    %823 = vmatprep.subr.bf16.mxu0 0
    %824 = vmatpush1.bf16.xpose.msra.mxu0 0
    %825 = vmatprep.subr.bf16.mxu0 0
    %826 = vmatpush1.bf16.xpose.msra.mxu0 0
    %827 = vmatprep.subr.bf16.mxu0 0
    %828 = vmatpush1.bf16.xpose.msra.mxu0 0
    %829 = vmatprep.subr.bf16.mxu0 0
    %830 = vmatpush1.bf16.xpose.msra.mxu0 0
    %831 = vmatprep.subr.bf16.mxu0 0
    %832 = vmatpush1.bf16.xpose.msra.mxu0 0
    %833 = vmatprep.subr.bf16.mxu0 0
    %834 = vmatpush1.bf16.xpose.msra.mxu0 0
    %835 = vmatprep.subr.bf16.mxu0 0
    %836 = vmatpush1.bf16.xpose.msra.mxu0 0
    %837 = vmatprep.subr.bf16.mxu0 0
    %838 = vmatpush1.bf16.xpose.msra.mxu0 0
    %839 = vmatprep.subr.bf16.mxu0 0
    %840 = vmatpush1.bf16.xpose.msra.mxu0 0
    %841 = vmatprep.subr.bf16.mxu0 0
    %842 = vmatpush1.bf16.xpose.msra.mxu0 0
    %843 = vmatprep.mubr.bf16.mxu0 0
    %844 = vmatmul.mubr.bf16.gmra.mrb[0].mxu0 %v806
    %v845 = vpop.f32.mrb[0].mxu0
    %v846 = vadd.f32 0.0, %v845
    %v847 = vpop.f32.mrb[0].mxu0
    %v848 = vpop.f32.mrb[0].mxu0
    %v849 = vpop.f32.mrb[0].mxu0
    %850 = vdwg.mxu0
    %852 = vrot.lane.b32.xlu0 %v210, 96
    %v853 = vpop.permute.xlu0 %852
    %v855 = vsel %vm216, %v210, 0
    %v858 = vsel %vm216, %v853, 0
    %860 = vmatprep.subr.bf16.mxu0 0
    %861 = vmatpush1.bf16.xpose.msra.mxu0 %v858
    %862 = vmatprep.subr.bf16.mxu0 0
    %863 = vmatpush1.bf16.xpose.msra.mxu0 0
    %864 = vmatprep.subr.bf16.mxu0 0
    %865 = vmatpush1.bf16.xpose.msra.mxu0 0
    %866 = vmatprep.subr.bf16.mxu0 0
    %867 = vmatpush1.bf16.xpose.msra.mxu0 0
    %868 = vmatprep.subr.bf16.mxu0 0
    %869 = vmatpush1.bf16.xpose.msra.mxu0 0
    %870 = vmatprep.subr.bf16.mxu0 0
    %871 = vmatpush1.bf16.xpose.msra.mxu0 0
    %872 = vmatprep.subr.bf16.mxu0 0
    %873 = vmatpush1.bf16.xpose.msra.mxu0 0
    %874 = vmatprep.subr.bf16.mxu0 0
    %875 = vmatpush1.bf16.xpose.msra.mxu0 0
    %876 = vmatprep.subr.bf16.mxu0 0
    %877 = vmatpush1.bf16.xpose.msra.mxu0 0
    %878 = vmatprep.subr.bf16.mxu0 0
    %879 = vmatpush1.bf16.xpose.msra.mxu0 0
    %880 = vmatprep.subr.bf16.mxu0 0
    %881 = vmatpush1.bf16.xpose.msra.mxu0 0
    %882 = vmatprep.subr.bf16.mxu0 0
    %883 = vmatpush1.bf16.xpose.msra.mxu0 0
    %884 = vmatprep.subr.bf16.mxu0 0
    %885 = vmatpush1.bf16.xpose.msra.mxu0 0
    %886 = vmatprep.subr.bf16.mxu0 0
    %887 = vmatpush1.bf16.xpose.msra.mxu0 0
    %888 = vmatprep.subr.bf16.mxu0 0
    %889 = vmatpush1.bf16.xpose.msra.mxu0 0
    %890 = vmatprep.subr.bf16.mxu0 0
    %891 = vmatpush1.bf16.xpose.msra.mxu0 0
    %892 = vmatprep.mubr.bf16.mxu0 0
    %893 = vmatmul.mubr.bf16.gmra.mrb[0].mxu0 %v855
    %v894 = vpop.f32.mrb[0].mxu0
    %v895 = vadd.f32 0.0, %v894
    %v896 = vpop.f32.mrb[0].mxu0
    %v897 = vpop.f32.mrb[0].mxu0
    %v898 = vpop.f32.mrb[0].mxu0
    %899 = vdwg.mxu0
    %901 = vrot.lane.b32.xlu0 %v211, 96
    %v902 = vpop.permute.xlu0 %901
    %v904 = vsel %vm216, %v211, 0
    %v907 = vsel %vm216, %v902, 0
    %909 = vmatprep.subr.bf16.mxu0 0
    %910 = vmatpush1.bf16.xpose.msra.mxu0 %v907
    %911 = vmatprep.subr.bf16.mxu0 0
    %912 = vmatpush1.bf16.xpose.msra.mxu0 0
    %913 = vmatprep.subr.bf16.mxu0 0
    %914 = vmatpush1.bf16.xpose.msra.mxu0 0
    %915 = vmatprep.subr.bf16.mxu0 0
    %916 = vmatpush1.bf16.xpose.msra.mxu0 0
    %917 = vmatprep.subr.bf16.mxu0 0
    %918 = vmatpush1.bf16.xpose.msra.mxu0 0
    %919 = vmatprep.subr.bf16.mxu0 0
    %920 = vmatpush1.bf16.xpose.msra.mxu0 0
    %921 = vmatprep.subr.bf16.mxu0 0
    %922 = vmatpush1.bf16.xpose.msra.mxu0 0
    %923 = vmatprep.subr.bf16.mxu0 0
    %924 = vmatpush1.bf16.xpose.msra.mxu0 0
    %925 = vmatprep.subr.bf16.mxu0 0
    %926 = vmatpush1.bf16.xpose.msra.mxu0 0
    %927 = vmatprep.subr.bf16.mxu0 0
    %928 = vmatpush1.bf16.xpose.msra.mxu0 0
    %929 = vmatprep.subr.bf16.mxu0 0
    %930 = vmatpush1.bf16.xpose.msra.mxu0 0
    %931 = vmatprep.subr.bf16.mxu0 0
    %932 = vmatpush1.bf16.xpose.msra.mxu0 0
    %933 = vmatprep.subr.bf16.mxu0 0
    %934 = vmatpush1.bf16.xpose.msra.mxu0 0
    %935 = vmatprep.subr.bf16.mxu0 0
    %936 = vmatpush1.bf16.xpose.msra.mxu0 0
    %937 = vmatprep.subr.bf16.mxu0 0
    %938 = vmatpush1.bf16.xpose.msra.mxu0 0
    %939 = vmatprep.subr.bf16.mxu0 0
    %940 = vmatpush1.bf16.xpose.msra.mxu0 0
    %941 = vmatprep.mubr.bf16.mxu0 0
    %942 = vmatmul.mubr.bf16.gmra.mrb[0].mxu0 %v904
    %v943 = vpop.f32.mrb[0].mxu0
    %v944 = vadd.f32 0.0, %v943
    %v945 = vpop.f32.mrb[0].mxu0
    %v946 = vpop.f32.mrb[0].mxu0
    %v947 = vpop.f32.mrb[0].mxu0
    %948 = vdwg.mxu0
    %950 = vrot.lane.b32.xlu0 %v212, 96
    %v951 = vpop.permute.xlu0 %950
    %v953 = vsel %vm216, %v212, 0
    %v956 = vsel %vm216, %v951, 0
    %958 = vmatprep.subr.bf16.mxu0 0
    %959 = vmatpush1.bf16.xpose.msra.mxu0 %v956
    %960 = vmatprep.subr.bf16.mxu0 0
    %961 = vmatpush1.bf16.xpose.msra.mxu0 0
    %962 = vmatprep.subr.bf16.mxu0 0
    %963 = vmatpush1.bf16.xpose.msra.mxu0 0
    %964 = vmatprep.subr.bf16.mxu0 0
    %965 = vmatpush1.bf16.xpose.msra.mxu0 0
    %966 = vmatprep.subr.bf16.mxu0 0
    %967 = vmatpush1.bf16.xpose.msra.mxu0 0
    %968 = vmatprep.subr.bf16.mxu0 0
    %969 = vmatpush1.bf16.xpose.msra.mxu0 0
    %970 = vmatprep.subr.bf16.mxu0 0
    %971 = vmatpush1.bf16.xpose.msra.mxu0 0
    %972 = vmatprep.subr.bf16.mxu0 0
    %973 = vmatpush1.bf16.xpose.msra.mxu0 0
    %974 = vmatprep.subr.bf16.mxu0 0
    %975 = vmatpush1.bf16.xpose.msra.mxu0 0
    %976 = vmatprep.subr.bf16.mxu0 0
    %977 = vmatpush1.bf16.xpose.msra.mxu0 0
    %978 = vmatprep.subr.bf16.mxu0 0
    %979 = vmatpush1.bf16.xpose.msra.mxu0 0
    %980 = vmatprep.subr.bf16.mxu0 0
    %981 = vmatpush1.bf16.xpose.msra.mxu0 0
    %982 = vmatprep.subr.bf16.mxu0 0
    %983 = vmatpush1.bf16.xpose.msra.mxu0 0
    %984 = vmatprep.subr.bf16.mxu0 0
    %985 = vmatpush1.bf16.xpose.msra.mxu0 0
    %986 = vmatprep.subr.bf16.mxu0 0
    %987 = vmatpush1.bf16.xpose.msra.mxu0 0
    %988 = vmatprep.subr.bf16.mxu0 0
    %989 = vmatpush1.bf16.xpose.msra.mxu0 0
    %990 = vmatprep.mubr.bf16.mxu0 0
    %991 = vmatmul.mubr.bf16.gmra.mrb[0].mxu0 %v953
    %v992 = vpop.f32.mrb[0].mxu0
    %v993 = vadd.f32 0.0, %v992
    %v994 = vpop.f32.mrb[0].mxu0
    %v995 = vpop.f32.mrb[0].mxu0
    %v996 = vpop.f32.mrb[0].mxu0
    %997 = vdwg.mxu0
    %v998 = vsel %vm216, %v258, -inf
    %999 = vmax.xlane.f32.xlu0 %v998
    %v1000 = vpop.xlane.xlu0 %999
    %v1001 = vsel %vm216, %v307, -inf
    %1002 = vmax.xlane.f32.xlu0 %v1001
    %v1003 = vpop.xlane.xlu0 %1002
    %v1004 = vsel %vm216, %v356, -inf
    %1005 = vmax.xlane.f32.xlu0 %v1004
    %v1006 = vpop.xlane.xlu0 %1005
    %v1007 = vsel %vm216, %v405, -inf
    %1008 = vmax.xlane.f32.xlu0 %v1007
    %v1009 = vpop.xlane.xlu0 %1008
    %v1010 = vsel %vm216, %v454, -inf
    %1011 = vmax.xlane.f32.xlu0 %v1010
    %v1012 = vpop.xlane.xlu0 %1011
    %v1013 = vsel %vm216, %v503, -inf
    %1014 = vmax.xlane.f32.xlu0 %v1013
    %v1015 = vpop.xlane.xlu0 %1014
    %v1016 = vsel %vm216, %v552, -inf
    %1017 = vmax.xlane.f32.xlu0 %v1016
    %v1018 = vpop.xlane.xlu0 %1017
    %v1019 = vsel %vm216, %v601, -inf
    %1020 = vmax.xlane.f32.xlu0 %v1019
    %v1021 = vpop.xlane.xlu0 %1020
    %v1022 = vsel %vm216, %v650, -inf
    %1023 = vmax.xlane.f32.xlu0 %v1022
    %v1024 = vpop.xlane.xlu0 %1023
    %v1025 = vsel %vm216, %v699, -inf
    %1026 = vmax.xlane.f32.xlu0 %v1025
    %v1027 = vpop.xlane.xlu0 %1026
    %v1028 = vsel %vm216, %v748, -inf
    %1029 = vmax.xlane.f32.xlu0 %v1028
    %v1030 = vpop.xlane.xlu0 %1029
    %v1031 = vsel %vm216, %v797, -inf
    %1032 = vmax.xlane.f32.xlu0 %v1031
    %v1033 = vpop.xlane.xlu0 %1032
    %v1034 = vsel %vm216, %v846, -inf
    %1035 = vmax.xlane.f32.xlu0 %v1034
    %v1036 = vpop.xlane.xlu0 %1035
    %v1037 = vsel %vm216, %v895, -inf
    %1038 = vmax.xlane.f32.xlu0 %v1037
    %v1039 = vpop.xlane.xlu0 %1038
    %v1040 = vsel %vm216, %v944, -inf
    %1041 = vmax.xlane.f32.xlu0 %v1040
    %v1042 = vpop.xlane.xlu0 %1041
    %v1043 = vsel %vm216, %v993, -inf
    %1044 = vmax.xlane.f32.xlu0 %v1043
    %v1045 = vpop.xlane.xlu0 %1044
    %v1046 = vsub.f32 %v258, %v1000
    %v1047 = vsub.f32 %v307, %v1003
    %v1048 = vsub.f32 %v356, %v1006
    %v1049 = vsub.f32 %v405, %v1009
    %v1050 = vsub.f32 %v454, %v1012
    %v1051 = vsub.f32 %v503, %v1015
    %v1052 = vsub.f32 %v552, %v1018
    %v1053 = vsub.f32 %v601, %v1021
    %v1054 = vsub.f32 %v650, %v1024
    %v1055 = vsub.f32 %v699, %v1027
    %v1056 = vsub.f32 %v748, %v1030
    %v1057 = vsub.f32 %v797, %v1033
    %v1058 = vsub.f32 %v846, %v1036
    %v1059 = vsub.f32 %v895, %v1039
    %v1060 = vsub.f32 %v944, %v1042
    %v1061 = vsub.f32 %v993, %v1045
    %v1062 = vmul.f32 %v1046, 1.442695
    %v1063 = vpow.pop %v1062
    %v1064 = vmul.f32 %v1047, 1.442695
    %v1065 = vpow.pop %v1064
    %v1066 = vmul.f32 %v1048, 1.442695
    %v1067 = vpow.pop %v1066
    %v1068 = vmul.f32 %v1049, 1.442695
    %v1069 = vpow.pop %v1068
    %v1070 = vmul.f32 %v1050, 1.442695
    %v1071 = vpow.pop %v1070
    %v1072 = vmul.f32 %v1051, 1.442695
    %v1073 = vpow.pop %v1072
    %v1074 = vmul.f32 %v1052, 1.442695
    %v1075 = vpow.pop %v1074
    %v1076 = vmul.f32 %v1053, 1.442695
    %v1077 = vpow.pop %v1076
    %v1078 = vmul.f32 %v1054, 1.442695
    %v1079 = vpow.pop %v1078
    %v1080 = vmul.f32 %v1055, 1.442695
    %v1081 = vpow.pop %v1080
    %v1082 = vmul.f32 %v1056, 1.442695
    %v1083 = vpow.pop %v1082
    %v1084 = vmul.f32 %v1057, 1.442695
    %v1085 = vpow.pop %v1084
    %v1086 = vmul.f32 %v1058, 1.442695
    %v1087 = vpow.pop %v1086
    %v1088 = vmul.f32 %v1059, 1.442695
    %v1089 = vpow.pop %v1088
    %v1090 = vmul.f32 %v1060, 1.442695
    %v1091 = vpow.pop %v1090
    %v1092 = vmul.f32 %v1061, 1.442695
    %v1093 = vpow.pop %v1092
    %v1094 = vsel %vm216, %v1063, 0.0
    %1095 = vadd.xlane.f32.xlu0 %v1094
    %v1096 = vpop.xlane.xlu0 %1095
    %v1097 = vsel %vm216, %v1065, 0.0
    %1098 = vadd.xlane.f32.xlu0 %v1097
    %v1099 = vpop.xlane.xlu0 %1098
    %v1100 = vsel %vm216, %v1067, 0.0
    %1101 = vadd.xlane.f32.xlu0 %v1100
    %v1102 = vpop.xlane.xlu0 %1101
    %v1103 = vsel %vm216, %v1069, 0.0
    %1104 = vadd.xlane.f32.xlu0 %v1103
    %v1105 = vpop.xlane.xlu0 %1104
    %v1106 = vsel %vm216, %v1071, 0.0
    %1107 = vadd.xlane.f32.xlu0 %v1106
    %v1108 = vpop.xlane.xlu0 %1107
    %v1109 = vsel %vm216, %v1073, 0.0
    %1110 = vadd.xlane.f32.xlu0 %v1109
    %v1111 = vpop.xlane.xlu0 %1110
    %v1112 = vsel %vm216, %v1075, 0.0
    %1113 = vadd.xlane.f32.xlu0 %v1112
    %v1114 = vpop.xlane.xlu0 %1113
    %v1115 = vsel %vm216, %v1077, 0.0
    %1116 = vadd.xlane.f32.xlu0 %v1115
    %v1117 = vpop.xlane.xlu0 %1116
    %v1118 = vsel %vm216, %v1079, 0.0
    %1119 = vadd.xlane.f32.xlu0 %v1118
    %v1120 = vpop.xlane.xlu0 %1119
    %v1121 = vsel %vm216, %v1081, 0.0
    %1122 = vadd.xlane.f32.xlu0 %v1121
    %v1123 = vpop.xlane.xlu0 %1122
    %v1124 = vsel %vm216, %v1083, 0.0
    %1125 = vadd.xlane.f32.xlu0 %v1124
    %v1126 = vpop.xlane.xlu0 %1125
    %v1127 = vsel %vm216, %v1085, 0.0
    %1128 = vadd.xlane.f32.xlu0 %v1127
    %v1129 = vpop.xlane.xlu0 %1128
    %v1130 = vsel %vm216, %v1087, 0.0
    %1131 = vadd.xlane.f32.xlu0 %v1130
    %v1132 = vpop.xlane.xlu0 %1131
    %v1133 = vsel %vm216, %v1089, 0.0
    %1134 = vadd.xlane.f32.xlu0 %v1133
    %v1135 = vpop.xlane.xlu0 %1134
    %v1136 = vsel %vm216, %v1091, 0.0
    %1137 = vadd.xlane.f32.xlu0 %v1136
    %v1138 = vpop.xlane.xlu0 %1137
    %v1139 = vsel %vm216, %v1093, 0.0
    %1140 = vadd.xlane.f32.xlu0 %v1139
    %v1141 = vpop.xlane.xlu0 %1140
    %v1142 = vrcp.pop %v1096
    %v1143 = vrcp.pop %v1099
    %v1144 = vrcp.pop %v1102
    %v1145 = vrcp.pop %v1105
    %v1146 = vrcp.pop %v1108
    %v1147 = vrcp.pop %v1111
    %v1148 = vrcp.pop %v1114
    %v1149 = vrcp.pop %v1117
    %v1150 = vrcp.pop %v1120
    %v1151 = vrcp.pop %v1123
    %v1152 = vrcp.pop %v1126
    %v1153 = vrcp.pop %v1129
    %v1154 = vrcp.pop %v1132
    %v1155 = vrcp.pop %v1135
    %v1156 = vrcp.pop %v1138
    %v1157 = vrcp.pop %v1141
    %v1158 = vmul.f32 %v1096, %v1142
    %v1159 = vmul.f32 %v1099, %v1143
    %v1160 = vmul.f32 %v1102, %v1144
    %v1161 = vmul.f32 %v1105, %v1145
    %v1162 = vmul.f32 %v1108, %v1146
    %v1163 = vmul.f32 %v1111, %v1147
    %v1164 = vmul.f32 %v1114, %v1148
    %v1165 = vmul.f32 %v1117, %v1149
    %v1166 = vmul.f32 %v1120, %v1150
    %v1167 = vmul.f32 %v1123, %v1151
    %v1168 = vmul.f32 %v1126, %v1152
    %v1169 = vmul.f32 %v1129, %v1153
    %v1170 = vmul.f32 %v1132, %v1154
    %v1171 = vmul.f32 %v1135, %v1155
    %v1172 = vmul.f32 %v1138, %v1156
    %v1173 = vmul.f32 %v1141, %v1157
    %v1174 = vsub.f32 2.0, %v1158
    %v1175 = vsub.f32 2.0, %v1159
    %v1176 = vsub.f32 2.0, %v1160
    %v1177 = vsub.f32 2.0, %v1161
    %v1178 = vsub.f32 2.0, %v1162
    %v1179 = vsub.f32 2.0, %v1163
    %v1180 = vsub.f32 2.0, %v1164
    %v1181 = vsub.f32 2.0, %v1165
    %v1182 = vsub.f32 2.0, %v1166
    %v1183 = vsub.f32 2.0, %v1167
    %v1184 = vsub.f32 2.0, %v1168
    %v1185 = vsub.f32 2.0, %v1169
    %v1186 = vsub.f32 2.0, %v1170
    %v1187 = vsub.f32 2.0, %v1171
    %v1188 = vsub.f32 2.0, %v1172
    %v1189 = vsub.f32 2.0, %v1173
    %v1190 = vmul.f32 %v1142, %v1174
    %v1191 = vmul.f32 %v1143, %v1175
    %v1192 = vmul.f32 %v1144, %v1176
    %v1193 = vmul.f32 %v1145, %v1177
    %v1194 = vmul.f32 %v1146, %v1178
    %v1195 = vmul.f32 %v1147, %v1179
    %v1196 = vmul.f32 %v1148, %v1180
    %v1197 = vmul.f32 %v1149, %v1181
    %v1198 = vmul.f32 %v1150, %v1182
    %v1199 = vmul.f32 %v1151, %v1183
    %v1200 = vmul.f32 %v1152, %v1184
    %v1201 = vmul.f32 %v1153, %v1185
    %v1202 = vmul.f32 %v1154, %v1186
    %v1203 = vmul.f32 %v1155, %v1187
    %v1204 = vmul.f32 %v1156, %v1188
    %v1205 = vmul.f32 %v1157, %v1189
    %v1206 = vmul.f32 %v1063, %v1190
    %v1207 = vmul.f32 %v1065, %v1191
    %v1208 = vmul.f32 %v1067, %v1192
    %v1209 = vmul.f32 %v1069, %v1193
    %v1210 = vmul.f32 %v1071, %v1194
    %v1211 = vmul.f32 %v1073, %v1195
    %v1212 = vmul.f32 %v1075, %v1196
    %v1213 = vmul.f32 %v1077, %v1197
    %v1214 = vmul.f32 %v1079, %v1198
    %v1215 = vmul.f32 %v1081, %v1199
    %v1216 = vmul.f32 %v1083, %v1200
    %v1217 = vmul.f32 %v1085, %v1201
    %v1218 = vmul.f32 %v1087, %v1202
    %v1219 = vmul.f32 %v1089, %v1203
    %v1220 = vmul.f32 %v1091, %v1204
    %v1221 = vmul.f32 %v1093, %v1205
    %v1222 = vsel %vm216, %v1206, 0.0
    %v1223 = vsel %vm216, %v1210, 0.0
    %v1224 = vadd.f32 %v1222, %v1223
    %v1225 = vsel %vm216, %v1214, 0.0
    %v1226 = vadd.f32 %v1224, %v1225
    %v1227 = vsel %vm216, %v1218, 0.0
    %v1228 = vadd.f32 %v1226, %v1227
    %v1229 = vsel %vm216, %v1207, 0.0
    %v1230 = vsel %vm216, %v1211, 0.0
    %v1231 = vadd.f32 %v1229, %v1230
    %v1232 = vsel %vm216, %v1215, 0.0
    %v1233 = vadd.f32 %v1231, %v1232
    %v1234 = vsel %vm216, %v1219, 0.0
    %v1235 = vadd.f32 %v1233, %v1234
    %v1236 = vsel %vm216, %v1208, 0.0
    %v1237 = vsel %vm216, %v1212, 0.0
    %v1238 = vadd.f32 %v1236, %v1237
    %v1239 = vsel %vm216, %v1216, 0.0
    %v1240 = vadd.f32 %v1238, %v1239
    %v1241 = vsel %vm216, %v1220, 0.0
    %v1242 = vadd.f32 %v1240, %v1241
    %v1243 = vsel %vm216, %v1209, 0.0
    %v1244 = vsel %vm216, %v1213, 0.0
    %v1245 = vadd.f32 %v1243, %v1244
    %v1246 = vsel %vm216, %v1217, 0.0
    %v1247 = vadd.f32 %v1245, %v1246
    %v1248 = vsel %vm216, %v1221, 0.0
    %v1249 = vadd.f32 %v1247, %v1248
    %v1250 = vmul.f32 %v1228, 0.25
    %v1251 = vmul.f32 %v1235, 0.25
    %v1252 = vmul.f32 %v1242, 0.25
    %v1253 = vmul.f32 %v1249, 0.25
    %v1254 = vpack.c.bf16 %v1206, %v1206
    %v1255 = vpack.c.bf16 %v1207, %v1207
    %v1256 = vpack.c.bf16 %v1208, %v1208
    %v1257 = vpack.c.bf16 %v1209, %v1209
    %v1258 = vpack.c.bf16 %v1210, %v1210
    %v1259 = vpack.c.bf16 %v1211, %v1211
    %v1260 = vpack.c.bf16 %v1212, %v1212
    %v1261 = vpack.c.bf16 %v1213, %v1213
    %v1262 = vpack.c.bf16 %v1214, %v1214
    %v1263 = vpack.c.bf16 %v1215, %v1215
    %v1264 = vpack.c.bf16 %v1216, %v1216
    %v1265 = vpack.c.bf16 %v1217, %v1217
    %v1266 = vpack.c.bf16 %v1218, %v1218
    %v1267 = vpack.c.bf16 %v1219, %v1219
    %v1268 = vpack.c.bf16 %v1220, %v1220
    %v1269 = vpack.c.bf16 %v1221, %v1221
    %1270 = vrot.lane.b32.xlu0 %v197, 64
    %v1271 = vpop.permute.xlu0 %1270
    %v1273 = vsel %vm216, %v1254, 0
    %vm1275 = vcmask 1043456
    %v1277 = vsel %vm1275, %v1271, 0
    %1279 = vmatprep.subr.bf16.mxu0 0
    %1280 = vmatpush1.bf16.msra.mxu0 %v1277
    %1281 = vmatprep.subr.bf16.mxu0 0
    %1282 = vmatpush1.bf16.msra.mxu0 0
    %1283 = vmatprep.subr.bf16.mxu0 0
    %1284 = vmatpush1.bf16.msra.mxu0 0
    %1285 = vmatprep.subr.bf16.mxu0 0
    %1286 = vmatpush1.bf16.msra.mxu0 0
    %1287 = vmatprep.subr.bf16.mxu0 0
    %1288 = vmatpush1.bf16.msra.mxu0 0
    %1289 = vmatprep.subr.bf16.mxu0 0
    %1290 = vmatpush1.bf16.msra.mxu0 0
    %1291 = vmatprep.subr.bf16.mxu0 0
    %1292 = vmatpush1.bf16.msra.mxu0 0
    %1293 = vmatprep.subr.bf16.mxu0 0
    %1294 = vmatpush1.bf16.msra.mxu0 0
    %1295 = vmatprep.subr.bf16.mxu0 0
    %1296 = vmatpush1.bf16.msra.mxu0 0
    %1297 = vmatprep.subr.bf16.mxu0 0
    %1298 = vmatpush1.bf16.msra.mxu0 0
    %1299 = vmatprep.subr.bf16.mxu0 0
    %1300 = vmatpush1.bf16.msra.mxu0 0
    %1301 = vmatprep.subr.bf16.mxu0 0
    %1302 = vmatpush1.bf16.msra.mxu0 0
    %1303 = vmatprep.subr.bf16.mxu0 0
    %1304 = vmatpush1.bf16.msra.mxu0 0
    %1305 = vmatprep.subr.bf16.mxu0 0
    %1306 = vmatpush1.bf16.msra.mxu0 0
    %1307 = vmatprep.subr.bf16.mxu0 0
    %1308 = vmatpush1.bf16.msra.mxu0 0
    %1309 = vmatprep.subr.bf16.mxu0 0
    %1310 = vmatpush1.bf16.msra.mxu0 0
    %1311 = vmatprep.mubr.bf16.mxu0 0
    %1312 = vmatmul.mubr.bf16.gmra.mrb[0].mxu0 %v1273
    %v1313 = vpop.f32.mrb[0].mxu0
    %v1314 = vadd.f32 0.0, %v1313
    %v1315 = vpop.f32.mrb[0].mxu0
    %v1316 = vpop.f32.mrb[0].mxu0
    %v1317 = vpop.f32.mrb[0].mxu0
    %1318 = vdwg.mxu0
    %1319 = vrot.lane.b32.xlu0 %v198, 64
    %v1320 = vpop.permute.xlu0 %1319
    %v1322 = vsel %vm216, %v1255, 0
    %v1325 = vsel %vm1275, %v1320, 0
    %1327 = vmatprep.subr.bf16.mxu0 0
    %1328 = vmatpush1.bf16.msra.mxu0 %v1325
    %1329 = vmatprep.subr.bf16.mxu0 0
    %1330 = vmatpush1.bf16.msra.mxu0 0
    %1331 = vmatprep.subr.bf16.mxu0 0
    %1332 = vmatpush1.bf16.msra.mxu0 0
    %1333 = vmatprep.subr.bf16.mxu0 0
    %1334 = vmatpush1.bf16.msra.mxu0 0
    %1335 = vmatprep.subr.bf16.mxu0 0
    %1336 = vmatpush1.bf16.msra.mxu0 0
    %1337 = vmatprep.subr.bf16.mxu0 0
    %1338 = vmatpush1.bf16.msra.mxu0 0
    %1339 = vmatprep.subr.bf16.mxu0 0
    %1340 = vmatpush1.bf16.msra.mxu0 0
    %1341 = vmatprep.subr.bf16.mxu0 0
    %1342 = vmatpush1.bf16.msra.mxu0 0
    %1343 = vmatprep.subr.bf16.mxu0 0
    %1344 = vmatpush1.bf16.msra.mxu0 0
    %1345 = vmatprep.subr.bf16.mxu0 0
    %1346 = vmatpush1.bf16.msra.mxu0 0
    %1347 = vmatprep.subr.bf16.mxu0 0
    %1348 = vmatpush1.bf16.msra.mxu0 0
    %1349 = vmatprep.subr.bf16.mxu0 0
    %1350 = vmatpush1.bf16.msra.mxu0 0
    %1351 = vmatprep.subr.bf16.mxu0 0
    %1352 = vmatpush1.bf16.msra.mxu0 0
    %1353 = vmatprep.subr.bf16.mxu0 0
    %1354 = vmatpush1.bf16.msra.mxu0 0
    %1355 = vmatprep.subr.bf16.mxu0 0
    %1356 = vmatpush1.bf16.msra.mxu0 0
    %1357 = vmatprep.subr.bf16.mxu0 0
    %1358 = vmatpush1.bf16.msra.mxu0 0
    %1359 = vmatprep.mubr.bf16.mxu0 0
    %1360 = vmatmul.mubr.bf16.gmra.mrb[0].mxu0 %v1322
    %v1361 = vpop.f32.mrb[0].mxu0
    %v1362 = vadd.f32 0.0, %v1361
    %v1363 = vpop.f32.mrb[0].mxu0
    %v1364 = vpop.f32.mrb[0].mxu0
    %v1365 = vpop.f32.mrb[0].mxu0
    %1366 = vdwg.mxu0
    %1367 = vrot.lane.b32.xlu0 %v199, 64
    %v1368 = vpop.permute.xlu0 %1367
    %v1370 = vsel %vm216, %v1256, 0
    %v1373 = vsel %vm1275, %v1368, 0
    %1375 = vmatprep.subr.bf16.mxu0 0
    %1376 = vmatpush1.bf16.msra.mxu0 %v1373
    %1377 = vmatprep.subr.bf16.mxu0 0
    %1378 = vmatpush1.bf16.msra.mxu0 0
    %1379 = vmatprep.subr.bf16.mxu0 0
    %1380 = vmatpush1.bf16.msra.mxu0 0
    %1381 = vmatprep.subr.bf16.mxu0 0
    %1382 = vmatpush1.bf16.msra.mxu0 0
    %1383 = vmatprep.subr.bf16.mxu0 0
    %1384 = vmatpush1.bf16.msra.mxu0 0
    %1385 = vmatprep.subr.bf16.mxu0 0
    %1386 = vmatpush1.bf16.msra.mxu0 0
    %1387 = vmatprep.subr.bf16.mxu0 0
    %1388 = vmatpush1.bf16.msra.mxu0 0
    %1389 = vmatprep.subr.bf16.mxu0 0
    %1390 = vmatpush1.bf16.msra.mxu0 0
    %1391 = vmatprep.subr.bf16.mxu0 0
    %1392 = vmatpush1.bf16.msra.mxu0 0
    %1393 = vmatprep.subr.bf16.mxu0 0
    %1394 = vmatpush1.bf16.msra.mxu0 0
    %1395 = vmatprep.subr.bf16.mxu0 0
    %1396 = vmatpush1.bf16.msra.mxu0 0
    %1397 = vmatprep.subr.bf16.mxu0 0
    %1398 = vmatpush1.bf16.msra.mxu0 0
    %1399 = vmatprep.subr.bf16.mxu0 0
    %1400 = vmatpush1.bf16.msra.mxu0 0
    %1401 = vmatprep.subr.bf16.mxu0 0
    %1402 = vmatpush1.bf16.msra.mxu0 0
    %1403 = vmatprep.subr.bf16.mxu0 0
    %1404 = vmatpush1.bf16.msra.mxu0 0
    %1405 = vmatprep.subr.bf16.mxu0 0
    %1406 = vmatpush1.bf16.msra.mxu0 0
    %1407 = vmatprep.mubr.bf16.mxu0 0
    %1408 = vmatmul.mubr.bf16.gmra.mrb[0].mxu0 %v1370
    %v1409 = vpop.f32.mrb[0].mxu0
    %v1410 = vadd.f32 0.0, %v1409
    %v1411 = vpop.f32.mrb[0].mxu0
    %v1412 = vpop.f32.mrb[0].mxu0
    %v1413 = vpop.f32.mrb[0].mxu0
    %1414 = vdwg.mxu0
    %1415 = vrot.lane.b32.xlu0 %v200, 64
    %v1416 = vpop.permute.xlu0 %1415
    %v1418 = vsel %vm216, %v1257, 0
    %v1421 = vsel %vm1275, %v1416, 0
    %1423 = vmatprep.subr.bf16.mxu0 0
    %1424 = vmatpush1.bf16.msra.mxu0 %v1421
    %1425 = vmatprep.subr.bf16.mxu0 0
    %1426 = vmatpush1.bf16.msra.mxu0 0
    %1427 = vmatprep.subr.bf16.mxu0 0
    %1428 = vmatpush1.bf16.msra.mxu0 0
    %1429 = vmatprep.subr.bf16.mxu0 0
    %1430 = vmatpush1.bf16.msra.mxu0 0
    %1431 = vmatprep.subr.bf16.mxu0 0
    %1432 = vmatpush1.bf16.msra.mxu0 0
    %1433 = vmatprep.subr.bf16.mxu0 0
    %1434 = vmatpush1.bf16.msra.mxu0 0
    %1435 = vmatprep.subr.bf16.mxu0 0
    %1436 = vmatpush1.bf16.msra.mxu0 0
    %1437 = vmatprep.subr.bf16.mxu0 0
    %1438 = vmatpush1.bf16.msra.mxu0 0
    %1439 = vmatprep.subr.bf16.mxu0 0
    %1440 = vmatpush1.bf16.msra.mxu0 0
    %1441 = vmatprep.subr.bf16.mxu0 0
    %1442 = vmatpush1.bf16.msra.mxu0 0
    %1443 = vmatprep.subr.bf16.mxu0 0
    %1444 = vmatpush1.bf16.msra.mxu0 0
    %1445 = vmatprep.subr.bf16.mxu0 0
    %1446 = vmatpush1.bf16.msra.mxu0 0
    %1447 = vmatprep.subr.bf16.mxu0 0
    %1448 = vmatpush1.bf16.msra.mxu0 0
    %1449 = vmatprep.subr.bf16.mxu0 0
    %1450 = vmatpush1.bf16.msra.mxu0 0
    %1451 = vmatprep.subr.bf16.mxu0 0
    %1452 = vmatpush1.bf16.msra.mxu0 0
    %1453 = vmatprep.subr.bf16.mxu0 0
    %1454 = vmatpush1.bf16.msra.mxu0 0
    %1455 = vmatprep.mubr.bf16.mxu0 0
    %1456 = vmatmul.mubr.bf16.gmra.mrb[0].mxu0 %v1418
    %v1457 = vpop.f32.mrb[0].mxu0
    %v1458 = vadd.f32 0.0, %v1457
    %v1459 = vpop.f32.mrb[0].mxu0
    %v1460 = vpop.f32.mrb[0].mxu0
    %v1461 = vpop.f32.mrb[0].mxu0
    %1462 = vdwg.mxu0
    %1463 = vrot.lane.b32.xlu0 %v201, 64
    %v1464 = vpop.permute.xlu0 %1463
    %v1466 = vsel %vm216, %v1258, 0
    %v1469 = vsel %vm1275, %v1464, 0
    %1471 = vmatprep.subr.bf16.mxu0 0
    %1472 = vmatpush1.bf16.msra.mxu0 %v1469
    %1473 = vmatprep.subr.bf16.mxu0 0
    %1474 = vmatpush1.bf16.msra.mxu0 0
    %1475 = vmatprep.subr.bf16.mxu0 0
    %1476 = vmatpush1.bf16.msra.mxu0 0
    %1477 = vmatprep.subr.bf16.mxu0 0
    %1478 = vmatpush1.bf16.msra.mxu0 0
    %1479 = vmatprep.subr.bf16.mxu0 0
    %1480 = vmatpush1.bf16.msra.mxu0 0
    %1481 = vmatprep.subr.bf16.mxu0 0
    %1482 = vmatpush1.bf16.msra.mxu0 0
    %1483 = vmatprep.subr.bf16.mxu0 0
    %1484 = vmatpush1.bf16.msra.mxu0 0
    %1485 = vmatprep.subr.bf16.mxu0 0
    %1486 = vmatpush1.bf16.msra.mxu0 0
    %1487 = vmatprep.subr.bf16.mxu0 0
    %1488 = vmatpush1.bf16.msra.mxu0 0
    %1489 = vmatprep.subr.bf16.mxu0 0
    %1490 = vmatpush1.bf16.msra.mxu0 0
    %1491 = vmatprep.subr.bf16.mxu0 0
    %1492 = vmatpush1.bf16.msra.mxu0 0
    %1493 = vmatprep.subr.bf16.mxu0 0
    %1494 = vmatpush1.bf16.msra.mxu0 0
    %1495 = vmatprep.subr.bf16.mxu0 0
    %1496 = vmatpush1.bf16.msra.mxu0 0
    %1497 = vmatprep.subr.bf16.mxu0 0
    %1498 = vmatpush1.bf16.msra.mxu0 0
    %1499 = vmatprep.subr.bf16.mxu0 0
    %1500 = vmatpush1.bf16.msra.mxu0 0
    %1501 = vmatprep.subr.bf16.mxu0 0
    %1502 = vmatpush1.bf16.msra.mxu0 0
    %1503 = vmatprep.mubr.bf16.mxu0 0
    %1504 = vmatmul.mubr.bf16.gmra.mrb[0].mxu0 %v1466
    %v1505 = vpop.f32.mrb[0].mxu0
    %v1506 = vadd.f32 0.0, %v1505
    %v1507 = vpop.f32.mrb[0].mxu0
    %v1508 = vpop.f32.mrb[0].mxu0
    %v1509 = vpop.f32.mrb[0].mxu0
    %1510 = vdwg.mxu0
    %1511 = vrot.lane.b32.xlu0 %v202, 64
    %v1512 = vpop.permute.xlu0 %1511
    %v1514 = vsel %vm216, %v1259, 0
    %v1517 = vsel %vm1275, %v1512, 0
    %1519 = vmatprep.subr.bf16.mxu0 0
    %1520 = vmatpush1.bf16.msra.mxu0 %v1517
    %1521 = vmatprep.subr.bf16.mxu0 0
    %1522 = vmatpush1.bf16.msra.mxu0 0
    %1523 = vmatprep.subr.bf16.mxu0 0
    %1524 = vmatpush1.bf16.msra.mxu0 0
    %1525 = vmatprep.subr.bf16.mxu0 0
    %1526 = vmatpush1.bf16.msra.mxu0 0
    %1527 = vmatprep.subr.bf16.mxu0 0
    %1528 = vmatpush1.bf16.msra.mxu0 0
    %1529 = vmatprep.subr.bf16.mxu0 0
    %1530 = vmatpush1.bf16.msra.mxu0 0
    %1531 = vmatprep.subr.bf16.mxu0 0
    %1532 = vmatpush1.bf16.msra.mxu0 0
    %1533 = vmatprep.subr.bf16.mxu0 0
    %1534 = vmatpush1.bf16.msra.mxu0 0
    %1535 = vmatprep.subr.bf16.mxu0 0
    %1536 = vmatpush1.bf16.msra.mxu0 0
    %1537 = vmatprep.subr.bf16.mxu0 0
    %1538 = vmatpush1.bf16.msra.mxu0 0
    %1539 = vmatprep.subr.bf16.mxu0 0
    %1540 = vmatpush1.bf16.msra.mxu0 0
    %1541 = vmatprep.subr.bf16.mxu0 0
    %1542 = vmatpush1.bf16.msra.mxu0 0
    %1543 = vmatprep.subr.bf16.mxu0 0
    %1544 = vmatpush1.bf16.msra.mxu0 0
    %1545 = vmatprep.subr.bf16.mxu0 0
    %1546 = vmatpush1.bf16.msra.mxu0 0
    %1547 = vmatprep.subr.bf16.mxu0 0
    %1548 = vmatpush1.bf16.msra.mxu0 0
    %1549 = vmatprep.subr.bf16.mxu0 0
    %1550 = vmatpush1.bf16.msra.mxu0 0
    %1551 = vmatprep.mubr.bf16.mxu0 0
    %1552 = vmatmul.mubr.bf16.gmra.mrb[0].mxu0 %v1514
    %v1553 = vpop.f32.mrb[0].mxu0
    %v1554 = vadd.f32 0.0, %v1553
    %v1555 = vpop.f32.mrb[0].mxu0
    %v1556 = vpop.f32.mrb[0].mxu0
    %v1557 = vpop.f32.mrb[0].mxu0
    %1558 = vdwg.mxu0
    %1559 = vrot.lane.b32.xlu0 %v203, 64
    %v1560 = vpop.permute.xlu0 %1559
    %v1562 = vsel %vm216, %v1260, 0
    %v1565 = vsel %vm1275, %v1560, 0
    %1567 = vmatprep.subr.bf16.mxu0 0
    %1568 = vmatpush1.bf16.msra.mxu0 %v1565
    %1569 = vmatprep.subr.bf16.mxu0 0
    %1570 = vmatpush1.bf16.msra.mxu0 0
    %1571 = vmatprep.subr.bf16.mxu0 0
    %1572 = vmatpush1.bf16.msra.mxu0 0
    %1573 = vmatprep.subr.bf16.mxu0 0
    %1574 = vmatpush1.bf16.msra.mxu0 0
    %1575 = vmatprep.subr.bf16.mxu0 0
    %1576 = vmatpush1.bf16.msra.mxu0 0
    %1577 = vmatprep.subr.bf16.mxu0 0
    %1578 = vmatpush1.bf16.msra.mxu0 0
    %1579 = vmatprep.subr.bf16.mxu0 0
    %1580 = vmatpush1.bf16.msra.mxu0 0
    %1581 = vmatprep.subr.bf16.mxu0 0
    %1582 = vmatpush1.bf16.msra.mxu0 0
    %1583 = vmatprep.subr.bf16.mxu0 0
    %1584 = vmatpush1.bf16.msra.mxu0 0
    %1585 = vmatprep.subr.bf16.mxu0 0
    %1586 = vmatpush1.bf16.msra.mxu0 0
    %1587 = vmatprep.subr.bf16.mxu0 0
    %1588 = vmatpush1.bf16.msra.mxu0 0
    %1589 = vmatprep.subr.bf16.mxu0 0
    %1590 = vmatpush1.bf16.msra.mxu0 0
    %1591 = vmatprep.subr.bf16.mxu0 0
    %1592 = vmatpush1.bf16.msra.mxu0 0
    %1593 = vmatprep.subr.bf16.mxu0 0
    %1594 = vmatpush1.bf16.msra.mxu0 0
    %1595 = vmatprep.subr.bf16.mxu0 0
    %1596 = vmatpush1.bf16.msra.mxu0 0
    %1597 = vmatprep.subr.bf16.mxu0 0
    %1598 = vmatpush1.bf16.msra.mxu0 0
    %1599 = vmatprep.mubr.bf16.mxu0 0
    %1600 = vmatmul.mubr.bf16.gmra.mrb[0].mxu0 %v1562
    %v1601 = vpop.f32.mrb[0].mxu0
    %v1602 = vadd.f32 0.0, %v1601
    %v1603 = vpop.f32.mrb[0].mxu0
    %v1604 = vpop.f32.mrb[0].mxu0
    %v1605 = vpop.f32.mrb[0].mxu0
    %1606 = vdwg.mxu0
    %1607 = vrot.lane.b32.xlu0 %v204, 64
    %v1608 = vpop.permute.xlu0 %1607
    %v1610 = vsel %vm216, %v1261, 0
    %v1613 = vsel %vm1275, %v1608, 0
    %1615 = vmatprep.subr.bf16.mxu0 0
    %1616 = vmatpush1.bf16.msra.mxu0 %v1613
    %1617 = vmatprep.subr.bf16.mxu0 0
    %1618 = vmatpush1.bf16.msra.mxu0 0
    %1619 = vmatprep.subr.bf16.mxu0 0
    %1620 = vmatpush1.bf16.msra.mxu0 0
    %1621 = vmatprep.subr.bf16.mxu0 0
    %1622 = vmatpush1.bf16.msra.mxu0 0
    %1623 = vmatprep.subr.bf16.mxu0 0
    %1624 = vmatpush1.bf16.msra.mxu0 0
    %1625 = vmatprep.subr.bf16.mxu0 0
    %1626 = vmatpush1.bf16.msra.mxu0 0
    %1627 = vmatprep.subr.bf16.mxu0 0
    %1628 = vmatpush1.bf16.msra.mxu0 0
    %1629 = vmatprep.subr.bf16.mxu0 0
    %1630 = vmatpush1.bf16.msra.mxu0 0
    %1631 = vmatprep.subr.bf16.mxu0 0
    %1632 = vmatpush1.bf16.msra.mxu0 0
    %1633 = vmatprep.subr.bf16.mxu0 0
    %1634 = vmatpush1.bf16.msra.mxu0 0
    %1635 = vmatprep.subr.bf16.mxu0 0
    %1636 = vmatpush1.bf16.msra.mxu0 0
    %1637 = vmatprep.subr.bf16.mxu0 0
    %1638 = vmatpush1.bf16.msra.mxu0 0
    %1639 = vmatprep.subr.bf16.mxu0 0
    %1640 = vmatpush1.bf16.msra.mxu0 0
    %1641 = vmatprep.subr.bf16.mxu0 0
    %1642 = vmatpush1.bf16.msra.mxu0 0
    %1643 = vmatprep.subr.bf16.mxu0 0
    %1644 = vmatpush1.bf16.msra.mxu0 0
    %1645 = vmatprep.subr.bf16.mxu0 0
    %1646 = vmatpush1.bf16.msra.mxu0 0
    %1647 = vmatprep.mubr.bf16.mxu0 0
    %1648 = vmatmul.mubr.bf16.gmra.mrb[0].mxu0 %v1610
    %v1649 = vpop.f32.mrb[0].mxu0
    %v1650 = vadd.f32 0.0, %v1649
    %v1651 = vpop.f32.mrb[0].mxu0
    %v1652 = vpop.f32.mrb[0].mxu0
    %v1653 = vpop.f32.mrb[0].mxu0
    %1654 = vdwg.mxu0
    %1655 = vrot.lane.b32.xlu0 %v205, 64
    %v1656 = vpop.permute.xlu0 %1655
    %v1658 = vsel %vm216, %v1262, 0
    %v1661 = vsel %vm1275, %v1656, 0
    %1663 = vmatprep.subr.bf16.mxu0 0
    %1664 = vmatpush1.bf16.msra.mxu0 %v1661
    %1665 = vmatprep.subr.bf16.mxu0 0
    %1666 = vmatpush1.bf16.msra.mxu0 0
    %1667 = vmatprep.subr.bf16.mxu0 0
    %1668 = vmatpush1.bf16.msra.mxu0 0
    %1669 = vmatprep.subr.bf16.mxu0 0
    %1670 = vmatpush1.bf16.msra.mxu0 0
    %1671 = vmatprep.subr.bf16.mxu0 0
    %1672 = vmatpush1.bf16.msra.mxu0 0
    %1673 = vmatprep.subr.bf16.mxu0 0
    %1674 = vmatpush1.bf16.msra.mxu0 0
    %1675 = vmatprep.subr.bf16.mxu0 0
    %1676 = vmatpush1.bf16.msra.mxu0 0
    %1677 = vmatprep.subr.bf16.mxu0 0
    %1678 = vmatpush1.bf16.msra.mxu0 0
    %1679 = vmatprep.subr.bf16.mxu0 0
    %1680 = vmatpush1.bf16.msra.mxu0 0
    %1681 = vmatprep.subr.bf16.mxu0 0
    %1682 = vmatpush1.bf16.msra.mxu0 0
    %1683 = vmatprep.subr.bf16.mxu0 0
    %1684 = vmatpush1.bf16.msra.mxu0 0
    %1685 = vmatprep.subr.bf16.mxu0 0
    %1686 = vmatpush1.bf16.msra.mxu0 0
    %1687 = vmatprep.subr.bf16.mxu0 0
    %1688 = vmatpush1.bf16.msra.mxu0 0
    %1689 = vmatprep.subr.bf16.mxu0 0
    %1690 = vmatpush1.bf16.msra.mxu0 0
    %1691 = vmatprep.subr.bf16.mxu0 0
    %1692 = vmatpush1.bf16.msra.mxu0 0
    %1693 = vmatprep.subr.bf16.mxu0 0
    %1694 = vmatpush1.bf16.msra.mxu0 0
    %1695 = vmatprep.mubr.bf16.mxu0 0
    %1696 = vmatmul.mubr.bf16.gmra.mrb[0].mxu0 %v1658
    %v1697 = vpop.f32.mrb[0].mxu0
    %v1698 = vadd.f32 0.0, %v1697
    %v1699 = vpop.f32.mrb[0].mxu0
    %v1700 = vpop.f32.mrb[0].mxu0
    %v1701 = vpop.f32.mrb[0].mxu0
    %1702 = vdwg.mxu0
    %1703 = vrot.lane.b32.xlu0 %v206, 64
    %v1704 = vpop.permute.xlu0 %1703
    %v1706 = vsel %vm216, %v1263, 0
    %v1709 = vsel %vm1275, %v1704, 0
    %1711 = vmatprep.subr.bf16.mxu0 0
    %1712 = vmatpush1.bf16.msra.mxu0 %v1709
    %1713 = vmatprep.subr.bf16.mxu0 0
    %1714 = vmatpush1.bf16.msra.mxu0 0
    %1715 = vmatprep.subr.bf16.mxu0 0
    %1716 = vmatpush1.bf16.msra.mxu0 0
    %1717 = vmatprep.subr.bf16.mxu0 0
    %1718 = vmatpush1.bf16.msra.mxu0 0
    %1719 = vmatprep.subr.bf16.mxu0 0
    %1720 = vmatpush1.bf16.msra.mxu0 0
    %1721 = vmatprep.subr.bf16.mxu0 0
    %1722 = vmatpush1.bf16.msra.mxu0 0
    %1723 = vmatprep.subr.bf16.mxu0 0
    %1724 = vmatpush1.bf16.msra.mxu0 0
    %1725 = vmatprep.subr.bf16.mxu0 0
    %1726 = vmatpush1.bf16.msra.mxu0 0
    %1727 = vmatprep.subr.bf16.mxu0 0
    %1728 = vmatpush1.bf16.msra.mxu0 0
    %1729 = vmatprep.subr.bf16.mxu0 0
    %1730 = vmatpush1.bf16.msra.mxu0 0
    %1731 = vmatprep.subr.bf16.mxu0 0
    %1732 = vmatpush1.bf16.msra.mxu0 0
    %1733 = vmatprep.subr.bf16.mxu0 0
    %1734 = vmatpush1.bf16.msra.mxu0 0
    %1735 = vmatprep.subr.bf16.mxu0 0
    %1736 = vmatpush1.bf16.msra.mxu0 0
    %1737 = vmatprep.subr.bf16.mxu0 0
    %1738 = vmatpush1.bf16.msra.mxu0 0
    %1739 = vmatprep.subr.bf16.mxu0 0
    %1740 = vmatpush1.bf16.msra.mxu0 0
    %1741 = vmatprep.subr.bf16.mxu0 0
    %1742 = vmatpush1.bf16.msra.mxu0 0
    %1743 = vmatprep.mubr.bf16.mxu0 0
    %1744 = vmatmul.mubr.bf16.gmra.mrb[0].mxu0 %v1706
    %v1745 = vpop.f32.mrb[0].mxu0
    %v1746 = vadd.f32 0.0, %v1745
    %v1747 = vpop.f32.mrb[0].mxu0
    %v1748 = vpop.f32.mrb[0].mxu0
    %v1749 = vpop.f32.mrb[0].mxu0
    %1750 = vdwg.mxu0
    %1751 = vrot.lane.b32.xlu0 %v207, 64
    %v1752 = vpop.permute.xlu0 %1751
    %v1754 = vsel %vm216, %v1264, 0
    %v1757 = vsel %vm1275, %v1752, 0
    %1759 = vmatprep.subr.bf16.mxu0 0
    %1760 = vmatpush1.bf16.msra.mxu0 %v1757
    %1761 = vmatprep.subr.bf16.mxu0 0
    %1762 = vmatpush1.bf16.msra.mxu0 0
    %1763 = vmatprep.subr.bf16.mxu0 0
    %1764 = vmatpush1.bf16.msra.mxu0 0
    %1765 = vmatprep.subr.bf16.mxu0 0
    %1766 = vmatpush1.bf16.msra.mxu0 0
    %1767 = vmatprep.subr.bf16.mxu0 0
    %1768 = vmatpush1.bf16.msra.mxu0 0
    %1769 = vmatprep.subr.bf16.mxu0 0
    %1770 = vmatpush1.bf16.msra.mxu0 0
    %1771 = vmatprep.subr.bf16.mxu0 0
    %1772 = vmatpush1.bf16.msra.mxu0 0
    %1773 = vmatprep.subr.bf16.mxu0 0
    %1774 = vmatpush1.bf16.msra.mxu0 0
    %1775 = vmatprep.subr.bf16.mxu0 0
    %1776 = vmatpush1.bf16.msra.mxu0 0
    %1777 = vmatprep.subr.bf16.mxu0 0
    %1778 = vmatpush1.bf16.msra.mxu0 0
    %1779 = vmatprep.subr.bf16.mxu0 0
    %1780 = vmatpush1.bf16.msra.mxu0 0
    %1781 = vmatprep.subr.bf16.mxu0 0
    %1782 = vmatpush1.bf16.msra.mxu0 0
    %1783 = vmatprep.subr.bf16.mxu0 0
    %1784 = vmatpush1.bf16.msra.mxu0 0
    %1785 = vmatprep.subr.bf16.mxu0 0
    %1786 = vmatpush1.bf16.msra.mxu0 0
    %1787 = vmatprep.subr.bf16.mxu0 0
    %1788 = vmatpush1.bf16.msra.mxu0 0
    %1789 = vmatprep.subr.bf16.mxu0 0
    %1790 = vmatpush1.bf16.msra.mxu0 0
    %1791 = vmatprep.mubr.bf16.mxu0 0
    %1792 = vmatmul.mubr.bf16.gmra.mrb[0].mxu0 %v1754
    %v1793 = vpop.f32.mrb[0].mxu0
    %v1794 = vadd.f32 0.0, %v1793
    %v1795 = vpop.f32.mrb[0].mxu0
    %v1796 = vpop.f32.mrb[0].mxu0
    %v1797 = vpop.f32.mrb[0].mxu0
    %1798 = vdwg.mxu0
    %1799 = vrot.lane.b32.xlu0 %v208, 64
    %v1800 = vpop.permute.xlu0 %1799
    %v1802 = vsel %vm216, %v1265, 0
    %v1805 = vsel %vm1275, %v1800, 0
    %1807 = vmatprep.subr.bf16.mxu0 0
    %1808 = vmatpush1.bf16.msra.mxu0 %v1805
    %1809 = vmatprep.subr.bf16.mxu0 0
    %1810 = vmatpush1.bf16.msra.mxu0 0
    %1811 = vmatprep.subr.bf16.mxu0 0
    %1812 = vmatpush1.bf16.msra.mxu0 0
    %1813 = vmatprep.subr.bf16.mxu0 0
    %1814 = vmatpush1.bf16.msra.mxu0 0
    %1815 = vmatprep.subr.bf16.mxu0 0
    %1816 = vmatpush1.bf16.msra.mxu0 0
    %1817 = vmatprep.subr.bf16.mxu0 0
    %1818 = vmatpush1.bf16.msra.mxu0 0
    %1819 = vmatprep.subr.bf16.mxu0 0
    %1820 = vmatpush1.bf16.msra.mxu0 0
    %1821 = vmatprep.subr.bf16.mxu0 0
    %1822 = vmatpush1.bf16.msra.mxu0 0
    %1823 = vmatprep.subr.bf16.mxu0 0
    %1824 = vmatpush1.bf16.msra.mxu0 0
    %1825 = vmatprep.subr.bf16.mxu0 0
    %1826 = vmatpush1.bf16.msra.mxu0 0
    %1827 = vmatprep.subr.bf16.mxu0 0
    %1828 = vmatpush1.bf16.msra.mxu0 0
    %1829 = vmatprep.subr.bf16.mxu0 0
    %1830 = vmatpush1.bf16.msra.mxu0 0
    %1831 = vmatprep.subr.bf16.mxu0 0
    %1832 = vmatpush1.bf16.msra.mxu0 0
    %1833 = vmatprep.subr.bf16.mxu0 0
    %1834 = vmatpush1.bf16.msra.mxu0 0
    %1835 = vmatprep.subr.bf16.mxu0 0
    %1836 = vmatpush1.bf16.msra.mxu0 0
    %1837 = vmatprep.subr.bf16.mxu0 0
    %1838 = vmatpush1.bf16.msra.mxu0 0
    %1839 = vmatprep.mubr.bf16.mxu0 0
    %1840 = vmatmul.mubr.bf16.gmra.mrb[0].mxu0 %v1802
    %v1841 = vpop.f32.mrb[0].mxu0
    %v1842 = vadd.f32 0.0, %v1841
    %v1843 = vpop.f32.mrb[0].mxu0
    %v1844 = vpop.f32.mrb[0].mxu0
    %v1845 = vpop.f32.mrb[0].mxu0
    %1846 = vdwg.mxu0
    %1847 = vrot.lane.b32.xlu0 %v209, 64
    %v1848 = vpop.permute.xlu0 %1847
    %v1850 = vsel %vm216, %v1266, 0
    %v1853 = vsel %vm1275, %v1848, 0
    %1855 = vmatprep.subr.bf16.mxu0 0
    %1856 = vmatpush1.bf16.msra.mxu0 %v1853
    %1857 = vmatprep.subr.bf16.mxu0 0
    %1858 = vmatpush1.bf16.msra.mxu0 0
    %1859 = vmatprep.subr.bf16.mxu0 0
    %1860 = vmatpush1.bf16.msra.mxu0 0
    %1861 = vmatprep.subr.bf16.mxu0 0
    %1862 = vmatpush1.bf16.msra.mxu0 0
    %1863 = vmatprep.subr.bf16.mxu0 0
    %1864 = vmatpush1.bf16.msra.mxu0 0
    %1865 = vmatprep.subr.bf16.mxu0 0
    %1866 = vmatpush1.bf16.msra.mxu0 0
    %1867 = vmatprep.subr.bf16.mxu0 0
    %1868 = vmatpush1.bf16.msra.mxu0 0
    %1869 = vmatprep.subr.bf16.mxu0 0
    %1870 = vmatpush1.bf16.msra.mxu0 0
    %1871 = vmatprep.subr.bf16.mxu0 0
    %1872 = vmatpush1.bf16.msra.mxu0 0
    %1873 = vmatprep.subr.bf16.mxu0 0
    %1874 = vmatpush1.bf16.msra.mxu0 0
    %1875 = vmatprep.subr.bf16.mxu0 0
    %1876 = vmatpush1.bf16.msra.mxu0 0
    %1877 = vmatprep.subr.bf16.mxu0 0
    %1878 = vmatpush1.bf16.msra.mxu0 0
    %1879 = vmatprep.subr.bf16.mxu0 0
    %1880 = vmatpush1.bf16.msra.mxu0 0
    %1881 = vmatprep.subr.bf16.mxu0 0
    %1882 = vmatpush1.bf16.msra.mxu0 0
    %1883 = vmatprep.subr.bf16.mxu0 0
    %1884 = vmatpush1.bf16.msra.mxu0 0
    %1885 = vmatprep.subr.bf16.mxu0 0
    %1886 = vmatpush1.bf16.msra.mxu0 0
    %1887 = vmatprep.mubr.bf16.mxu0 0
    %1888 = vmatmul.mubr.bf16.gmra.mrb[0].mxu0 %v1850
    %v1889 = vpop.f32.mrb[0].mxu0
    %v1890 = vadd.f32 0.0, %v1889
    %v1891 = vpop.f32.mrb[0].mxu0
    %v1892 = vpop.f32.mrb[0].mxu0
    %v1893 = vpop.f32.mrb[0].mxu0
    %1894 = vdwg.mxu0
    %1895 = vrot.lane.b32.xlu0 %v210, 64
    %v1896 = vpop.permute.xlu0 %1895
    %v1898 = vsel %vm216, %v1267, 0
    %v1901 = vsel %vm1275, %v1896, 0
    %1903 = vmatprep.subr.bf16.mxu0 0
    %1904 = vmatpush1.bf16.msra.mxu0 %v1901
    %1905 = vmatprep.subr.bf16.mxu0 0
    %1906 = vmatpush1.bf16.msra.mxu0 0
    %1907 = vmatprep.subr.bf16.mxu0 0
    %1908 = vmatpush1.bf16.msra.mxu0 0
    %1909 = vmatprep.subr.bf16.mxu0 0
    %1910 = vmatpush1.bf16.msra.mxu0 0
    %1911 = vmatprep.subr.bf16.mxu0 0
    %1912 = vmatpush1.bf16.msra.mxu0 0
    %1913 = vmatprep.subr.bf16.mxu0 0
    %1914 = vmatpush1.bf16.msra.mxu0 0
    %1915 = vmatprep.subr.bf16.mxu0 0
    %1916 = vmatpush1.bf16.msra.mxu0 0
    %1917 = vmatprep.subr.bf16.mxu0 0
    %1918 = vmatpush1.bf16.msra.mxu0 0
    %1919 = vmatprep.subr.bf16.mxu0 0
    %1920 = vmatpush1.bf16.msra.mxu0 0
    %1921 = vmatprep.subr.bf16.mxu0 0
    %1922 = vmatpush1.bf16.msra.mxu0 0
    %1923 = vmatprep.subr.bf16.mxu0 0
    %1924 = vmatpush1.bf16.msra.mxu0 0
    %1925 = vmatprep.subr.bf16.mxu0 0
    %1926 = vmatpush1.bf16.msra.mxu0 0
    %1927 = vmatprep.subr.bf16.mxu0 0
    %1928 = vmatpush1.bf16.msra.mxu0 0
    %1929 = vmatprep.subr.bf16.mxu0 0
    %1930 = vmatpush1.bf16.msra.mxu0 0
    %1931 = vmatprep.subr.bf16.mxu0 0
    %1932 = vmatpush1.bf16.msra.mxu0 0
    %1933 = vmatprep.subr.bf16.mxu0 0
    %1934 = vmatpush1.bf16.msra.mxu0 0
    %1935 = vmatprep.mubr.bf16.mxu0 0
    %1936 = vmatmul.mubr.bf16.gmra.mrb[0].mxu0 %v1898
    %v1937 = vpop.f32.mrb[0].mxu0
    %v1938 = vadd.f32 0.0, %v1937
    %v1939 = vpop.f32.mrb[0].mxu0
    %v1940 = vpop.f32.mrb[0].mxu0
    %v1941 = vpop.f32.mrb[0].mxu0
    %1942 = vdwg.mxu0
    %1943 = vrot.lane.b32.xlu0 %v211, 64
    %v1944 = vpop.permute.xlu0 %1943
    %v1946 = vsel %vm216, %v1268, 0
    %v1949 = vsel %vm1275, %v1944, 0
    %1951 = vmatprep.subr.bf16.mxu0 0
    %1952 = vmatpush1.bf16.msra.mxu0 %v1949
    %1953 = vmatprep.subr.bf16.mxu0 0
    %1954 = vmatpush1.bf16.msra.mxu0 0
    %1955 = vmatprep.subr.bf16.mxu0 0
    %1956 = vmatpush1.bf16.msra.mxu0 0
    %1957 = vmatprep.subr.bf16.mxu0 0
    %1958 = vmatpush1.bf16.msra.mxu0 0
    %1959 = vmatprep.subr.bf16.mxu0 0
    %1960 = vmatpush1.bf16.msra.mxu0 0
    %1961 = vmatprep.subr.bf16.mxu0 0
    %1962 = vmatpush1.bf16.msra.mxu0 0
    %1963 = vmatprep.subr.bf16.mxu0 0
    %1964 = vmatpush1.bf16.msra.mxu0 0
    %1965 = vmatprep.subr.bf16.mxu0 0
    %1966 = vmatpush1.bf16.msra.mxu0 0
    %1967 = vmatprep.subr.bf16.mxu0 0
    %1968 = vmatpush1.bf16.msra.mxu0 0
    %1969 = vmatprep.subr.bf16.mxu0 0
    %1970 = vmatpush1.bf16.msra.mxu0 0
    %1971 = vmatprep.subr.bf16.mxu0 0
    %1972 = vmatpush1.bf16.msra.mxu0 0
    %1973 = vmatprep.subr.bf16.mxu0 0
    %1974 = vmatpush1.bf16.msra.mxu0 0
    %1975 = vmatprep.subr.bf16.mxu0 0
    %1976 = vmatpush1.bf16.msra.mxu0 0
    %1977 = vmatprep.subr.bf16.mxu0 0
    %1978 = vmatpush1.bf16.msra.mxu0 0
    %1979 = vmatprep.subr.bf16.mxu0 0
    %1980 = vmatpush1.bf16.msra.mxu0 0
    %1981 = vmatprep.subr.bf16.mxu0 0
    %1982 = vmatpush1.bf16.msra.mxu0 0
    %1983 = vmatprep.mubr.bf16.mxu0 0
    %1984 = vmatmul.mubr.bf16.gmra.mrb[0].mxu0 %v1946
    %v1985 = vpop.f32.mrb[0].mxu0
    %v1986 = vadd.f32 0.0, %v1985
    %v1987 = vpop.f32.mrb[0].mxu0
    %v1988 = vpop.f32.mrb[0].mxu0
    %v1989 = vpop.f32.mrb[0].mxu0
    %1990 = vdwg.mxu0
    %1991 = vrot.lane.b32.xlu0 %v212, 64
    %v1992 = vpop.permute.xlu0 %1991
    %v1994 = vsel %vm216, %v1269, 0
    %v1997 = vsel %vm1275, %v1992, 0
    %1999 = vmatprep.subr.bf16.mxu0 0
    %2000 = vmatpush1.bf16.msra.mxu0 %v1997
    %2001 = vmatprep.subr.bf16.mxu0 0
    %2002 = vmatpush1.bf16.msra.mxu0 0
    %2003 = vmatprep.subr.bf16.mxu0 0
    %2004 = vmatpush1.bf16.msra.mxu0 0
    %2005 = vmatprep.subr.bf16.mxu0 0
    %2006 = vmatpush1.bf16.msra.mxu0 0
    %2007 = vmatprep.subr.bf16.mxu0 0
    %2008 = vmatpush1.bf16.msra.mxu0 0
    %2009 = vmatprep.subr.bf16.mxu0 0
    %2010 = vmatpush1.bf16.msra.mxu0 0
    %2011 = vmatprep.subr.bf16.mxu0 0
    %2012 = vmatpush1.bf16.msra.mxu0 0
    %2013 = vmatprep.subr.bf16.mxu0 0
    %2014 = vmatpush1.bf16.msra.mxu0 0
    %2015 = vmatprep.subr.bf16.mxu0 0
    %2016 = vmatpush1.bf16.msra.mxu0 0
    %2017 = vmatprep.subr.bf16.mxu0 0
    %2018 = vmatpush1.bf16.msra.mxu0 0
    %2019 = vmatprep.subr.bf16.mxu0 0
    %2020 = vmatpush1.bf16.msra.mxu0 0
    %2021 = vmatprep.subr.bf16.mxu0 0
    %2022 = vmatpush1.bf16.msra.mxu0 0
    %2023 = vmatprep.subr.bf16.mxu0 0
    %2024 = vmatpush1.bf16.msra.mxu0 0
    %2025 = vmatprep.subr.bf16.mxu0 0
    %2026 = vmatpush1.bf16.msra.mxu0 0
    %2027 = vmatprep.subr.bf16.mxu0 0
    %2028 = vmatpush1.bf16.msra.mxu0 0
    %2029 = vmatprep.subr.bf16.mxu0 0
    %2030 = vmatpush1.bf16.msra.mxu0 0
    %2031 = vmatprep.mubr.bf16.mxu0 0
    %2032 = vmatmul.mubr.bf16.gmra.mrb[0].mxu0 %v1994
    %v2033 = vpop.f32.mrb[0].mxu0
    %v2034 = vadd.f32 0.0, %v2033
    %v2035 = vpop.f32.mrb[0].mxu0
    %v2036 = vpop.f32.mrb[0].mxu0
    %v2037 = vpop.f32.mrb[0].mxu0
    %2038 = vdwg.mxu0
    %v2039 = vld [vmem:[#allocation7] sm:$0xf]
    %v2040 = vld [vmem:[#allocation7 + $0x4] sm:$0xf]
    %v2041 = vld [vmem:[#allocation7 + $0x8] sm:$0xf]
    %v2042 = vld [vmem:[#allocation7 + $0xc] sm:$0xf]
    %v2043 = vld [vmem:[%s4] sm:$0x1]
    %v2045 = vlaneseq
    %v2046 = vshrl.u32 %v2045, 7
    %v2047 = vsub.s32 0, %v2046
    %v2048 = vrot.slane %v2043, %v2047
    %v2050 = vpack.c.bf16 %v1362, %v1314
    %v2051 = vpack.c.bf16 %v1458, %v1410
    %v2053 = vsel %vm216, %v2050, 0
    %v2056 = vsel %vm216, %v2051, 0
    %v2059 = vsel %vm1275, %v2039, 0
    %2061 = vmatprep.subr.bf16.mxu0 0
    %2062 = vmatpush1.bf16.msra.mxu0 %v2059
    %2063 = vmatprep.subr.bf16.mxu0 0
    %2064 = vmatpush1.bf16.msra.mxu0 0
    %2065 = vmatprep.subr.bf16.mxu0 0
    %2066 = vmatpush1.bf16.msra.mxu0 0
    %2067 = vmatprep.subr.bf16.mxu0 0
    %2068 = vmatpush1.bf16.msra.mxu0 0
    %2069 = vmatprep.subr.bf16.mxu0 0
    %2070 = vmatpush1.bf16.msra.mxu0 0
    %2071 = vmatprep.subr.bf16.mxu0 0
    %2072 = vmatpush1.bf16.msra.mxu0 0
    %2073 = vmatprep.subr.bf16.mxu0 0
    %2074 = vmatpush1.bf16.msra.mxu0 0
    %2075 = vmatprep.subr.bf16.mxu0 0
    %2076 = vmatpush1.bf16.msra.mxu0 0
    %2077 = vmatprep.subr.bf16.mxu0 0
    %2078 = vmatpush1.bf16.msra.mxu0 0
    %2079 = vmatprep.subr.bf16.mxu0 0
    %2080 = vmatpush1.bf16.msra.mxu0 0
    %2081 = vmatprep.subr.bf16.mxu0 0
    %2082 = vmatpush1.bf16.msra.mxu0 0
    %2083 = vmatprep.subr.bf16.mxu0 0
    %2084 = vmatpush1.bf16.msra.mxu0 0
    %2085 = vmatprep.subr.bf16.mxu0 0
    %2086 = vmatpush1.bf16.msra.mxu0 0
    %2087 = vmatprep.subr.bf16.mxu0 0
    %2088 = vmatpush1.bf16.msra.mxu0 0
    %2089 = vmatprep.subr.bf16.mxu0 0
    %2090 = vmatpush1.bf16.msra.mxu0 0
    %2091 = vmatprep.subr.bf16.mxu0 0
    %2092 = vmatpush1.bf16.msra.mxu0 0
    %2093 = vmatprep.mubr.bf16.mxu0 0
    %2094 = vmatmul.mubr.bf16.gmra.mrb[0].mxu0 %v2053
    %v2095 = vpop.f32.mrb[0].mxu0
    %v2096 = vadd.f32 0.0, %v2095
    %v2097 = vpop.f32.mrb[0].mxu0
    %v2098 = vpop.f32.mrb[0].mxu0
    %v2099 = vadd.f32 0.0, %v2098
    %v2100 = vpop.f32.mrb[0].mxu0
    %2101 = vmatprep.mubr.bf16.mxu0 0
    %2102 = vmatmul.mubr.bf16.gmra.mrb[0].mxu0 %v2056
    %v2103 = vpop.f32.mrb[0].mxu0
    %v2104 = vadd.f32 0.0, %v2103
    %v2105 = vpop.f32.mrb[0].mxu0
    %v2106 = vpop.f32.mrb[0].mxu0
    %v2107 = vadd.f32 0.0, %v2106
    %v2108 = vpop.f32.mrb[0].mxu0
    %2109 = vdwg.mxu0
    %v2110 = vadd.f32 %v2048, %v2096
    %v2111 = vadd.f32 %v2048, %v2099
    %v2112 = vadd.f32 %v2048, %v2104
    %v2113 = vadd.f32 %v2048, %v2107
    %v2114 = vpack.c.bf16 %v1554, %v1506
    %v2115 = vpack.c.bf16 %v1650, %v1602
    %v2117 = vsel %vm216, %v2114, 0
    %v2120 = vsel %vm216, %v2115, 0
    %v2123 = vsel %vm1275, %v2040, 0
    %2125 = vmatprep.subr.bf16.mxu0 0
    %2126 = vmatpush1.bf16.msra.mxu0 %v2123
    %2127 = vmatprep.subr.bf16.mxu0 0
    %2128 = vmatpush1.bf16.msra.mxu0 0
    %2129 = vmatprep.subr.bf16.mxu0 0
    %2130 = vmatpush1.bf16.msra.mxu0 0
    %2131 = vmatprep.subr.bf16.mxu0 0
    %2132 = vmatpush1.bf16.msra.mxu0 0
    %2133 = vmatprep.subr.bf16.mxu0 0
    %2134 = vmatpush1.bf16.msra.mxu0 0
    %2135 = vmatprep.subr.bf16.mxu0 0
    %2136 = vmatpush1.bf16.msra.mxu0 0
    %2137 = vmatprep.subr.bf16.mxu0 0
    %2138 = vmatpush1.bf16.msra.mxu0 0
    %2139 = vmatprep.subr.bf16.mxu0 0
    %2140 = vmatpush1.bf16.msra.mxu0 0
    %2141 = vmatprep.subr.bf16.mxu0 0
    %2142 = vmatpush1.bf16.msra.mxu0 0
    %2143 = vmatprep.subr.bf16.mxu0 0
    %2144 = vmatpush1.bf16.msra.mxu0 0
    %2145 = vmatprep.subr.bf16.mxu0 0
    %2146 = vmatpush1.bf16.msra.mxu0 0
    %2147 = vmatprep.subr.bf16.mxu0 0
    %2148 = vmatpush1.bf16.msra.mxu0 0
    %2149 = vmatprep.subr.bf16.mxu0 0
    %2150 = vmatpush1.bf16.msra.mxu0 0
    %2151 = vmatprep.subr.bf16.mxu0 0
    %2152 = vmatpush1.bf16.msra.mxu0 0
    %2153 = vmatprep.subr.bf16.mxu0 0
    %2154 = vmatpush1.bf16.msra.mxu0 0
    %2155 = vmatprep.subr.bf16.mxu0 0
    %2156 = vmatpush1.bf16.msra.mxu0 0
    %2157 = vmatprep.mubr.bf16.mxu0 0
    %2158 = vmatmul.mubr.bf16.gmra.mrb[0].mxu0 %v2117
    %v2159 = vpop.f32.mrb[0].mxu0
    %v2160 = vadd.f32 0.0, %v2159
    %v2161 = vpop.f32.mrb[0].mxu0
    %v2162 = vpop.f32.mrb[0].mxu0
    %v2163 = vadd.f32 0.0, %v2162
    %v2164 = vpop.f32.mrb[0].mxu0
    %2165 = vmatprep.mubr.bf16.mxu0 0
    %2166 = vmatmul.mubr.bf16.gmra.mrb[0].mxu0 %v2120
    %v2167 = vpop.f32.mrb[0].mxu0
    %v2168 = vadd.f32 0.0, %v2167
    %v2169 = vpop.f32.mrb[0].mxu0
    %v2170 = vpop.f32.mrb[0].mxu0
    %v2171 = vadd.f32 0.0, %v2170
    %v2172 = vpop.f32.mrb[0].mxu0
    %2173 = vdwg.mxu0
    %v2174 = vadd.f32 %v2110, %v2160
    %v2175 = vadd.f32 %v2111, %v2163
    %v2176 = vadd.f32 %v2112, %v2168
    %v2177 = vadd.f32 %v2113, %v2171
    %v2178 = vpack.c.bf16 %v1746, %v1698
    %v2179 = vpack.c.bf16 %v1842, %v1794
    %v2181 = vsel %vm216, %v2178, 0
    %v2184 = vsel %vm216, %v2179, 0
    %v2187 = vsel %vm1275, %v2041, 0
    %2189 = vmatprep.subr.bf16.mxu0 0
    %2190 = vmatpush1.bf16.msra.mxu0 %v2187
    %2191 = vmatprep.subr.bf16.mxu0 0
    %2192 = vmatpush1.bf16.msra.mxu0 0
    %2193 = vmatprep.subr.bf16.mxu0 0
    %2194 = vmatpush1.bf16.msra.mxu0 0
    %2195 = vmatprep.subr.bf16.mxu0 0
    %2196 = vmatpush1.bf16.msra.mxu0 0
    %2197 = vmatprep.subr.bf16.mxu0 0
    %2198 = vmatpush1.bf16.msra.mxu0 0
    %2199 = vmatprep.subr.bf16.mxu0 0
    %2200 = vmatpush1.bf16.msra.mxu0 0
    %2201 = vmatprep.subr.bf16.mxu0 0
    %2202 = vmatpush1.bf16.msra.mxu0 0
    %2203 = vmatprep.subr.bf16.mxu0 0
    %2204 = vmatpush1.bf16.msra.mxu0 0
    %2205 = vmatprep.subr.bf16.mxu0 0
    %2206 = vmatpush1.bf16.msra.mxu0 0
    %2207 = vmatprep.subr.bf16.mxu0 0
    %2208 = vmatpush1.bf16.msra.mxu0 0
    %2209 = vmatprep.subr.bf16.mxu0 0
    %2210 = vmatpush1.bf16.msra.mxu0 0
    %2211 = vmatprep.subr.bf16.mxu0 0
    %2212 = vmatpush1.bf16.msra.mxu0 0
    %2213 = vmatprep.subr.bf16.mxu0 0
    %2214 = vmatpush1.bf16.msra.mxu0 0
    %2215 = vmatprep.subr.bf16.mxu0 0
    %2216 = vmatpush1.bf16.msra.mxu0 0
    %2217 = vmatprep.subr.bf16.mxu0 0
    %2218 = vmatpush1.bf16.msra.mxu0 0
    %2219 = vmatprep.subr.bf16.mxu0 0
    %2220 = vmatpush1.bf16.msra.mxu0 0
    %2221 = vmatprep.mubr.bf16.mxu0 0
    %2222 = vmatmul.mubr.bf16.gmra.mrb[0].mxu0 %v2181
    %v2223 = vpop.f32.mrb[0].mxu0
    %v2224 = vadd.f32 0.0, %v2223
    %v2225 = vpop.f32.mrb[0].mxu0
    %v2226 = vpop.f32.mrb[0].mxu0
    %v2227 = vadd.f32 0.0, %v2226
    %v2228 = vpop.f32.mrb[0].mxu0
    %2229 = vmatprep.mubr.bf16.mxu0 0
    %2230 = vmatmul.mubr.bf16.gmra.mrb[0].mxu0 %v2184
    %v2231 = vpop.f32.mrb[0].mxu0
    %v2232 = vadd.f32 0.0, %v2231
    %v2233 = vpop.f32.mrb[0].mxu0
    %v2234 = vpop.f32.mrb[0].mxu0
    %v2235 = vadd.f32 0.0, %v2234
    %v2236 = vpop.f32.mrb[0].mxu0
    %2237 = vdwg.mxu0
    %v2238 = vadd.f32 %v2174, %v2224
    %v2239 = vadd.f32 %v2175, %v2227
    %v2240 = vadd.f32 %v2176, %v2232
    %v2241 = vadd.f32 %v2177, %v2235
    %v2242 = vpack.c.bf16 %v1938, %v1890
    %v2243 = vpack.c.bf16 %v2034, %v1986
    %v2245 = vsel %vm216, %v2242, 0
    %v2248 = vsel %vm216, %v2243, 0
    %v2251 = vsel %vm1275, %v2042, 0
    %2253 = vmatprep.subr.bf16.mxu0 0
    %2254 = vmatpush1.bf16.msra.mxu0 %v2251
    %2255 = vmatprep.subr.bf16.mxu0 0
    %2256 = vmatpush1.bf16.msra.mxu0 0
    %2257 = vmatprep.subr.bf16.mxu0 0
    %2258 = vmatpush1.bf16.msra.mxu0 0
    %2259 = vmatprep.subr.bf16.mxu0 0
    %2260 = vmatpush1.bf16.msra.mxu0 0
    %2261 = vmatprep.subr.bf16.mxu0 0
    %2262 = vmatpush1.bf16.msra.mxu0 0
    %2263 = vmatprep.subr.bf16.mxu0 0
    %2264 = vmatpush1.bf16.msra.mxu0 0
    %2265 = vmatprep.subr.bf16.mxu0 0
    %2266 = vmatpush1.bf16.msra.mxu0 0
    %2267 = vmatprep.subr.bf16.mxu0 0
    %2268 = vmatpush1.bf16.msra.mxu0 0
    %2269 = vmatprep.subr.bf16.mxu0 0
    %2270 = vmatpush1.bf16.msra.mxu0 0
    %2271 = vmatprep.subr.bf16.mxu0 0
    %2272 = vmatpush1.bf16.msra.mxu0 0
    %2273 = vmatprep.subr.bf16.mxu0 0
    %2274 = vmatpush1.bf16.msra.mxu0 0
    %2275 = vmatprep.subr.bf16.mxu0 0
    %2276 = vmatpush1.bf16.msra.mxu0 0
    %2277 = vmatprep.subr.bf16.mxu0 0
    %2278 = vmatpush1.bf16.msra.mxu0 0
    %2279 = vmatprep.subr.bf16.mxu0 0
    %2280 = vmatpush1.bf16.msra.mxu0 0
    %2281 = vmatprep.subr.bf16.mxu0 0
    %2282 = vmatpush1.bf16.msra.mxu0 0
    %2283 = vmatprep.subr.bf16.mxu0 0
    %2284 = vmatpush1.bf16.msra.mxu0 0
    %2285 = vmatprep.mubr.bf16.mxu0 0
    %2286 = vmatmul.mubr.bf16.gmra.mrb[0].mxu0 %v2245
    %v2287 = vpop.f32.mrb[0].mxu0
    %v2288 = vadd.f32 0.0, %v2287
    %v2289 = vpop.f32.mrb[0].mxu0
    %v2290 = vpop.f32.mrb[0].mxu0
    %v2291 = vadd.f32 0.0, %v2290
    %v2292 = vpop.f32.mrb[0].mxu0
    %2293 = vmatprep.mubr.bf16.mxu0 0
    %2294 = vmatmul.mubr.bf16.gmra.mrb[0].mxu0 %v2248
    %v2295 = vpop.f32.mrb[0].mxu0
    %v2296 = vadd.f32 0.0, %v2295
    %v2297 = vpop.f32.mrb[0].mxu0
    %v2298 = vpop.f32.mrb[0].mxu0
    %v2299 = vadd.f32 0.0, %v2298
    %v2300 = vpop.f32.mrb[0].mxu0
    %2301 = vdwg.mxu0
    %v2302 = vadd.f32 %v2238, %v2288
    %v2303 = vadd.f32 %v2239, %v2291
    %v2304 = vadd.f32 %v2240, %v2296
    %v2305 = vadd.f32 %v2241, %v2299
    %v2306 = vpack.c.bf16 %v2303, %v2302
    %v2307 = vpack.c.bf16 %v2305, %v2304
    %v2308 = vld [vmem:[%s5] sm:$0xf]
    %v2309 = vld [vmem:[%s5 + $0x4] sm:$0xf]
    %v2310 = vld [vmem:[%s5 + $0x8] sm:$0xf]
    %v2311 = vld [vmem:[%s5 + $0xc] sm:$0xf]
    %v2312 = vld [vmem:[%s6] sm:$0x1]
    %v2314 = vlaneseq
    %v2315 = vshrl.u32 %v2314, 7
    %v2316 = vsub.s32 0, %v2315
    %v2317 = vrot.slane %v2312, %v2316
    %v2323 = vunpack.c.l.b16 %v2308
    %v2324 = vunpack.c.l.b16 %v2309
    %v2325 = vunpack.c.l.b16 %v2310
    %v2326 = vunpack.c.l.b16 %v2311
    %v2327 = vpack.c.b16 %v2324, %v2323
    %v2328 = vpack.c.b16 %v2326, %v2325
    %v2332 = vsel %vm101, %v2306, 0
    %v2335 = vsel %vm101, %v2307, 0
    %2337 = vmatprep.subr.bf16.mxu0 0
    %2338 = vmatpush1.bf16.msra.mxu0 %v2327
    %2339 = vmatprep.subr.bf16.mxu0 0
    %2340 = vmatpush1.bf16.msra.mxu0 %v2328
    %2341 = vmatprep.subr.bf16.mxu0 0
    %2342 = vmatpush1.bf16.msra.mxu0 0
    %2343 = vmatprep.subr.bf16.mxu0 0
    %2344 = vmatpush1.bf16.msra.mxu0 0
    %2345 = vmatprep.subr.bf16.mxu0 0
    %2346 = vmatpush1.bf16.msra.mxu0 0
    %2347 = vmatprep.subr.bf16.mxu0 0
    %2348 = vmatpush1.bf16.msra.mxu0 0
    %2349 = vmatprep.subr.bf16.mxu0 0
    %2350 = vmatpush1.bf16.msra.mxu0 0
    %2351 = vmatprep.subr.bf16.mxu0 0
    %2352 = vmatpush1.bf16.msra.mxu0 0
    %2353 = vmatprep.subr.bf16.mxu0 0
    %2354 = vmatpush1.bf16.msra.mxu0 0
    %2355 = vmatprep.subr.bf16.mxu0 0
    %2356 = vmatpush1.bf16.msra.mxu0 0
    %2357 = vmatprep.subr.bf16.mxu0 0
    %2358 = vmatpush1.bf16.msra.mxu0 0
    %2359 = vmatprep.subr.bf16.mxu0 0
    %2360 = vmatpush1.bf16.msra.mxu0 0
    %2361 = vmatprep.subr.bf16.mxu0 0
    %2362 = vmatpush1.bf16.msra.mxu0 0
    %2363 = vmatprep.subr.bf16.mxu0 0
    %2364 = vmatpush1.bf16.msra.mxu0 0
    %2365 = vmatprep.subr.bf16.mxu0 0
    %2366 = vmatpush1.bf16.msra.mxu0 0
    %2367 = vmatprep.subr.bf16.mxu0 0
    %2368 = vmatpush1.bf16.msra.mxu0 0
    %2369 = vmatprep.mubr.bf16.mxu0 0
    %2370 = vmatmul.mubr.bf16.gmra.mrb[0].mxu0 %v2332
    %v2371 = vpop.f32.mrb[0].mxu0
    %v2372 = vadd.f32 %v2317, %v2371
    %v2373 = vpop.f32.mrb[0].mxu0
    %v2374 = vpop.f32.mrb[0].mxu0
    %v2375 = vadd.f32 %v2317, %v2374
    %v2376 = vpop.f32.mrb[0].mxu0
    %2377 = vmatprep.mubr.bf16.mxu0 0
    %2378 = vmatmul.mubr.bf16.gmra.mrb[0].mxu0 %v2335
    %v2379 = vpop.f32.mrb[0].mxu0
    %v2380 = vadd.f32 %v2317, %v2379
    %v2381 = vpop.f32.mrb[0].mxu0
    %v2382 = vpop.f32.mrb[0].mxu0
    %v2383 = vadd.f32 %v2317, %v2382
    %v2384 = vpop.f32.mrb[0].mxu0
    %2385 = vdwg.mxu0
    %v2386 = vadd.f32 %v2372, %v72
    %v2387 = vadd.f32 %v2375, %v73
    %v2388 = vadd.f32 %v2380, %v74
    %v2389 = vadd.f32 %v2383, %v75
    %v2390 = vmax.f32 %v2386, 0.0
    %v2391 = vmax.f32 %v2387, 0.0
    %v2392 = vmax.f32 %v2388, 0.0
    %v2393 = vmax.f32 %v2389, 0.0
    %2394 = vst.msk [vmem:[#allocation8] sm:$0xff] %vm101, %v2390
    %2395 = vst.msk [vmem:[#allocation8 + $0x8] sm:$0xff] %vm101, %v2391
    %2396 = vst.msk [vmem:[#allocation8 + $0x10] sm:$0xff] %vm101, %v2392
    %2397 = vst.msk [vmem:[#allocation8 + $0x18] sm:$0xff] %vm101, %v2393
    %2398 = vst.msk [vmem:[#allocation9] sm:$0xff] %vm216, %v1250
    %2399 = vst.msk [vmem:[#allocation9 + $0x8] sm:$0xff] %vm216, %v1251
    %2400 = vst.msk [vmem:[#allocation9 + $0x10] sm:$0xff] %vm216, %v1252
    %2401 = vst.msk [vmem:[#allocation9 + $0x18] sm:$0xff] %vm216, %v1253
    // Predicated region
    $region42: #{tpu_custom_call.1} parent=1 // pred_check
      _
    $region43: #{tpu_custom_call.1} parent=1 // pred_check_branch
      %2403 = sbr.rel (0) target = $region45
    $region44: #{tpu_custom_call.1} parent=1 // pred_region
      %s2405 = ssub.s32 512, 512
      %2406 = vsyncadd [#allocation4], %s2405
      %s2407 = sshll.u32 [#allocation8], 4
      %s2408 = int_to_ptr.vmem [resolvable:$true] %s2407
      %2413 = dma.vmem_to_hbm [thread:$0]  %s2408, 512, %s7, [#allocation4], 128, 128, 8
    $region45: #{tpu_custom_call.1} parent=1 // pred_fallthru
      _
    // Predicated region
    $region46: #{tpu_custom_call.1} parent=1 // pred_check
      _
    $region47: #{tpu_custom_call.1} parent=1 // pred_check_branch
      %2415 = sbr.rel (0) target = $region49
    $region48: #{tpu_custom_call.1} parent=1 // pred_region
      %s2417 = ssub.s32 512, 512
      %2418 = vsyncadd [#allocation10], %s2417
      %s2419 = sshll.u32 [#allocation9], 4
      %s2420 = int_to_ptr.vmem [resolvable:$true] %s2419
      %2425 = dma.vmem_to_hbm [thread:$0]  %s2420, 512, %s8, [#allocation10], 128, 128, 8
    $region49: #{tpu_custom_call.1} parent=1 // pred_fallthru
      _
    // Predicated region
    $region50: #{tpu_custom_call.1} parent=1 // pred_check
      _
    $region51: #{tpu_custom_call.1} parent=1 // pred_check_branch
      %2427 = sbr.rel (0) target = $region53
    $region52: #{tpu_custom_call.1} parent=1 // pred_region
      %2428 = dma.done [#allocation4], 512
    $region53: #{tpu_custom_call.1} parent=1 // pred_fallthru
      _
    // Predicated region
    $region54: #{tpu_custom_call.1} parent=1 // pred_check
      _
    $region55: #{tpu_custom_call.1} parent=1 // pred_check_branch
      %2430 = sbr.rel (0) target = $region57
    $region56: #{tpu_custom_call.1} parent=1 // pred_region
      %2431 = dma.done [#allocation10], 512
    $region57: #{tpu_custom_call.1} parent=1 // pred_fallthru
      _
    %2432 = vsyncpa [#allocation3], 1
    %2433 = vsyncpa [#allocation6], 1
    %2434 = vsyncpa [#allocation4], 1
    %2435 = vsyncpa [#allocation10], 1

</llo_original>
